<compile_context>
chip_gen: v6e
topology: v6e:2x2x1
jax: 0.10.0
libtpu: 0.0.40
codegen_flags: <defaults>
</compile_context>

<pallas_src>
import functools

import jax
import jax.numpy as jnp
from jax.experimental import pallas as pl
from jax.experimental.pallas import tpu as pltpu


def _shifted(img, kh, kw, oh, ow, stride, c):
    """Static (kh, kw)-tap window of a spatially pre-padded image."""
    if stride == 1:
        return img[kh:kh + oh, kw:kw + ow, :]
    return jax.lax.slice(
        img, (kh, kw, 0),
        (kh + (oh - 1) * stride + 1, kw + (ow - 1) * stride + 1, c),
        (stride, stride, 1))


def _basic_block_kernel(*refs, stride, has_proj, mxu_dtype):
    if has_proj:
        (x_ref, w1_ref, b1_ref, w2_ref, b2_ref, ws_ref, bs_ref,
         o_ref, mid_pad_ref) = refs
    else:
        x_ref, w1_ref, b1_ref, w2_ref, b2_ref, o_ref, mid_pad_ref = refs
        ws_ref = bs_ref = None

    Cin = x_ref.shape[-1]
    Cmid = w1_ref.shape[-1]
    Ho = mid_pad_ref.shape[0] - 2
    Wo = mid_pad_ref.shape[1] - 2
    s = stride

    xp = x_ref[0]                                    # (H+2, W+2, Cin), f32

    # ---- conv1 (3x3, stride=s, pad=1): im2col -> single MXU contraction ----
    # (Wo is chosen a multiple of 8 so these reshapes stay sublane-aligned.)
    cols1 = [_shifted(xp, kh, kw, Ho, Wo, s, Cin).reshape(Ho * Wo, Cin)
             for kh in range(3) for kw in range(3)]
    patch1 = jnp.concatenate(cols1, axis=-1)         # (Ho*Wo, 9*Cin)
    acc1 = jnp.dot(patch1.astype(mxu_dtype), w1_ref[...],
                   preferred_element_type=jnp.float32)
    # bn1 scale is folded into w1; bias add + ReLU in f32.
    mid = jnp.maximum(acc1 + b1_ref[...], 0.0)       # (Ho*Wo, Cmid)

    # ---- stage the intermediate with a 1-pixel zero halo for conv2 ----
    # Only the border ring needs zeros; the interior is fully overwritten.
    zrow = jnp.zeros((1, Wo + 2, Cmid), mid_pad_ref.dtype)
    zcol = jnp.zeros((Ho, 1, Cmid), mid_pad_ref.dtype)
    mid_pad_ref[0:1, :, :] = zrow
    mid_pad_ref[Ho + 1:Ho + 2, :, :] = zrow
    mid_pad_ref[1:Ho + 1, 0:1, :] = zcol
    mid_pad_ref[1:Ho + 1, Wo + 1:Wo + 2, :] = zcol
    mid_pad_ref[1:Ho + 1, 1:Wo + 1, :] = mid.reshape(Ho, Wo, Cmid)
    mp = mid_pad_ref[...]                            # (Ho+2, Wo+2, Cmid)

    # ---- conv2 (3x3, stride=1, pad=1): im2col -> single MXU contraction ----
    cols2 = [_shifted(mp, kh, kw, Ho, Wo, 1, Cmid).reshape(Ho * Wo, Cmid)
             for kh in range(3) for kw in range(3)]
    patch2 = jnp.concatenate(cols2, axis=-1)         # (Ho*Wo, 9*Cmid)
    out = jnp.dot(patch2.astype(mxu_dtype), w2_ref[...],
                  preferred_element_type=jnp.float32) + b2_ref[...]

    # ---- shortcut ----
    # The center tap of conv1's im2col is exactly the (strided) shortcut input.
    xs = cols1[4]                                    # (Ho*Wo, Cin), f32
    if has_proj:
        sc = jnp.dot(xs.astype(mxu_dtype), ws_ref[...],
                     preferred_element_type=jnp.float32) + bs_ref[...]
    else:
        sc = xs                                      # identity (exact, f32)

    out = jnp.maximum(out + sc, 0.0)
    o_ref[0] = out.astype(o_ref.dtype)


def _fold_bn_into_conv(w, gamma, beta, mean, var, eps=1e-5):
    """Fold BN scale into conv weights; return (scaled w, remaining bias)."""
    scale = gamma / jnp.sqrt(var + eps)
    bias = beta - mean * scale
    return w * scale, bias.reshape(1, -1).astype(jnp.float32)


def basic_block_pallas(x_nchw, p, *, stride=1, mxu_dtype=jnp.bfloat16):
    N, Cin, H, W = x_nchw.shape
    Cmid = p["w1"].shape[-1]
    Cout = p["w2"].shape[-1]
    Ho = (H - 1) // stride + 1
    Wo = (W - 1) // stride + 1
    has_proj = (stride != 1) or (Cin != Cout)

    # NCHW -> NHWC (channels on the lane dim) and spatial pre-pad by 1.
    x = jnp.transpose(x_nchw, (0, 2, 3, 1)).astype(jnp.float32)
    xp = jnp.pad(x, ((0, 0), (1, 1), (1, 1), (0, 0)))

    # Fold BN scale into weights; im2col weight layout (9*Cin, Cout); bf16 for MXU.
    w1, b1 = _fold_bn_into_conv(p["w1"], p["bn1_g"], p["bn1_b"], p["bn1_m"], p["bn1_v"])
    w2, b2 = _fold_bn_into_conv(p["w2"], p["bn2_g"], p["bn2_b"], p["bn2_m"], p["bn2_v"])
    w1 = w1.reshape(9 * Cin, Cmid).astype(mxu_dtype)
    w2 = w2.reshape(9 * Cmid, Cout).astype(mxu_dtype)

    def full_spec(a):
        nd = a.ndim
        return pl.BlockSpec(a.shape, lambda n, _nd=nd: (0,) * _nd)

    operands = [xp, w1, b1, w2, b2]
    in_specs = [
        pl.BlockSpec((1, H + 2, W + 2, Cin), lambda n: (n, 0, 0, 0)),
        full_spec(w1), full_spec(b1), full_spec(w2), full_spec(b2),
    ]
    proj_flops = 0
    if has_proj:
        ws, bs = _fold_bn_into_conv(p["ws"].reshape(Cin, Cout),
                                    p["bns_g"], p["bns_b"], p["bns_m"], p["bns_v"])
        ws = ws.astype(mxu_dtype)
        operands += [ws, bs]
        in_specs += [full_spec(ws), full_spec(bs)]
        proj_flops = 2 * Cin * Cout

    kernel = functools.partial(_basic_block_kernel, stride=stride,
                               has_proj=has_proj, mxu_dtype=mxu_dtype)

    flops = int(N * Ho * Wo * (2 * 9 * Cin * Cmid + 2 * 9 * Cmid * Cout + proj_flops))
    bytes_accessed = int(sum(int(a.size) * a.dtype.itemsize for a in operands)
                         + N * Ho * Wo * Cout * 4)

    grid_spec = pltpu.PrefetchScalarGridSpec(
        num_scalar_prefetch=0,
        grid=(N,),
        in_specs=in_specs,
        out_specs=pl.BlockSpec((1, Ho * Wo, Cout), lambda n: (n, 0, 0)),
        scratch_shapes=[pltpu.VMEM((Ho + 2, Wo + 2, Cmid), jnp.float32)],
    )

    out = pl.pallas_call(
        kernel,
        out_shape=jax.ShapeDtypeStruct((N, Ho * Wo, Cout), jnp.float32),
        grid_spec=grid_spec,
        compiler_params=pltpu.CompilerParams(
            dimension_semantics=("parallel",)),
        cost_estimate=pl.CostEstimate(flops=flops, transcendentals=0,
                                      bytes_accessed=bytes_accessed),
    )(*operands)

    out = out.reshape(N, Ho, Wo, Cout)
    return jnp.transpose(out, (0, 3, 1, 2))          # back to NCHW


# ---------------- deterministic parameter init (synthetic, no checkpoint) ----------------
def init_params(key, in_planes, planes):
    ks = jax.random.split(key, 15)

    def conv_w(k, kh, kw, cin, cout):
        bound = 1.0 / jnp.sqrt(jnp.float32(cin * kh * kw))
        return jax.random.uniform(k, (kh, kw, cin, cout), jnp.float32, -bound, bound)

    def bn(k0, k1, k2, k3, c):
        return dict(
            g=jax.random.uniform(k0, (c,), jnp.float32, 0.5, 1.5),
            b=0.1 * jax.random.normal(k1, (c,), jnp.float32),
            m=0.1 * jax.random.normal(k2, (c,), jnp.float32),
            v=jax.random.uniform(k3, (c,), jnp.float32, 0.5, 1.5),
        )

    bn1 = bn(ks[1], ks[2], ks[3], ks[4], planes)
    bn2 = bn(ks[6], ks[7], ks[8], ks[9], planes)
    bns = bn(ks[11], ks[12], ks[13], ks[14], planes)
    return {
        "w1": conv_w(ks[0], 3, 3, in_planes, planes),
        "bn1_g": bn1["g"], "bn1_b": bn1["b"], "bn1_m": bn1["m"], "bn1_v": bn1["v"],
        "w2": conv_w(ks[5], 3, 3, planes, planes),
        "bn2_g": bn2["g"], "bn2_b": bn2["b"], "bn2_m": bn2["m"], "bn2_v": bn2["v"],
        "ws": conv_w(ks[10], 1, 1, in_planes, planes),
        "bns_g": bns["g"], "bns_b": bns["b"], "bns_m": bns["m"], "bns_v": bns["v"],
    }


# ---------------- pure-JAX f32 reference (module semantics check) ----------------
def basic_block_ref(x_nchw, p, *, stride=1, eps=1e-5):
    x = jnp.transpose(x_nchw, (0, 2, 3, 1))

    def conv(x, w, s, pad):
        return jax.lax.conv_general_dilated(
            x, w, (s, s), pad, dimension_numbers=("NHWC", "HWIO", "NHWC"))

    def bn(x, g, b, m, v):
        return (x - m) / jnp.sqrt(v + eps) * g + b

    out = jax.nn.relu(bn(conv(x, p["w1"], stride, ((1, 1), (1, 1))),
                         p["bn1_g"], p["bn1_b"], p["bn1_m"], p["bn1_v"]))
    out = bn(conv(out, p["w2"], 1, ((1, 1), (1, 1))),
             p["bn2_g"], p["bn2_b"], p["bn2_m"], p["bn2_v"])
    Cin, Cout = x.shape[-1], p["w2"].shape[-1]
    if stride != 1 or Cin != Cout:
        sc = bn(conv(x, p["ws"], stride, "VALID"),
                p["bns_g"], p["bns_b"], p["bns_m"], p["bns_v"])
    else:
        sc = x
    out = jax.nn.relu(out + sc)
    return jnp.transpose(out, (0, 3, 1, 2))


if __name__ == "__main__":
    key = jax.random.PRNGKey(0)
    kx, kp = jax.random.split(key)

    N, Cin, H, W = 2, 4, 16, 16
    planes, stride = 8, 1          # Cin != planes -> projection shortcut exercised

    x = jax.random.normal(kx, (N, Cin, H, W), jnp.float32)
    params = init_params(kp, Cin, planes)

    out = basic_block_pallas(x, params, stride=stride)
    out = jax.block_until_ready(out)

    ref = basic_block_ref(x, params, stride=stride)
    assert out.shape == ref.shape, (out.shape, ref.shape)
    # bf16 MXU operands (f32 accumulation) -> ~1e-2-scale deviation vs the pure
    # f32 reference is expected; tolerance sized accordingly.
    err = float(jnp.max(jnp.abs(out - ref)))
    if not jnp.allclose(out, ref, atol=5e-2, rtol=5e-2):
        raise AssertionError(f"Pallas BasicBlock mismatch, max abs err = {err:e}")
    print("KERNEL_OK")
</pallas_src>

<mosaic_0001>
module attributes {stable_mosaic.version = 11 : i64} {
  func.func @_basic_block_kernel(%arg0: i32, %arg1: memref<1x18x18x4xf32, #tpu.memory_space<vmem>>, %arg2: memref<36x8xbf16, #tpu.memory_space<vmem>>, %arg3: memref<1x8xf32, #tpu.memory_space<vmem>>, %arg4: memref<72x8xbf16, #tpu.memory_space<vmem>>, %arg5: memref<1x8xf32, #tpu.memory_space<vmem>>, %arg6: memref<4x8xbf16, #tpu.memory_space<vmem>>, %arg7: memref<1x8xf32, #tpu.memory_space<vmem>>, %arg8: memref<1x256x8xf32, #tpu.memory_space<vmem>>, %arg9: memref<18x18x8xf32, #tpu.memory_space<vmem>>) attributes {dimension_semantics = [#tpu.dimension_semantics<parallel>], iteration_bounds = array<i64: 2>, scalar_prefetch = 0 : i64, scratch_operands = 1 : i64, tpu.core_type = #tpu.core_type<tc>, window_params = [{transform_indices = @transform_0, window_bounds = array<i64: 1, 18, 18, 4>}, {pipeline_mode = #tpu.pipeline_mode<synchronous>, transform_indices = @transform_1, window_bounds = array<i64: 36, 8>}, {pipeline_mode = #tpu.pipeline_mode<synchronous>, transform_indices = @transform_2, window_bounds = array<i64: 1, 8>}, {pipeline_mode = #tpu.pipeline_mode<synchronous>, transform_indices = @transform_3, window_bounds = array<i64: 72, 8>}, {pipeline_mode = #tpu.pipeline_mode<synchronous>, transform_indices = @transform_4, window_bounds = array<i64: 1, 8>}, {pipeline_mode = #tpu.pipeline_mode<synchronous>, transform_indices = @transform_5, window_bounds = array<i64: 4, 8>}, {pipeline_mode = #tpu.pipeline_mode<synchronous>, transform_indices = @transform_6, window_bounds = array<i64: 1, 8>}, {transform_indices = @transform_7, window_bounds = array<i64: 1, 256, 8>}]} {
    %c0 = arith.constant 0 : index
    %c0_0 = arith.constant 0 : index
    %c0_1 = arith.constant 0 : index
    %c0_2 = arith.constant 0 : index
    %0 = vector.load %arg1[%c0, %c0_0, %c0_1, %c0_2] : memref<1x18x18x4xf32, #tpu.memory_space<vmem>>, vector<1x18x18x4xf32>
    %1 = vector.shape_cast %0 : vector<1x18x18x4xf32> to vector<18x18x4xf32>
    %2 = vector.extract_strided_slice %1 {offsets = [0, 0, 0], sizes = [16, 16, 4], strides = [1, 1, 1]} : vector<18x18x4xf32> to vector<16x16x4xf32>
    %3 = vector.shape_cast %2 : vector<16x16x4xf32> to vector<256x4xf32>
    %4 = vector.extract_strided_slice %1 {offsets = [0, 1, 0], sizes = [16, 16, 4], strides = [1, 1, 1]} : vector<18x18x4xf32> to vector<16x16x4xf32>
    %5 = vector.shape_cast %4 : vector<16x16x4xf32> to vector<256x4xf32>
    %6 = vector.extract_strided_slice %1 {offsets = [0, 2, 0], sizes = [16, 16, 4], strides = [1, 1, 1]} : vector<18x18x4xf32> to vector<16x16x4xf32>
    %7 = vector.shape_cast %6 : vector<16x16x4xf32> to vector<256x4xf32>
    %8 = vector.extract_strided_slice %1 {offsets = [1, 0, 0], sizes = [16, 16, 4], strides = [1, 1, 1]} : vector<18x18x4xf32> to vector<16x16x4xf32>
    %9 = vector.shape_cast %8 : vector<16x16x4xf32> to vector<256x4xf32>
    %10 = vector.extract_strided_slice %1 {offsets = [1, 1, 0], sizes = [16, 16, 4], strides = [1, 1, 1]} : vector<18x18x4xf32> to vector<16x16x4xf32>
    %11 = vector.shape_cast %10 : vector<16x16x4xf32> to vector<256x4xf32>
    %12 = vector.extract_strided_slice %1 {offsets = [1, 2, 0], sizes = [16, 16, 4], strides = [1, 1, 1]} : vector<18x18x4xf32> to vector<16x16x4xf32>
    %13 = vector.shape_cast %12 : vector<16x16x4xf32> to vector<256x4xf32>
    %14 = vector.extract_strided_slice %1 {offsets = [2, 0, 0], sizes = [16, 16, 4], strides = [1, 1, 1]} : vector<18x18x4xf32> to vector<16x16x4xf32>
    %15 = vector.shape_cast %14 : vector<16x16x4xf32> to vector<256x4xf32>
    %16 = vector.extract_strided_slice %1 {offsets = [2, 1, 0], sizes = [16, 16, 4], strides = [1, 1, 1]} : vector<18x18x4xf32> to vector<16x16x4xf32>
    %17 = vector.shape_cast %16 : vector<16x16x4xf32> to vector<256x4xf32>
    %18 = vector.extract_strided_slice %1 {offsets = [2, 2, 0], sizes = [16, 16, 4], strides = [1, 1, 1]} : vector<18x18x4xf32> to vector<16x16x4xf32>
    %19 = vector.shape_cast %18 : vector<16x16x4xf32> to vector<256x4xf32>
    %20 = tpu.concatenate %3, %5, %7, %9, %11, %13, %15, %17, %19 in 1 : vector<256x4xf32>, vector<256x4xf32>, vector<256x4xf32>, vector<256x4xf32>, vector<256x4xf32>, vector<256x4xf32>, vector<256x4xf32>, vector<256x4xf32>, vector<256x4xf32> -> vector<256x36xf32>
    %21 = arith.truncf %20 : vector<256x36xf32> to vector<256x36xbf16>
    %c0_3 = arith.constant 0 : index
    %c0_4 = arith.constant 0 : index
    %22 = vector.load %arg2[%c0_3, %c0_4] : memref<36x8xbf16, #tpu.memory_space<vmem>>, vector<36x8xbf16>
    %cst = arith.constant dense<0.000000e+00> : vector<256x8xf32>
    %23 = tpu.matmul %21, %22, %cst {dimension_numbers = #tpu.dot_dimension_numbers<[1], [0], [0], [1], [0, 0, 1, 1], [], []>} : vector<256x36xbf16>, vector<36x8xbf16>, vector<256x8xf32> -> vector<256x8xf32>
    %c0_5 = arith.constant 0 : index
    %c0_6 = arith.constant 0 : index
    %24 = vector.load %arg3[%c0_5, %c0_6] : memref<1x8xf32, #tpu.memory_space<vmem>>, vector<1x8xf32>
    %25 = vector.broadcast %24 : vector<1x8xf32> to vector<256x8xf32>
    %26 = arith.addf %23, %25 : vector<256x8xf32>
    %cst_7 = arith.constant 0.000000e+00 : f32
    %27 = vector.broadcast %cst_7 : f32 to vector<256x8xf32>
    %28 = arith.maximumf %26, %27 : vector<256x8xf32>
    %cst_8 = arith.constant 0.000000e+00 : f32
    %29 = vector.broadcast %cst_8 : f32 to vector<1x18x8xf32>
    %cst_9 = arith.constant 0.000000e+00 : f32
    %30 = vector.broadcast %cst_9 : f32 to vector<16x1x8xf32>
    %c0_10 = arith.constant 0 : index
    %c0_11 = arith.constant 0 : index
    %c0_12 = arith.constant 0 : index
    %31 = vector.load %arg9[%c0_10, %c0_11, %c0_12] : memref<18x18x8xf32, #tpu.memory_space<vmem>>, vector<1x18x8xf32>
    tpu.vector_store %arg9[%c0_10, %c0_11, %c0_12], %29 {strides = array<i32>} : memref<18x18x8xf32, #tpu.memory_space<vmem>>, vector<1x18x8xf32>,
    %c17 = arith.constant 17 : index
    %c0_13 = arith.constant 0 : index
    %c0_14 = arith.constant 0 : index
    %32 = vector.load %arg9[%c17, %c0_13, %c0_14] : memref<18x18x8xf32, #tpu.memory_space<vmem>>, vector<1x18x8xf32>
    tpu.vector_store %arg9[%c17, %c0_13, %c0_14], %29 {strides = array<i32>} : memref<18x18x8xf32, #tpu.memory_space<vmem>>, vector<1x18x8xf32>,
    %c1 = arith.constant 1 : index
    %c0_15 = arith.constant 0 : index
    %c0_16 = arith.constant 0 : index
    %33 = vector.load %arg9[%c1, %c0_15, %c0_16] : memref<18x18x8xf32, #tpu.memory_space<vmem>>, vector<16x1x8xf32>
    tpu.vector_store %arg9[%c1, %c0_15, %c0_16], %30 {strides = array<i32>} : memref<18x18x8xf32, #tpu.memory_space<vmem>>, vector<16x1x8xf32>,
    %c1_17 = arith.constant 1 : index
    %c17_18 = arith.constant 17 : index
    %c0_19 = arith.constant 0 : index
    %34 = vector.load %arg9[%c1_17, %c17_18, %c0_19] : memref<18x18x8xf32, #tpu.memory_space<vmem>>, vector<16x1x8xf32>
    tpu.vector_store %arg9[%c1_17, %c17_18, %c0_19], %30 {strides = array<i32>} : memref<18x18x8xf32, #tpu.memory_space<vmem>>, vector<16x1x8xf32>,
    %35 = vector.shape_cast %28 : vector<256x8xf32> to vector<16x16x8xf32>
    %c1_20 = arith.constant 1 : index
    %c1_21 = arith.constant 1 : index
    %c0_22 = arith.constant 0 : index
    %36 = vector.load %arg9[%c1_20, %c1_21, %c0_22] : memref<18x18x8xf32, #tpu.memory_space<vmem>>, vector<16x16x8xf32>
    tpu.vector_store %arg9[%c1_20, %c1_21, %c0_22], %35 {strides = array<i32>} : memref<18x18x8xf32, #tpu.memory_space<vmem>>, vector<16x16x8xf32>,
    %c0_23 = arith.constant 0 : index
    %c0_24 = arith.constant 0 : index
    %c0_25 = arith.constant 0 : index
    %37 = vector.load %arg9[%c0_23, %c0_24, %c0_25] : memref<18x18x8xf32, #tpu.memory_space<vmem>>, vector<18x18x8xf32>
    %38 = vector.extract_strided_slice %37 {offsets = [0, 0, 0], sizes = [16, 16, 8], strides = [1, 1, 1]} : vector<18x18x8xf32> to vector<16x16x8xf32>
    %39 = vector.shape_cast %38 : vector<16x16x8xf32> to vector<256x8xf32>
    %40 = vector.extract_strided_slice %37 {offsets = [0, 1, 0], sizes = [16, 16, 8], strides = [1, 1, 1]} : vector<18x18x8xf32> to vector<16x16x8xf32>
    %41 = vector.shape_cast %40 : vector<16x16x8xf32> to vector<256x8xf32>
    %42 = vector.extract_strided_slice %37 {offsets = [0, 2, 0], sizes = [16, 16, 8], strides = [1, 1, 1]} : vector<18x18x8xf32> to vector<16x16x8xf32>
    %43 = vector.shape_cast %42 : vector<16x16x8xf32> to vector<256x8xf32>
    %44 = vector.extract_strided_slice %37 {offsets = [1, 0, 0], sizes = [16, 16, 8], strides = [1, 1, 1]} : vector<18x18x8xf32> to vector<16x16x8xf32>
    %45 = vector.shape_cast %44 : vector<16x16x8xf32> to vector<256x8xf32>
    %46 = vector.extract_strided_slice %37 {offsets = [1, 1, 0], sizes = [16, 16, 8], strides = [1, 1, 1]} : vector<18x18x8xf32> to vector<16x16x8xf32>
    %47 = vector.shape_cast %46 : vector<16x16x8xf32> to vector<256x8xf32>
    %48 = vector.extract_strided_slice %37 {offsets = [1, 2, 0], sizes = [16, 16, 8], strides = [1, 1, 1]} : vector<18x18x8xf32> to vector<16x16x8xf32>
    %49 = vector.shape_cast %48 : vector<16x16x8xf32> to vector<256x8xf32>
    %50 = vector.extract_strided_slice %37 {offsets = [2, 0, 0], sizes = [16, 16, 8], strides = [1, 1, 1]} : vector<18x18x8xf32> to vector<16x16x8xf32>
    %51 = vector.shape_cast %50 : vector<16x16x8xf32> to vector<256x8xf32>
    %52 = vector.extract_strided_slice %37 {offsets = [2, 1, 0], sizes = [16, 16, 8], strides = [1, 1, 1]} : vector<18x18x8xf32> to vector<16x16x8xf32>
    %53 = vector.shape_cast %52 : vector<16x16x8xf32> to vector<256x8xf32>
    %54 = vector.extract_strided_slice %37 {offsets = [2, 2, 0], sizes = [16, 16, 8], strides = [1, 1, 1]} : vector<18x18x8xf32> to vector<16x16x8xf32>
    %55 = vector.shape_cast %54 : vector<16x16x8xf32> to vector<256x8xf32>
    %56 = tpu.concatenate %39, %41, %43, %45, %47, %49, %51, %53, %55 in 1 : vector<256x8xf32>, vector<256x8xf32>, vector<256x8xf32>, vector<256x8xf32>, vector<256x8xf32>, vector<256x8xf32>, vector<256x8xf32>, vector<256x8xf32>, vector<256x8xf32> -> vector<256x72xf32>
    %57 = arith.truncf %56 : vector<256x72xf32> to vector<256x72xbf16>
    %c0_26 = arith.constant 0 : index
    %c0_27 = arith.constant 0 : index
    %58 = vector.load %arg4[%c0_26, %c0_27] : memref<72x8xbf16, #tpu.memory_space<vmem>>, vector<72x8xbf16>
    %cst_28 = arith.constant dense<0.000000e+00> : vector<256x8xf32>
    %59 = tpu.matmul %57, %58, %cst_28 {dimension_numbers = #tpu.dot_dimension_numbers<[1], [0], [0], [1], [0, 0, 1, 1], [], []>} : vector<256x72xbf16>, vector<72x8xbf16>, vector<256x8xf32> -> vector<256x8xf32>
    %c0_29 = arith.constant 0 : index
    %c0_30 = arith.constant 0 : index
    %60 = vector.load %arg5[%c0_29, %c0_30] : memref<1x8xf32, #tpu.memory_space<vmem>>, vector<1x8xf32>
    %61 = vector.broadcast %60 : vector<1x8xf32> to vector<256x8xf32>
    %62 = arith.addf %59, %61 : vector<256x8xf32>
    %63 = arith.truncf %11 : vector<256x4xf32> to vector<256x4xbf16>
    %c0_31 = arith.constant 0 : index
    %c0_32 = arith.constant 0 : index
    %64 = vector.load %arg6[%c0_31, %c0_32] : memref<4x8xbf16, #tpu.memory_space<vmem>>, vector<4x8xbf16>
    %cst_33 = arith.constant dense<0.000000e+00> : vector<256x8xf32>
    %65 = tpu.matmul %63, %64, %cst_33 {dimension_numbers = #tpu.dot_dimension_numbers<[1], [0], [0], [1], [0, 0, 1, 1], [], []>} : vector<256x4xbf16>, vector<4x8xbf16>, vector<256x8xf32> -> vector<256x8xf32>
    %c0_34 = arith.constant 0 : index
    %c0_35 = arith.constant 0 : index
    %66 = vector.load %arg7[%c0_34, %c0_35] : memref<1x8xf32, #tpu.memory_space<vmem>>, vector<1x8xf32>
    %67 = vector.broadcast %66 : vector<1x8xf32> to vector<256x8xf32>
    %68 = arith.addf %65, %67 : vector<256x8xf32>
    %69 = arith.addf %62, %68 : vector<256x8xf32>
    %cst_36 = arith.constant 0.000000e+00 : f32
    %70 = vector.broadcast %cst_36 : f32 to vector<256x8xf32>
    %71 = arith.maximumf %69, %70 : vector<256x8xf32>
    %c0_37 = arith.constant 0 : index
    %c0_38 = arith.constant 0 : index
    %c0_39 = arith.constant 0 : index
    %72 = vector.load %arg8[%c0_37, %c0_38, %c0_39] : memref<1x256x8xf32, #tpu.memory_space<vmem>>, vector<1x256x8xf32>
    %73 = vector.shape_cast %72 : vector<1x256x8xf32> to vector<256x8xf32>
    %74 = vector.shape_cast %71 : vector<256x8xf32> to vector<1x256x8xf32>
    tpu.vector_store %arg8[%c0_37, %c0_38, %c0_39], %74 {strides = array<i32>} : memref<1x256x8xf32, #tpu.memory_space<vmem>>, vector<1x256x8xf32>,
    return
  }
  func.func @transform_0(%arg0: i32) -> (i32, i32, i32, i32) {
    %c0_i32 = arith.constant 0 : i32
    %c0_i32_0 = arith.constant 0 : i32
    %c0_i32_1 = arith.constant 0 : i32
    %c0_i32_2 = arith.constant 0 : i32
    return %arg0, %c0_i32, %c0_i32_0, %c0_i32_1 : i32, i32, i32, i32
  }
  func.func @transform_1(%arg0: i32) -> (i32, i32) {
    %c0_i32 = arith.constant 0 : i32
    %c0_i32_0 = arith.constant 0 : i32
    %c0_i32_1 = arith.constant 0 : i32
    return %c0_i32, %c0_i32_0 : i32, i32
  }
  func.func @transform_2(%arg0: i32) -> (i32, i32) {
    %c0_i32 = arith.constant 0 : i32
    %c0_i32_0 = arith.constant 0 : i32
    %c0_i32_1 = arith.constant 0 : i32
    return %c0_i32, %c0_i32_0 : i32, i32
  }
  func.func @transform_3(%arg0: i32) -> (i32, i32) {
    %c0_i32 = arith.constant 0 : i32
    %c0_i32_0 = arith.constant 0 : i32
    %c0_i32_1 = arith.constant 0 : i32
    return %c0_i32, %c0_i32_0 : i32, i32
  }
  func.func @transform_4(%arg0: i32) -> (i32, i32) {
    %c0_i32 = arith.constant 0 : i32
    %c0_i32_0 = arith.constant 0 : i32
    %c0_i32_1 = arith.constant 0 : i32
    return %c0_i32, %c0_i32_0 : i32, i32
  }
  func.func @transform_5(%arg0: i32) -> (i32, i32) {
    %c0_i32 = arith.constant 0 : i32
    %c0_i32_0 = arith.constant 0 : i32
    %c0_i32_1 = arith.constant 0 : i32
    return %c0_i32, %c0_i32_0 : i32, i32
  }
  func.func @transform_6(%arg0: i32) -> (i32, i32) {
    %c0_i32 = arith.constant 0 : i32
    %c0_i32_0 = arith.constant 0 : i32
    %c0_i32_1 = arith.constant 0 : i32
    return %c0_i32, %c0_i32_0 : i32, i32
  }
  func.func @transform_7(%arg0: i32) -> (i32, i32, i32) {
    %c0_i32 = arith.constant 0 : i32
    %c0_i32_0 = arith.constant 0 : i32
    %c0_i32_1 = arith.constant 0 : i32
    return %arg0, %c0_i32, %c0_i32_0 : i32, i32, i32
  }
}

</mosaic_0001>

<llo_original>
// kernel: tpu_custom_call.1
$region0: #{tpu_custom_call.1}
  #allocation0 [shape = 'u32[]', space=smem, size = 0x4, offset = 0x4, fixed_abs, tag = 'smem constant byte address 0x4 - core index']
  #allocation1 [shape = 'u32[144,128]{1,0:T(1,128)}', space=vmem, size = 0x12000, scoped, tag = 'internal scratch']
  #allocation2 [shape = 'f32[18,18,8]{2,1,0:T(8,128)}', space=vmem, size = 0x36000, scoped, tag = 'scratch operand']
  %s0 = inlined_call_operand.vmem [shape: f32[2,18,18,4], index: 0, kind: input, shape index: {}]
  %s1 = inlined_call_operand.vmem [shape: bf16[36,8], index: 1, kind: input, shape index: {}]
  %s2 = inlined_call_operand.vmem [shape: f32[1,8], index: 2, kind: input, shape index: {}]
  %s3 = inlined_call_operand.vmem [shape: bf16[72,8], index: 3, kind: input, shape index: {}]
  %s4 = inlined_call_operand.vmem [shape: f32[1,8], index: 4, kind: input, shape index: {}]
  %s5 = inlined_call_operand.vmem [shape: bf16[4,8], index: 5, kind: input, shape index: {}]
  %s6 = inlined_call_operand.vmem [shape: f32[1,8], index: 6, kind: input, shape index: {}]
  %s7 = inlined_call_operand.vmem [shape: f32[2,256,8], index: 7, kind: output, shape index: {}]
  %s8 = sld [smem:[#allocation0]]
  $region61: #{tpu_custom_call.1} parent=0
    _
  %s10 = ssub.s32 1, %s8
  %s11 = scalar_select 0, %s10, %s8
  loop: start=0, step=1, limit=4
  $region2: #{tpu_custom_call.1} parent=0 // loop_pre_header
    _
  $region3: #{tpu_custom_call.1} parent=0 // loop_header
    %s13 = sphi 0, %s17
    %p14 = scmp.ge.s32.totalorder %s13, 4
    %s23 = sphi 0, %s25
    %s26 = sphi 0, %s23
    %s27 = sphi 0, %s26
    %s43 = sphi 0, %s27
    %s47 = sphi 0, %s47
    %s49 = sphi 0, %s47
    %s50 = sphi 0, %s49
    %s64 = sphi 0, %s50
    %s68 = sphi 0, %s68
    %s70 = sphi 0, %s68
    %s71 = sphi 0, %s70
    %s85 = sphi 0, %s71
    %s89 = sphi 0, %s89
    %s91 = sphi 0, %s89
    %s92 = sphi 0, %s91
    %s106 = sphi 0, %s92
    %s110 = sphi 0, %s110
    %s112 = sphi 0, %s110
    %s113 = sphi 0, %s112
    %s127 = sphi 0, %s113
    %s131 = sphi 0, %s131
    %s133 = sphi 0, %s131
    %s134 = sphi 0, %s133
    %s148 = sphi 0, %s134
    %s152 = sphi 0, %s152
    %s154 = sphi 0, %s152
    %s155 = sphi 0, %s154
    %s169 = sphi 0, %s155
    %s175 = sphi 0, %s177
    %s178 = sphi 0, %s175
    %s179 = sphi 0, %s178
    %s195 = sphi 0, %s179
  $region4: #{tpu_custom_call.1} parent=0 // loop_header_branch
    %16 = sbr.rel (%p14) target = $region8
  $region5: #{tpu_custom_call.1} parent=0 // loop_body
    %s18 = ssub.s32 %s13, 1
    %s19 = ssub.s32 %s13, 2
    %s20 = sadd.s32 %s13, 1
    %s21 = ssub.s32 %s13, %s20
    %p22 = scmp.eq.s32.totalorder %s21, 0
    %s24 = sadd.s32 %s23, 1
    %s25 = scalar_select %p22, %s23, %s24
    %p28 = pneg %p22
    %p29 = scmp.eq.s32.totalorder %s13, 1
    %p30 = por %p28, %p29
    %p31 = scmp.ne.s32.totalorder %s23, %s26
    %p32 = scmp.eq.s32.totalorder %s13, 0
    %p33 = por %p31, %p32
    %p34 = scmp.ne.s32.totalorder %s23, %s26
    %p35 = scmp.eq.s32.totalorder %s18, 1
    %p36 = por %p34, %p35
    %p37 = scmp.ne.s32.totalorder %s26, %s27
    %p38 = scmp.eq.s32.totalorder %s18, 0
    %p39 = por %p37, %p38
    %p40 = scmp.ne.s32.totalorder %s26, %s27
    %p41 = scmp.eq.s32.totalorder %s19, 1
    %p42 = por %p40, %p41
    %p44 = scmp.ne.s32.totalorder %s27, %s43
    %p45 = scmp.eq.s32.totalorder %s19, 0
    %p46 = por %p44, %p45
    %s48 = sadd.s32 %s47, 1
    %p51 = scmp.eq.s32.totalorder %s13, 1
    %p52 = scmp.ne.s32.totalorder %s47, %s49
    %p53 = scmp.eq.s32.totalorder %s13, 0
    %p54 = por %p52, %p53
    %p55 = scmp.ne.s32.totalorder %s47, %s49
    %p56 = scmp.eq.s32.totalorder %s18, 1
    %p57 = por %p55, %p56
    %p58 = scmp.ne.s32.totalorder %s49, %s50
    %p59 = scmp.eq.s32.totalorder %s18, 0
    %p60 = por %p58, %p59
    %p61 = scmp.ne.s32.totalorder %s49, %s50
    %p62 = scmp.eq.s32.totalorder %s19, 1
    %p63 = por %p61, %p62
    %p65 = scmp.ne.s32.totalorder %s50, %s64
    %p66 = scmp.eq.s32.totalorder %s19, 0
    %p67 = por %p65, %p66
    %s69 = sadd.s32 %s68, 1
    %p72 = scmp.eq.s32.totalorder %s13, 1
    %p73 = scmp.ne.s32.totalorder %s68, %s70
    %p74 = scmp.eq.s32.totalorder %s13, 0
    %p75 = por %p73, %p74
    %p76 = scmp.ne.s32.totalorder %s68, %s70
    %p77 = scmp.eq.s32.totalorder %s18, 1
    %p78 = por %p76, %p77
    %p79 = scmp.ne.s32.totalorder %s70, %s71
    %p80 = scmp.eq.s32.totalorder %s18, 0
    %p81 = por %p79, %p80
    %p82 = scmp.ne.s32.totalorder %s70, %s71
    %p83 = scmp.eq.s32.totalorder %s19, 1
    %p84 = por %p82, %p83
    %p86 = scmp.ne.s32.totalorder %s71, %s85
    %p87 = scmp.eq.s32.totalorder %s19, 0
    %p88 = por %p86, %p87
    %s90 = sadd.s32 %s89, 1
    %p93 = scmp.eq.s32.totalorder %s13, 1
    %p94 = scmp.ne.s32.totalorder %s89, %s91
    %p95 = scmp.eq.s32.totalorder %s13, 0
    %p96 = por %p94, %p95
    %p97 = scmp.ne.s32.totalorder %s89, %s91
    %p98 = scmp.eq.s32.totalorder %s18, 1
    %p99 = por %p97, %p98
    %p100 = scmp.ne.s32.totalorder %s91, %s92
    %p101 = scmp.eq.s32.totalorder %s18, 0
    %p102 = por %p100, %p101
    %p103 = scmp.ne.s32.totalorder %s91, %s92
    %p104 = scmp.eq.s32.totalorder %s19, 1
    %p105 = por %p103, %p104
    %p107 = scmp.ne.s32.totalorder %s92, %s106
    %p108 = scmp.eq.s32.totalorder %s19, 0
    %p109 = por %p107, %p108
    %s111 = sadd.s32 %s110, 1
    %p114 = scmp.eq.s32.totalorder %s13, 1
    %p115 = scmp.ne.s32.totalorder %s110, %s112
    %p116 = scmp.eq.s32.totalorder %s13, 0
    %p117 = por %p115, %p116
    %p118 = scmp.ne.s32.totalorder %s110, %s112
    %p119 = scmp.eq.s32.totalorder %s18, 1
    %p120 = por %p118, %p119
    %p121 = scmp.ne.s32.totalorder %s112, %s113
    %p122 = scmp.eq.s32.totalorder %s18, 0
    %p123 = por %p121, %p122
    %p124 = scmp.ne.s32.totalorder %s112, %s113
    %p125 = scmp.eq.s32.totalorder %s19, 1
    %p126 = por %p124, %p125
    %p128 = scmp.ne.s32.totalorder %s113, %s127
    %p129 = scmp.eq.s32.totalorder %s19, 0
    %p130 = por %p128, %p129
    %s132 = sadd.s32 %s131, 1
    %p135 = scmp.eq.s32.totalorder %s13, 1
    %p136 = scmp.ne.s32.totalorder %s131, %s133
    %p137 = scmp.eq.s32.totalorder %s13, 0
    %p138 = por %p136, %p137
    %p139 = scmp.ne.s32.totalorder %s131, %s133
    %p140 = scmp.eq.s32.totalorder %s18, 1
    %p141 = por %p139, %p140
    %p142 = scmp.ne.s32.totalorder %s133, %s134
    %p143 = scmp.eq.s32.totalorder %s18, 0
    %p144 = por %p142, %p143
    %p145 = scmp.ne.s32.totalorder %s133, %s134
    %p146 = scmp.eq.s32.totalorder %s19, 1
    %p147 = por %p145, %p146
    %p149 = scmp.ne.s32.totalorder %s134, %s148
    %p150 = scmp.eq.s32.totalorder %s19, 0
    %p151 = por %p149, %p150
    %s153 = sadd.s32 %s152, 1
    %p156 = scmp.eq.s32.totalorder %s13, 1
    %p157 = scmp.ne.s32.totalorder %s152, %s154
    %p158 = scmp.eq.s32.totalorder %s13, 0
    %p159 = por %p157, %p158
    %p160 = scmp.ne.s32.totalorder %s152, %s154
    %p161 = scmp.eq.s32.totalorder %s18, 1
    %p162 = por %p160, %p161
    %p163 = scmp.ne.s32.totalorder %s154, %s155
    %p164 = scmp.eq.s32.totalorder %s18, 0
    %p165 = por %p163, %p164
    %p166 = scmp.ne.s32.totalorder %s154, %s155
    %p167 = scmp.eq.s32.totalorder %s19, 1
    %p168 = por %p166, %p167
    %p170 = scmp.ne.s32.totalorder %s155, %s169
    %p171 = scmp.eq.s32.totalorder %s19, 0
    %p172 = por %p170, %p171
    %s173 = ssub.s32 %s13, %s20
    %p174 = scmp.eq.s32.totalorder %s173, 0
    %s176 = sadd.s32 %s175, 1
    %s177 = scalar_select %p174, %s175, %s176
    %p180 = pneg %p174
    %p181 = scmp.eq.s32.totalorder %s13, 1
    %p182 = por %p180, %p181
    %p183 = scmp.ne.s32.totalorder %s175, %s178
    %p184 = scmp.eq.s32.totalorder %s13, 0
    %p185 = por %p183, %p184
    %p186 = scmp.ne.s32.totalorder %s175, %s178
    %p187 = scmp.eq.s32.totalorder %s18, 1
    %p188 = por %p186, %p187
    %p189 = scmp.ne.s32.totalorder %s178, %s179
    %p190 = scmp.eq.s32.totalorder %s18, 0
    %p191 = por %p189, %p190
    %p192 = scmp.ne.s32.totalorder %s178, %s179
    %p193 = scmp.eq.s32.totalorder %s19, 1
    %p194 = por %p192, %p193
    %p196 = scmp.ne.s32.totalorder %s179, %s195
    %p197 = scmp.eq.s32.totalorder %s19, 0
    %p198 = por %p196, %p197
    %p199 = scmp.le.s32.totalorder 1, %s13
    %p200 = scmp.lt.s32.totalorder %s13, 3
    %p201 = pnand %p199, %p200
    %p202 = pneg %p201
    // Predicated region
    $region9: #{tpu_custom_call.1} parent=5 // pred_check
      _
    $region10: #{tpu_custom_call.1} parent=5 // pred_check_branch
      %204 = sbr.rel (%p201) target = $region12
    $region11: #{tpu_custom_call.1} parent=5 // pred_region
      %s205 = ssub.s32 %s13, 1
      // Predicated region
      $region13: #{tpu_custom_call.1} parent=11 // pred_check
        %p206 = pneg %p60
      $region14: #{tpu_custom_call.1} parent=11 // pred_check_branch
        %208 = sbr.rel (%p206) target = $region16
      $region15: #{tpu_custom_call.1} parent=11 // pred_region
        _
      $region16: #{tpu_custom_call.1} parent=11 // pred_fallthru
        _
      // Predicated region
      $region17: #{tpu_custom_call.1} parent=11 // pred_check
        %p209 = pneg %p81
      $region18: #{tpu_custom_call.1} parent=11 // pred_check_branch
        %211 = sbr.rel (%p209) target = $region20
      $region19: #{tpu_custom_call.1} parent=11 // pred_region
        _
      $region20: #{tpu_custom_call.1} parent=11 // pred_fallthru
        _
      // Predicated region
      $region21: #{tpu_custom_call.1} parent=11 // pred_check
        %p212 = pneg %p102
      $region22: #{tpu_custom_call.1} parent=11 // pred_check_branch
        %214 = sbr.rel (%p212) target = $region24
      $region23: #{tpu_custom_call.1} parent=11 // pred_region
        _
      $region24: #{tpu_custom_call.1} parent=11 // pred_fallthru
        _
      // Predicated region
      $region25: #{tpu_custom_call.1} parent=11 // pred_check
        %p215 = pneg %p123
      $region26: #{tpu_custom_call.1} parent=11 // pred_check_branch
        %217 = sbr.rel (%p215) target = $region28
      $region27: #{tpu_custom_call.1} parent=11 // pred_region
        _
      $region28: #{tpu_custom_call.1} parent=11 // pred_fallthru
        _
      // Predicated region
      $region29: #{tpu_custom_call.1} parent=11 // pred_check
        %p218 = pneg %p144
      $region30: #{tpu_custom_call.1} parent=11 // pred_check_branch
        %220 = sbr.rel (%p218) target = $region32
      $region31: #{tpu_custom_call.1} parent=11 // pred_region
        _
      $region32: #{tpu_custom_call.1} parent=11 // pred_fallthru
        _
      // Predicated region
      $region33: #{tpu_custom_call.1} parent=11 // pred_check
        %p221 = pneg %p165
      $region34: #{tpu_custom_call.1} parent=11 // pred_check_branch
        %223 = sbr.rel (%p221) target = $region36
      $region35: #{tpu_custom_call.1} parent=11 // pred_region
        _
      $region36: #{tpu_custom_call.1} parent=11 // pred_fallthru
        _
    $region12: #{tpu_custom_call.1} parent=5 // pred_fallthru
      _
    %p224 = scmp.lt.s32.totalorder %s13, 2
    // Predicated region
    $region37: #{tpu_custom_call.1} parent=5 // pred_check
      %p225 = pneg %p224
    $region38: #{tpu_custom_call.1} parent=5 // pred_check_branch
      %227 = sbr.rel (%p225) target = $region40
    $region39: #{tpu_custom_call.1} parent=5 // pred_region
      // Predicated region
      $region41: #{tpu_custom_call.1} parent=39 // pred_check
        %p228 = pneg %p33
      $region42: #{tpu_custom_call.1} parent=39 // pred_check_branch
        %230 = sbr.rel (%p228) target = $region44
      $region43: #{tpu_custom_call.1} parent=39 // pred_region
        %p231 = scmp.lt.s32.totalorder %s13, 1
        %s232 = scalar_select %p231, %s13, 1
        %s233 = smul.addr %s232, 54
        %s234 = smul.addr %s233, 8
        %s235 = scalar_lea.vmem %s0, %s234
      $region44: #{tpu_custom_call.1} parent=39 // pred_fallthru
        _
    $region40: #{tpu_custom_call.1} parent=5 // pred_fallthru
      _
    %p236 = scmp.le.s32.totalorder 1, %s13
    %p237 = scmp.lt.s32.totalorder %s13, 3
    %p238 = pnand %p236, %p237
    %p239 = pneg %p238
    // Predicated region
    $region45: #{tpu_custom_call.1} parent=5 // pred_check
      _
    $region46: #{tpu_custom_call.1} parent=5 // pred_check_branch
      %241 = sbr.rel (%p238) target = $region48
    $region47: #{tpu_custom_call.1} parent=5 // pred_region
      %s242 = ssub.s32 %s13, 1
      %p243 = scmp.lt.s32.totalorder %s18, 1
      %s244 = scalar_select %p243, %s18, 1
      %s245 = smul.addr %s244, 54
      %s246 = smul.addr %s245, 8
      %s247 = scalar_lea.vmem %s0, %s246
      %p248 = pneg %p39
      %p249 = pneg %p36
      %p250 = pneg %p60
      %p251 = pneg %p57
      %p252 = pneg %p81
      %p253 = pneg %p78
      %p254 = pneg %p102
      %p255 = pneg %p99
      %p256 = pneg %p123
      %p257 = pneg %p120
      %p258 = pneg %p144
      %p259 = pneg %p141
      %p260 = pneg %p165
      %p261 = pneg %p162
      %p262 = pneg %p191
      %p263 = pneg %p188
      %p264 = scmp.lt.s32.totalorder %s18, 1
      %s265 = scalar_select %p264, %s18, 1
      %s266 = smul.addr %s265, 32
      %s267 = smul.addr %s266, 8
      %s268 = scalar_lea.vmem %s7, %s267
      %p269 = scmp.lt.s32.totalorder %s18, 1
      %s270 = scalar_select %p269, %s18, 1
      %s271 = smul.addr %s270, 54
      %s272 = smul.addr %s271, 8
      %s273 = scalar_lea.vmem %s0, %s272
      %p274 = scmp.lt.s32.totalorder %s18, 1
      %s275 = scalar_select %p274, %s18, 1
      %s276 = smul.addr %s275, 32
      %s277 = smul.addr %s276, 8
      %s278 = scalar_lea.vmem %s7, %s277
      %v280 = vld [vmem:[%s273] sm:$0xff]
      %v281 = vld [vmem:[%s273 + $0x8] sm:$0xff]
      %v282 = vld [vmem:[%s273 + $0x10] sm:$0x3]
      %v283 = vld [vmem:[%s273 + $0x18] sm:$0xff]
      %v284 = vld [vmem:[%s273 + $0x20] sm:$0xff]
      %v285 = vld [vmem:[%s273 + $0x28] sm:$0x3]
      %v286 = vld [vmem:[%s273 + $0x30] sm:$0xff]
      %v287 = vld [vmem:[%s273 + $0x38] sm:$0xff]
      %v288 = vld [vmem:[%s273 + $0x40] sm:$0x3]
      %v289 = vld [vmem:[%s273 + $0x48] sm:$0xff]
      %v290 = vld [vmem:[%s273 + $0x50] sm:$0xff]
      %v291 = vld [vmem:[%s273 + $0x58] sm:$0x3]
      %v292 = vld [vmem:[%s273 + $0x60] sm:$0xff]
      %v293 = vld [vmem:[%s273 + $0x68] sm:$0xff]
      %v294 = vld [vmem:[%s273 + $0x70] sm:$0x3]
      %v295 = vld [vmem:[%s273 + $0x78] sm:$0xff]
      %v296 = vld [vmem:[%s273 + $0x80] sm:$0xff]
      %v297 = vld [vmem:[%s273 + $0x88] sm:$0x3]
      %v298 = vld [vmem:[%s273 + $0x90] sm:$0xff]
      %v299 = vld [vmem:[%s273 + $0x98] sm:$0xff]
      %v300 = vld [vmem:[%s273 + $0xa0] sm:$0x3]
      %v301 = vld [vmem:[%s273 + $0xa8] sm:$0xff]
      %v302 = vld [vmem:[%s273 + $0xb0] sm:$0xff]
      %v303 = vld [vmem:[%s273 + $0xb8] sm:$0x3]
      %v304 = vld [vmem:[%s273 + $0xc0] sm:$0xff]
      %v305 = vld [vmem:[%s273 + $0xc8] sm:$0xff]
      %v306 = vld [vmem:[%s273 + $0xd0] sm:$0x3]
      %v307 = vld [vmem:[%s273 + $0xd8] sm:$0xff]
      %v308 = vld [vmem:[%s273 + $0xe0] sm:$0xff]
      %v309 = vld [vmem:[%s273 + $0xe8] sm:$0x3]
      %v310 = vld [vmem:[%s273 + $0xf0] sm:$0xff]
      %v311 = vld [vmem:[%s273 + $0xf8] sm:$0xff]
      %v312 = vld [vmem:[%s273 + $0x100] sm:$0x3]
      %v313 = vld [vmem:[%s273 + $0x108] sm:$0xff]
      %v314 = vld [vmem:[%s273 + $0x110] sm:$0xff]
      %v315 = vld [vmem:[%s273 + $0x118] sm:$0x3]
      %v316 = vld [vmem:[%s273 + $0x120] sm:$0xff]
      %v317 = vld [vmem:[%s273 + $0x128] sm:$0xff]
      %v318 = vld [vmem:[%s273 + $0x130] sm:$0x3]
      %v319 = vld [vmem:[%s273 + $0x138] sm:$0xff]
      %v320 = vld [vmem:[%s273 + $0x140] sm:$0xff]
      %v321 = vld [vmem:[%s273 + $0x148] sm:$0x3]
      %v322 = vld [vmem:[%s273 + $0x150] sm:$0xff]
      %v323 = vld [vmem:[%s273 + $0x158] sm:$0xff]
      %v324 = vld [vmem:[%s273 + $0x160] sm:$0x3]
      %v325 = vld [vmem:[%s273 + $0x168] sm:$0xff]
      %v326 = vld [vmem:[%s273 + $0x170] sm:$0xff]
      %v327 = vld [vmem:[%s273 + $0x178] sm:$0x3]
      %v328 = vld [vmem:[%s273 + $0x180] sm:$0xff]
      %v329 = vld [vmem:[%s273 + $0x188] sm:$0xff]
      %v330 = vld [vmem:[%s273 + $0x190] sm:$0x3]
      %v331 = vld [vmem:[%s273 + $0x198] sm:$0xff]
      %v332 = vld [vmem:[%s273 + $0x1a0] sm:$0xff]
      %v333 = vld [vmem:[%s273 + $0x1a8] sm:$0x3]
      %vm382 = vcmask 1046528
      %v383 = vrot.slane %v280, 1
      %v384 = vrot.slane %v281, 1
      %v385 = vsel %vm382, %v383, %v384
      %v386 = vrot.slane %v282, 1
      %v387 = vsel %vm382, %v384, %v386
      %v388 = vrot.slane %v283, 1
      %v389 = vrot.slane %v284, 1
      %v390 = vsel %vm382, %v388, %v389
      %v391 = vrot.slane %v285, 1
      %v392 = vsel %vm382, %v389, %v391
      %v393 = vrot.slane %v286, 1
      %v394 = vrot.slane %v287, 1
      %v395 = vsel %vm382, %v393, %v394
      %v396 = vrot.slane %v288, 1
      %v397 = vsel %vm382, %v394, %v396
      %v398 = vrot.slane %v289, 1
      %v399 = vrot.slane %v290, 1
      %v400 = vsel %vm382, %v398, %v399
      %v401 = vrot.slane %v291, 1
      %v402 = vsel %vm382, %v399, %v401
      %v403 = vrot.slane %v292, 1
      %v404 = vrot.slane %v293, 1
      %v405 = vsel %vm382, %v403, %v404
      %v406 = vrot.slane %v294, 1
      %v407 = vsel %vm382, %v404, %v406
      %v408 = vrot.slane %v295, 1
      %v409 = vrot.slane %v296, 1
      %v410 = vsel %vm382, %v408, %v409
      %v411 = vrot.slane %v297, 1
      %v412 = vsel %vm382, %v409, %v411
      %v413 = vrot.slane %v298, 1
      %v414 = vrot.slane %v299, 1
      %v415 = vsel %vm382, %v413, %v414
      %v416 = vrot.slane %v300, 1
      %v417 = vsel %vm382, %v414, %v416
      %v418 = vrot.slane %v301, 1
      %v419 = vrot.slane %v302, 1
      %v420 = vsel %vm382, %v418, %v419
      %v421 = vrot.slane %v303, 1
      %v422 = vsel %vm382, %v419, %v421
      %v423 = vrot.slane %v304, 1
      %v424 = vrot.slane %v305, 1
      %v425 = vsel %vm382, %v423, %v424
      %v426 = vrot.slane %v306, 1
      %v427 = vsel %vm382, %v424, %v426
      %v428 = vrot.slane %v307, 1
      %v429 = vrot.slane %v308, 1
      %v430 = vsel %vm382, %v428, %v429
      %v431 = vrot.slane %v309, 1
      %v432 = vsel %vm382, %v429, %v431
      %v433 = vrot.slane %v310, 1
      %v434 = vrot.slane %v311, 1
      %v435 = vsel %vm382, %v433, %v434
      %v436 = vrot.slane %v312, 1
      %v437 = vsel %vm382, %v434, %v436
      %v438 = vrot.slane %v313, 1
      %v439 = vrot.slane %v314, 1
      %v440 = vsel %vm382, %v438, %v439
      %v441 = vrot.slane %v315, 1
      %v442 = vsel %vm382, %v439, %v441
      %v443 = vrot.slane %v316, 1
      %v444 = vrot.slane %v317, 1
      %v445 = vsel %vm382, %v443, %v444
      %v446 = vrot.slane %v318, 1
      %v447 = vsel %vm382, %v444, %v446
      %v448 = vrot.slane %v319, 1
      %v449 = vrot.slane %v320, 1
      %v450 = vsel %vm382, %v448, %v449
      %v451 = vrot.slane %v321, 1
      %v452 = vsel %vm382, %v449, %v451
      %v453 = vrot.slane %v322, 1
      %v454 = vrot.slane %v323, 1
      %v455 = vsel %vm382, %v453, %v454
      %v456 = vrot.slane %v324, 1
      %v457 = vsel %vm382, %v454, %v456
      %v458 = vrot.slane %v325, 1
      %v459 = vrot.slane %v326, 1
      %v460 = vsel %vm382, %v458, %v459
      %v461 = vrot.slane %v327, 1
      %v462 = vsel %vm382, %v459, %v461
      %vm463 = vcmask 1045504
      %v464 = vrot.slane %v280, 2
      %v465 = vrot.slane %v281, 2
      %v466 = vsel %vm463, %v464, %v465
      %v467 = vrot.slane %v282, 2
      %v468 = vsel %vm463, %v465, %v467
      %v469 = vrot.slane %v283, 2
      %v470 = vrot.slane %v284, 2
      %v471 = vsel %vm463, %v469, %v470
      %v472 = vrot.slane %v285, 2
      %v473 = vsel %vm463, %v470, %v472
      %v474 = vrot.slane %v286, 2
      %v475 = vrot.slane %v287, 2
      %v476 = vsel %vm463, %v474, %v475
      %v477 = vrot.slane %v288, 2
      %v478 = vsel %vm463, %v475, %v477
      %v479 = vrot.slane %v289, 2
      %v480 = vrot.slane %v290, 2
      %v481 = vsel %vm463, %v479, %v480
      %v482 = vrot.slane %v291, 2
      %v483 = vsel %vm463, %v480, %v482
      %v484 = vrot.slane %v292, 2
      %v485 = vrot.slane %v293, 2
      %v486 = vsel %vm463, %v484, %v485
      %v487 = vrot.slane %v294, 2
      %v488 = vsel %vm463, %v485, %v487
      %v489 = vrot.slane %v295, 2
      %v490 = vrot.slane %v296, 2
      %v491 = vsel %vm463, %v489, %v490
      %v492 = vrot.slane %v297, 2
      %v493 = vsel %vm463, %v490, %v492
      %v494 = vrot.slane %v298, 2
      %v495 = vrot.slane %v299, 2
      %v496 = vsel %vm463, %v494, %v495
      %v497 = vrot.slane %v300, 2
      %v498 = vsel %vm463, %v495, %v497
      %v499 = vrot.slane %v301, 2
      %v500 = vrot.slane %v302, 2
      %v501 = vsel %vm463, %v499, %v500
      %v502 = vrot.slane %v303, 2
      %v503 = vsel %vm463, %v500, %v502
      %v504 = vrot.slane %v304, 2
      %v505 = vrot.slane %v305, 2
      %v506 = vsel %vm463, %v504, %v505
      %v507 = vrot.slane %v306, 2
      %v508 = vsel %vm463, %v505, %v507
      %v509 = vrot.slane %v307, 2
      %v510 = vrot.slane %v308, 2
      %v511 = vsel %vm463, %v509, %v510
      %v512 = vrot.slane %v309, 2
      %v513 = vsel %vm463, %v510, %v512
      %v514 = vrot.slane %v310, 2
      %v515 = vrot.slane %v311, 2
      %v516 = vsel %vm463, %v514, %v515
      %v517 = vrot.slane %v312, 2
      %v518 = vsel %vm463, %v515, %v517
      %v519 = vrot.slane %v313, 2
      %v520 = vrot.slane %v314, 2
      %v521 = vsel %vm463, %v519, %v520
      %v522 = vrot.slane %v315, 2
      %v523 = vsel %vm463, %v520, %v522
      %v524 = vrot.slane %v316, 2
      %v525 = vrot.slane %v317, 2
      %v526 = vsel %vm463, %v524, %v525
      %v527 = vrot.slane %v318, 2
      %v528 = vsel %vm463, %v525, %v527
      %v529 = vrot.slane %v319, 2
      %v530 = vrot.slane %v320, 2
      %v531 = vsel %vm463, %v529, %v530
      %v532 = vrot.slane %v321, 2
      %v533 = vsel %vm463, %v530, %v532
      %v534 = vrot.slane %v322, 2
      %v535 = vrot.slane %v323, 2
      %v536 = vsel %vm463, %v534, %v535
      %v537 = vrot.slane %v324, 2
      %v538 = vsel %vm463, %v535, %v537
      %v539 = vrot.slane %v325, 2
      %v540 = vrot.slane %v326, 2
      %v541 = vsel %vm463, %v539, %v540
      %v542 = vrot.slane %v327, 2
      %v543 = vsel %vm463, %v540, %v542
      %v547 = vrot.slane %v328, 1
      %v548 = vrot.slane %v329, 1
      %v549 = vsel %vm382, %v547, %v548
      %v550 = vrot.slane %v330, 1
      %v551 = vsel %vm382, %v548, %v550
      %v584 = vrot.slane %v328, 2
      %v585 = vrot.slane %v329, 2
      %v586 = vsel %vm463, %v584, %v585
      %v587 = vrot.slane %v330, 2
      %v588 = vsel %vm463, %v585, %v587
      %v592 = vrot.slane %v331, 1
      %v593 = vrot.slane %v332, 1
      %v594 = vsel %vm382, %v592, %v593
      %v595 = vrot.slane %v333, 1
      %v596 = vsel %vm382, %v593, %v595
      %v597 = vrot.slane %v331, 2
      %v598 = vrot.slane %v332, 2
      %v599 = vsel %vm463, %v597, %v598
      %v600 = vrot.slane %v333, 2
      %v601 = vsel %vm463, %v598, %v600
      %602 = vrot.lane.b32.xlu0 %v385, 4
      %v603 = vpop.permute.xlu0 %602
      %604 = vrot.lane.b32.xlu0 %v387, 4
      %v605 = vpop.permute.xlu0 %604
      %606 = vrot.lane.b32.xlu0 %v390, 4
      %v607 = vpop.permute.xlu0 %606
      %608 = vrot.lane.b32.xlu0 %v392, 4
      %v609 = vpop.permute.xlu0 %608
      %610 = vrot.lane.b32.xlu0 %v395, 4
      %v611 = vpop.permute.xlu0 %610
      %612 = vrot.lane.b32.xlu0 %v397, 4
      %v613 = vpop.permute.xlu0 %612
      %614 = vrot.lane.b32.xlu0 %v400, 4
      %v615 = vpop.permute.xlu0 %614
      %616 = vrot.lane.b32.xlu0 %v402, 4
      %v617 = vpop.permute.xlu0 %616
      %618 = vrot.lane.b32.xlu0 %v405, 4
      %v619 = vpop.permute.xlu0 %618
      %620 = vrot.lane.b32.xlu0 %v407, 4
      %v621 = vpop.permute.xlu0 %620
      %622 = vrot.lane.b32.xlu0 %v410, 4
      %v623 = vpop.permute.xlu0 %622
      %624 = vrot.lane.b32.xlu0 %v412, 4
      %v625 = vpop.permute.xlu0 %624
      %626 = vrot.lane.b32.xlu0 %v415, 4
      %v627 = vpop.permute.xlu0 %626
      %628 = vrot.lane.b32.xlu0 %v417, 4
      %v629 = vpop.permute.xlu0 %628
      %630 = vrot.lane.b32.xlu0 %v420, 4
      %v631 = vpop.permute.xlu0 %630
      %632 = vrot.lane.b32.xlu0 %v422, 4
      %v633 = vpop.permute.xlu0 %632
      %634 = vrot.lane.b32.xlu0 %v425, 4
      %v635 = vpop.permute.xlu0 %634
      %636 = vrot.lane.b32.xlu0 %v427, 4
      %v637 = vpop.permute.xlu0 %636
      %638 = vrot.lane.b32.xlu0 %v430, 4
      %v639 = vpop.permute.xlu0 %638
      %640 = vrot.lane.b32.xlu0 %v432, 4
      %v641 = vpop.permute.xlu0 %640
      %642 = vrot.lane.b32.xlu0 %v435, 4
      %v643 = vpop.permute.xlu0 %642
      %644 = vrot.lane.b32.xlu0 %v437, 4
      %v645 = vpop.permute.xlu0 %644
      %646 = vrot.lane.b32.xlu0 %v440, 4
      %v647 = vpop.permute.xlu0 %646
      %648 = vrot.lane.b32.xlu0 %v442, 4
      %v649 = vpop.permute.xlu0 %648
      %650 = vrot.lane.b32.xlu0 %v445, 4
      %v651 = vpop.permute.xlu0 %650
      %652 = vrot.lane.b32.xlu0 %v447, 4
      %v653 = vpop.permute.xlu0 %652
      %654 = vrot.lane.b32.xlu0 %v450, 4
      %v655 = vpop.permute.xlu0 %654
      %656 = vrot.lane.b32.xlu0 %v452, 4
      %v657 = vpop.permute.xlu0 %656
      %658 = vrot.lane.b32.xlu0 %v455, 4
      %v659 = vpop.permute.xlu0 %658
      %660 = vrot.lane.b32.xlu0 %v457, 4
      %v661 = vpop.permute.xlu0 %660
      %662 = vrot.lane.b32.xlu0 %v460, 4
      %v663 = vpop.permute.xlu0 %662
      %664 = vrot.lane.b32.xlu0 %v462, 4
      %v665 = vpop.permute.xlu0 %664
      %698 = vrot.lane.b32.xlu0 %v466, 8
      %v699 = vpop.permute.xlu0 %698
      %700 = vrot.lane.b32.xlu0 %v468, 8
      %v701 = vpop.permute.xlu0 %700
      %702 = vrot.lane.b32.xlu0 %v471, 8
      %v703 = vpop.permute.xlu0 %702
      %704 = vrot.lane.b32.xlu0 %v473, 8
      %v705 = vpop.permute.xlu0 %704
      %706 = vrot.lane.b32.xlu0 %v476, 8
      %v707 = vpop.permute.xlu0 %706
      %708 = vrot.lane.b32.xlu0 %v478, 8
      %v709 = vpop.permute.xlu0 %708
      %710 = vrot.lane.b32.xlu0 %v481, 8
      %v711 = vpop.permute.xlu0 %710
      %712 = vrot.lane.b32.xlu0 %v483, 8
      %v713 = vpop.permute.xlu0 %712
      %714 = vrot.lane.b32.xlu0 %v486, 8
      %v715 = vpop.permute.xlu0 %714
      %716 = vrot.lane.b32.xlu0 %v488, 8
      %v717 = vpop.permute.xlu0 %716
      %718 = vrot.lane.b32.xlu0 %v491, 8
      %v719 = vpop.permute.xlu0 %718
      %720 = vrot.lane.b32.xlu0 %v493, 8
      %v721 = vpop.permute.xlu0 %720
      %722 = vrot.lane.b32.xlu0 %v496, 8
      %v723 = vpop.permute.xlu0 %722
      %724 = vrot.lane.b32.xlu0 %v498, 8
      %v725 = vpop.permute.xlu0 %724
      %726 = vrot.lane.b32.xlu0 %v501, 8
      %v727 = vpop.permute.xlu0 %726
      %728 = vrot.lane.b32.xlu0 %v503, 8
      %v729 = vpop.permute.xlu0 %728
      %730 = vrot.lane.b32.xlu0 %v506, 8
      %v731 = vpop.permute.xlu0 %730
      %732 = vrot.lane.b32.xlu0 %v508, 8
      %v733 = vpop.permute.xlu0 %732
      %734 = vrot.lane.b32.xlu0 %v511, 8
      %v735 = vpop.permute.xlu0 %734
      %736 = vrot.lane.b32.xlu0 %v513, 8
      %v737 = vpop.permute.xlu0 %736
      %738 = vrot.lane.b32.xlu0 %v516, 8
      %v739 = vpop.permute.xlu0 %738
      %740 = vrot.lane.b32.xlu0 %v518, 8
      %v741 = vpop.permute.xlu0 %740
      %742 = vrot.lane.b32.xlu0 %v521, 8
      %v743 = vpop.permute.xlu0 %742
      %744 = vrot.lane.b32.xlu0 %v523, 8
      %v745 = vpop.permute.xlu0 %744
      %746 = vrot.lane.b32.xlu0 %v526, 8
      %v747 = vpop.permute.xlu0 %746
      %748 = vrot.lane.b32.xlu0 %v528, 8
      %v749 = vpop.permute.xlu0 %748
      %750 = vrot.lane.b32.xlu0 %v531, 8
      %v751 = vpop.permute.xlu0 %750
      %752 = vrot.lane.b32.xlu0 %v533, 8
      %v753 = vpop.permute.xlu0 %752
      %754 = vrot.lane.b32.xlu0 %v536, 8
      %v755 = vpop.permute.xlu0 %754
      %756 = vrot.lane.b32.xlu0 %v538, 8
      %v757 = vpop.permute.xlu0 %756
      %758 = vrot.lane.b32.xlu0 %v541, 8
      %v759 = vpop.permute.xlu0 %758
      %760 = vrot.lane.b32.xlu0 %v543, 8
      %v761 = vpop.permute.xlu0 %760
      %794 = vrot.lane.b32.xlu0 %v283, 12
      %v795 = vpop.permute.xlu0 %794
      %796 = vrot.lane.b32.xlu0 %v284, 12
      %v797 = vpop.permute.xlu0 %796
      %798 = vrot.lane.b32.xlu0 %v286, 12
      %v799 = vpop.permute.xlu0 %798
      %800 = vrot.lane.b32.xlu0 %v287, 12
      %v801 = vpop.permute.xlu0 %800
      %802 = vrot.lane.b32.xlu0 %v289, 12
      %v803 = vpop.permute.xlu0 %802
      %804 = vrot.lane.b32.xlu0 %v290, 12
      %v805 = vpop.permute.xlu0 %804
      %806 = vrot.lane.b32.xlu0 %v292, 12
      %v807 = vpop.permute.xlu0 %806
      %808 = vrot.lane.b32.xlu0 %v293, 12
      %v809 = vpop.permute.xlu0 %808
      %810 = vrot.lane.b32.xlu0 %v295, 12
      %v811 = vpop.permute.xlu0 %810
      %812 = vrot.lane.b32.xlu0 %v296, 12
      %v813 = vpop.permute.xlu0 %812
      %814 = vrot.lane.b32.xlu0 %v298, 12
      %v815 = vpop.permute.xlu0 %814
      %816 = vrot.lane.b32.xlu0 %v299, 12
      %v817 = vpop.permute.xlu0 %816
      %818 = vrot.lane.b32.xlu0 %v301, 12
      %v819 = vpop.permute.xlu0 %818
      %820 = vrot.lane.b32.xlu0 %v302, 12
      %v821 = vpop.permute.xlu0 %820
      %822 = vrot.lane.b32.xlu0 %v304, 12
      %v823 = vpop.permute.xlu0 %822
      %824 = vrot.lane.b32.xlu0 %v305, 12
      %v825 = vpop.permute.xlu0 %824
      %826 = vrot.lane.b32.xlu0 %v307, 12
      %v827 = vpop.permute.xlu0 %826
      %828 = vrot.lane.b32.xlu0 %v308, 12
      %v829 = vpop.permute.xlu0 %828
      %830 = vrot.lane.b32.xlu0 %v310, 12
      %v831 = vpop.permute.xlu0 %830
      %832 = vrot.lane.b32.xlu0 %v311, 12
      %v833 = vpop.permute.xlu0 %832
      %834 = vrot.lane.b32.xlu0 %v313, 12
      %v835 = vpop.permute.xlu0 %834
      %836 = vrot.lane.b32.xlu0 %v314, 12
      %v837 = vpop.permute.xlu0 %836
      %838 = vrot.lane.b32.xlu0 %v316, 12
      %v839 = vpop.permute.xlu0 %838
      %840 = vrot.lane.b32.xlu0 %v317, 12
      %v841 = vpop.permute.xlu0 %840
      %842 = vrot.lane.b32.xlu0 %v319, 12
      %v843 = vpop.permute.xlu0 %842
      %844 = vrot.lane.b32.xlu0 %v320, 12
      %v845 = vpop.permute.xlu0 %844
      %846 = vrot.lane.b32.xlu0 %v322, 12
      %v847 = vpop.permute.xlu0 %846
      %848 = vrot.lane.b32.xlu0 %v323, 12
      %v849 = vpop.permute.xlu0 %848
      %850 = vrot.lane.b32.xlu0 %v325, 12
      %v851 = vpop.permute.xlu0 %850
      %852 = vrot.lane.b32.xlu0 %v326, 12
      %v853 = vpop.permute.xlu0 %852
      %854 = vrot.lane.b32.xlu0 %v328, 12
      %v855 = vpop.permute.xlu0 %854
      %856 = vrot.lane.b32.xlu0 %v329, 12
      %v857 = vpop.permute.xlu0 %856
      %890 = vrot.lane.b32.xlu0 %v390, 16
      %v891 = vpop.permute.xlu0 %890
      %892 = vrot.lane.b32.xlu0 %v392, 16
      %v893 = vpop.permute.xlu0 %892
      %894 = vrot.lane.b32.xlu0 %v395, 16
      %v895 = vpop.permute.xlu0 %894
      %896 = vrot.lane.b32.xlu0 %v397, 16
      %v897 = vpop.permute.xlu0 %896
      %898 = vrot.lane.b32.xlu0 %v400, 16
      %v899 = vpop.permute.xlu0 %898
      %900 = vrot.lane.b32.xlu0 %v402, 16
      %v901 = vpop.permute.xlu0 %900
      %902 = vrot.lane.b32.xlu0 %v405, 16
      %v903 = vpop.permute.xlu0 %902
      %904 = vrot.lane.b32.xlu0 %v407, 16
      %v905 = vpop.permute.xlu0 %904
      %906 = vrot.lane.b32.xlu0 %v410, 16
      %v907 = vpop.permute.xlu0 %906
      %908 = vrot.lane.b32.xlu0 %v412, 16
      %v909 = vpop.permute.xlu0 %908
      %910 = vrot.lane.b32.xlu0 %v415, 16
      %v911 = vpop.permute.xlu0 %910
      %912 = vrot.lane.b32.xlu0 %v417, 16
      %v913 = vpop.permute.xlu0 %912
      %914 = vrot.lane.b32.xlu0 %v420, 16
      %v915 = vpop.permute.xlu0 %914
      %916 = vrot.lane.b32.xlu0 %v422, 16
      %v917 = vpop.permute.xlu0 %916
      %918 = vrot.lane.b32.xlu0 %v425, 16
      %v919 = vpop.permute.xlu0 %918
      %920 = vrot.lane.b32.xlu0 %v427, 16
      %v921 = vpop.permute.xlu0 %920
      %922 = vrot.lane.b32.xlu0 %v430, 16
      %v923 = vpop.permute.xlu0 %922
      %924 = vrot.lane.b32.xlu0 %v432, 16
      %v925 = vpop.permute.xlu0 %924
      %926 = vrot.lane.b32.xlu0 %v435, 16
      %v927 = vpop.permute.xlu0 %926
      %928 = vrot.lane.b32.xlu0 %v437, 16
      %v929 = vpop.permute.xlu0 %928
      %930 = vrot.lane.b32.xlu0 %v440, 16
      %v931 = vpop.permute.xlu0 %930
      %932 = vrot.lane.b32.xlu0 %v442, 16
      %v933 = vpop.permute.xlu0 %932
      %934 = vrot.lane.b32.xlu0 %v445, 16
      %v935 = vpop.permute.xlu0 %934
      %936 = vrot.lane.b32.xlu0 %v447, 16
      %v937 = vpop.permute.xlu0 %936
      %938 = vrot.lane.b32.xlu0 %v450, 16
      %v939 = vpop.permute.xlu0 %938
      %940 = vrot.lane.b32.xlu0 %v452, 16
      %v941 = vpop.permute.xlu0 %940
      %942 = vrot.lane.b32.xlu0 %v455, 16
      %v943 = vpop.permute.xlu0 %942
      %944 = vrot.lane.b32.xlu0 %v457, 16
      %v945 = vpop.permute.xlu0 %944
      %946 = vrot.lane.b32.xlu0 %v460, 16
      %v947 = vpop.permute.xlu0 %946
      %948 = vrot.lane.b32.xlu0 %v462, 16
      %v949 = vpop.permute.xlu0 %948
      %950 = vrot.lane.b32.xlu0 %v549, 16
      %v951 = vpop.permute.xlu0 %950
      %952 = vrot.lane.b32.xlu0 %v551, 16
      %v953 = vpop.permute.xlu0 %952
      %986 = vrot.lane.b32.xlu0 %v471, 20
      %v987 = vpop.permute.xlu0 %986
      %988 = vrot.lane.b32.xlu0 %v473, 20
      %v989 = vpop.permute.xlu0 %988
      %990 = vrot.lane.b32.xlu0 %v476, 20
      %v991 = vpop.permute.xlu0 %990
      %992 = vrot.lane.b32.xlu0 %v478, 20
      %v993 = vpop.permute.xlu0 %992
      %994 = vrot.lane.b32.xlu0 %v481, 20
      %v995 = vpop.permute.xlu0 %994
      %996 = vrot.lane.b32.xlu0 %v483, 20
      %v997 = vpop.permute.xlu0 %996
      %998 = vrot.lane.b32.xlu0 %v486, 20
      %v999 = vpop.permute.xlu0 %998
      %1000 = vrot.lane.b32.xlu0 %v488, 20
      %v1001 = vpop.permute.xlu0 %1000
      %1002 = vrot.lane.b32.xlu0 %v491, 20
      %v1003 = vpop.permute.xlu0 %1002
      %1004 = vrot.lane.b32.xlu0 %v493, 20
      %v1005 = vpop.permute.xlu0 %1004
      %1006 = vrot.lane.b32.xlu0 %v496, 20
      %v1007 = vpop.permute.xlu0 %1006
      %1008 = vrot.lane.b32.xlu0 %v498, 20
      %v1009 = vpop.permute.xlu0 %1008
      %1010 = vrot.lane.b32.xlu0 %v501, 20
      %v1011 = vpop.permute.xlu0 %1010
      %1012 = vrot.lane.b32.xlu0 %v503, 20
      %v1013 = vpop.permute.xlu0 %1012
      %1014 = vrot.lane.b32.xlu0 %v506, 20
      %v1015 = vpop.permute.xlu0 %1014
      %1016 = vrot.lane.b32.xlu0 %v508, 20
      %v1017 = vpop.permute.xlu0 %1016
      %1018 = vrot.lane.b32.xlu0 %v511, 20
      %v1019 = vpop.permute.xlu0 %1018
      %1020 = vrot.lane.b32.xlu0 %v513, 20
      %v1021 = vpop.permute.xlu0 %1020
      %1022 = vrot.lane.b32.xlu0 %v516, 20
      %v1023 = vpop.permute.xlu0 %1022
      %1024 = vrot.lane.b32.xlu0 %v518, 20
      %v1025 = vpop.permute.xlu0 %1024
      %1026 = vrot.lane.b32.xlu0 %v521, 20
      %v1027 = vpop.permute.xlu0 %1026
      %1028 = vrot.lane.b32.xlu0 %v523, 20
      %v1029 = vpop.permute.xlu0 %1028
      %1030 = vrot.lane.b32.xlu0 %v526, 20
      %v1031 = vpop.permute.xlu0 %1030
      %1032 = vrot.lane.b32.xlu0 %v528, 20
      %v1033 = vpop.permute.xlu0 %1032
      %1034 = vrot.lane.b32.xlu0 %v531, 20
      %v1035 = vpop.permute.xlu0 %1034
      %1036 = vrot.lane.b32.xlu0 %v533, 20
      %v1037 = vpop.permute.xlu0 %1036
      %1038 = vrot.lane.b32.xlu0 %v536, 20
      %v1039 = vpop.permute.xlu0 %1038
      %1040 = vrot.lane.b32.xlu0 %v538, 20
      %v1041 = vpop.permute.xlu0 %1040
      %1042 = vrot.lane.b32.xlu0 %v541, 20
      %v1043 = vpop.permute.xlu0 %1042
      %1044 = vrot.lane.b32.xlu0 %v543, 20
      %v1045 = vpop.permute.xlu0 %1044
      %1046 = vrot.lane.b32.xlu0 %v586, 20
      %v1047 = vpop.permute.xlu0 %1046
      %1048 = vrot.lane.b32.xlu0 %v588, 20
      %v1049 = vpop.permute.xlu0 %1048
      %1082 = vrot.lane.b32.xlu0 %v286, 24
      %v1083 = vpop.permute.xlu0 %1082
      %1084 = vrot.lane.b32.xlu0 %v287, 24
      %v1085 = vpop.permute.xlu0 %1084
      %1086 = vrot.lane.b32.xlu0 %v289, 24
      %v1087 = vpop.permute.xlu0 %1086
      %1088 = vrot.lane.b32.xlu0 %v290, 24
      %v1089 = vpop.permute.xlu0 %1088
      %1090 = vrot.lane.b32.xlu0 %v292, 24
      %v1091 = vpop.permute.xlu0 %1090
      %1092 = vrot.lane.b32.xlu0 %v293, 24
      %v1093 = vpop.permute.xlu0 %1092
      %1094 = vrot.lane.b32.xlu0 %v295, 24
      %v1095 = vpop.permute.xlu0 %1094
      %1096 = vrot.lane.b32.xlu0 %v296, 24
      %v1097 = vpop.permute.xlu0 %1096
      %1098 = vrot.lane.b32.xlu0 %v298, 24
      %v1099 = vpop.permute.xlu0 %1098
      %1100 = vrot.lane.b32.xlu0 %v299, 24
      %v1101 = vpop.permute.xlu0 %1100
      %1102 = vrot.lane.b32.xlu0 %v301, 24
      %v1103 = vpop.permute.xlu0 %1102
      %1104 = vrot.lane.b32.xlu0 %v302, 24
      %v1105 = vpop.permute.xlu0 %1104
      %1106 = vrot.lane.b32.xlu0 %v304, 24
      %v1107 = vpop.permute.xlu0 %1106
      %1108 = vrot.lane.b32.xlu0 %v305, 24
      %v1109 = vpop.permute.xlu0 %1108
      %1110 = vrot.lane.b32.xlu0 %v307, 24
      %v1111 = vpop.permute.xlu0 %1110
      %1112 = vrot.lane.b32.xlu0 %v308, 24
      %v1113 = vpop.permute.xlu0 %1112
      %1114 = vrot.lane.b32.xlu0 %v310, 24
      %v1115 = vpop.permute.xlu0 %1114
      %1116 = vrot.lane.b32.xlu0 %v311, 24
      %v1117 = vpop.permute.xlu0 %1116
      %1118 = vrot.lane.b32.xlu0 %v313, 24
      %v1119 = vpop.permute.xlu0 %1118
      %1120 = vrot.lane.b32.xlu0 %v314, 24
      %v1121 = vpop.permute.xlu0 %1120
      %1122 = vrot.lane.b32.xlu0 %v316, 24
      %v1123 = vpop.permute.xlu0 %1122
      %1124 = vrot.lane.b32.xlu0 %v317, 24
      %v1125 = vpop.permute.xlu0 %1124
      %1126 = vrot.lane.b32.xlu0 %v319, 24
      %v1127 = vpop.permute.xlu0 %1126
      %1128 = vrot.lane.b32.xlu0 %v320, 24
      %v1129 = vpop.permute.xlu0 %1128
      %1130 = vrot.lane.b32.xlu0 %v322, 24
      %v1131 = vpop.permute.xlu0 %1130
      %1132 = vrot.lane.b32.xlu0 %v323, 24
      %v1133 = vpop.permute.xlu0 %1132
      %1134 = vrot.lane.b32.xlu0 %v325, 24
      %v1135 = vpop.permute.xlu0 %1134
      %1136 = vrot.lane.b32.xlu0 %v326, 24
      %v1137 = vpop.permute.xlu0 %1136
      %1138 = vrot.lane.b32.xlu0 %v328, 24
      %v1139 = vpop.permute.xlu0 %1138
      %1140 = vrot.lane.b32.xlu0 %v329, 24
      %v1141 = vpop.permute.xlu0 %1140
      %1142 = vrot.lane.b32.xlu0 %v331, 24
      %v1143 = vpop.permute.xlu0 %1142
      %1144 = vrot.lane.b32.xlu0 %v332, 24
      %v1145 = vpop.permute.xlu0 %1144
      %1178 = vrot.lane.b32.xlu0 %v395, 28
      %v1179 = vpop.permute.xlu0 %1178
      %1180 = vrot.lane.b32.xlu0 %v397, 28
      %v1181 = vpop.permute.xlu0 %1180
      %1182 = vrot.lane.b32.xlu0 %v400, 28
      %v1183 = vpop.permute.xlu0 %1182
      %1184 = vrot.lane.b32.xlu0 %v402, 28
      %v1185 = vpop.permute.xlu0 %1184
      %1186 = vrot.lane.b32.xlu0 %v405, 28
      %v1187 = vpop.permute.xlu0 %1186
      %1188 = vrot.lane.b32.xlu0 %v407, 28
      %v1189 = vpop.permute.xlu0 %1188
      %1190 = vrot.lane.b32.xlu0 %v410, 28
      %v1191 = vpop.permute.xlu0 %1190
      %1192 = vrot.lane.b32.xlu0 %v412, 28
      %v1193 = vpop.permute.xlu0 %1192
      %1194 = vrot.lane.b32.xlu0 %v415, 28
      %v1195 = vpop.permute.xlu0 %1194
      %1196 = vrot.lane.b32.xlu0 %v417, 28
      %v1197 = vpop.permute.xlu0 %1196
      %1198 = vrot.lane.b32.xlu0 %v420, 28
      %v1199 = vpop.permute.xlu0 %1198
      %1200 = vrot.lane.b32.xlu0 %v422, 28
      %v1201 = vpop.permute.xlu0 %1200
      %1202 = vrot.lane.b32.xlu0 %v425, 28
      %v1203 = vpop.permute.xlu0 %1202
      %1204 = vrot.lane.b32.xlu0 %v427, 28
      %v1205 = vpop.permute.xlu0 %1204
      %1206 = vrot.lane.b32.xlu0 %v430, 28
      %v1207 = vpop.permute.xlu0 %1206
      %1208 = vrot.lane.b32.xlu0 %v432, 28
      %v1209 = vpop.permute.xlu0 %1208
      %1210 = vrot.lane.b32.xlu0 %v435, 28
      %v1211 = vpop.permute.xlu0 %1210
      %1212 = vrot.lane.b32.xlu0 %v437, 28
      %v1213 = vpop.permute.xlu0 %1212
      %1214 = vrot.lane.b32.xlu0 %v440, 28
      %v1215 = vpop.permute.xlu0 %1214
      %1216 = vrot.lane.b32.xlu0 %v442, 28
      %v1217 = vpop.permute.xlu0 %1216
      %1218 = vrot.lane.b32.xlu0 %v445, 28
      %v1219 = vpop.permute.xlu0 %1218
      %1220 = vrot.lane.b32.xlu0 %v447, 28
      %v1221 = vpop.permute.xlu0 %1220
      %1222 = vrot.lane.b32.xlu0 %v450, 28
      %v1223 = vpop.permute.xlu0 %1222
      %1224 = vrot.lane.b32.xlu0 %v452, 28
      %v1225 = vpop.permute.xlu0 %1224
      %1226 = vrot.lane.b32.xlu0 %v455, 28
      %v1227 = vpop.permute.xlu0 %1226
      %1228 = vrot.lane.b32.xlu0 %v457, 28
      %v1229 = vpop.permute.xlu0 %1228
      %1230 = vrot.lane.b32.xlu0 %v460, 28
      %v1231 = vpop.permute.xlu0 %1230
      %1232 = vrot.lane.b32.xlu0 %v462, 28
      %v1233 = vpop.permute.xlu0 %1232
      %1234 = vrot.lane.b32.xlu0 %v549, 28
      %v1235 = vpop.permute.xlu0 %1234
      %1236 = vrot.lane.b32.xlu0 %v551, 28
      %v1237 = vpop.permute.xlu0 %1236
      %1238 = vrot.lane.b32.xlu0 %v594, 28
      %v1239 = vpop.permute.xlu0 %1238
      %1240 = vrot.lane.b32.xlu0 %v596, 28
      %v1241 = vpop.permute.xlu0 %1240
      %1274 = vrot.lane.b32.xlu0 %v476, 32
      %v1275 = vpop.permute.xlu0 %1274
      %1276 = vrot.lane.b32.xlu0 %v478, 32
      %v1277 = vpop.permute.xlu0 %1276
      %1278 = vrot.lane.b32.xlu0 %v481, 32
      %v1279 = vpop.permute.xlu0 %1278
      %1280 = vrot.lane.b32.xlu0 %v483, 32
      %v1281 = vpop.permute.xlu0 %1280
      %1282 = vrot.lane.b32.xlu0 %v486, 32
      %v1283 = vpop.permute.xlu0 %1282
      %1284 = vrot.lane.b32.xlu0 %v488, 32
      %v1285 = vpop.permute.xlu0 %1284
      %1286 = vrot.lane.b32.xlu0 %v491, 32
      %v1287 = vpop.permute.xlu0 %1286
      %1288 = vrot.lane.b32.xlu0 %v493, 32
      %v1289 = vpop.permute.xlu0 %1288
      %1290 = vrot.lane.b32.xlu0 %v496, 32
      %v1291 = vpop.permute.xlu0 %1290
      %1292 = vrot.lane.b32.xlu0 %v498, 32
      %v1293 = vpop.permute.xlu0 %1292
      %1294 = vrot.lane.b32.xlu0 %v501, 32
      %v1295 = vpop.permute.xlu0 %1294
      %1296 = vrot.lane.b32.xlu0 %v503, 32
      %v1297 = vpop.permute.xlu0 %1296
      %1298 = vrot.lane.b32.xlu0 %v506, 32
      %v1299 = vpop.permute.xlu0 %1298
      %1300 = vrot.lane.b32.xlu0 %v508, 32
      %v1301 = vpop.permute.xlu0 %1300
      %1302 = vrot.lane.b32.xlu0 %v511, 32
      %v1303 = vpop.permute.xlu0 %1302
      %1304 = vrot.lane.b32.xlu0 %v513, 32
      %v1305 = vpop.permute.xlu0 %1304
      %1306 = vrot.lane.b32.xlu0 %v516, 32
      %v1307 = vpop.permute.xlu0 %1306
      %1308 = vrot.lane.b32.xlu0 %v518, 32
      %v1309 = vpop.permute.xlu0 %1308
      %1310 = vrot.lane.b32.xlu0 %v521, 32
      %v1311 = vpop.permute.xlu0 %1310
      %1312 = vrot.lane.b32.xlu0 %v523, 32
      %v1313 = vpop.permute.xlu0 %1312
      %1314 = vrot.lane.b32.xlu0 %v526, 32
      %v1315 = vpop.permute.xlu0 %1314
      %1316 = vrot.lane.b32.xlu0 %v528, 32
      %v1317 = vpop.permute.xlu0 %1316
      %1318 = vrot.lane.b32.xlu0 %v531, 32
      %v1319 = vpop.permute.xlu0 %1318
      %1320 = vrot.lane.b32.xlu0 %v533, 32
      %v1321 = vpop.permute.xlu0 %1320
      %1322 = vrot.lane.b32.xlu0 %v536, 32
      %v1323 = vpop.permute.xlu0 %1322
      %1324 = vrot.lane.b32.xlu0 %v538, 32
      %v1325 = vpop.permute.xlu0 %1324
      %1326 = vrot.lane.b32.xlu0 %v541, 32
      %v1327 = vpop.permute.xlu0 %1326
      %1328 = vrot.lane.b32.xlu0 %v543, 32
      %v1329 = vpop.permute.xlu0 %1328
      %1330 = vrot.lane.b32.xlu0 %v586, 32
      %v1331 = vpop.permute.xlu0 %1330
      %1332 = vrot.lane.b32.xlu0 %v588, 32
      %v1333 = vpop.permute.xlu0 %1332
      %1334 = vrot.lane.b32.xlu0 %v599, 32
      %v1335 = vpop.permute.xlu0 %1334
      %1336 = vrot.lane.b32.xlu0 %v601, 32
      %v1337 = vpop.permute.xlu0 %1336
      %vm1370 = vcmask 31744
      %v1371 = vsel %vm1370, %v280, %v603
      %v1372 = vsel %vm1370, %v281, %v605
      %v1373 = vsel %vm1370, %v283, %v607
      %v1374 = vsel %vm1370, %v284, %v609
      %v1375 = vsel %vm1370, %v286, %v611
      %v1376 = vsel %vm1370, %v287, %v613
      %v1377 = vsel %vm1370, %v289, %v615
      %v1378 = vsel %vm1370, %v290, %v617
      %v1379 = vsel %vm1370, %v292, %v619
      %v1380 = vsel %vm1370, %v293, %v621
      %v1381 = vsel %vm1370, %v295, %v623
      %v1382 = vsel %vm1370, %v296, %v625
      %v1383 = vsel %vm1370, %v298, %v627
      %v1384 = vsel %vm1370, %v299, %v629
      %v1385 = vsel %vm1370, %v301, %v631
      %v1386 = vsel %vm1370, %v302, %v633
      %v1387 = vsel %vm1370, %v304, %v635
      %v1388 = vsel %vm1370, %v305, %v637
      %v1389 = vsel %vm1370, %v307, %v639
      %v1390 = vsel %vm1370, %v308, %v641
      %v1391 = vsel %vm1370, %v310, %v643
      %v1392 = vsel %vm1370, %v311, %v645
      %v1393 = vsel %vm1370, %v313, %v647
      %v1394 = vsel %vm1370, %v314, %v649
      %v1395 = vsel %vm1370, %v316, %v651
      %v1396 = vsel %vm1370, %v317, %v653
      %v1397 = vsel %vm1370, %v319, %v655
      %v1398 = vsel %vm1370, %v320, %v657
      %v1399 = vsel %vm1370, %v322, %v659
      %v1400 = vsel %vm1370, %v323, %v661
      %v1401 = vsel %vm1370, %v325, %v663
      %v1402 = vsel %vm1370, %v326, %v665
      %vm1403 = vcmask 64512
      %v1404 = vsel %vm1403, %v1371, %v699
      %v1405 = vsel %vm1403, %v1372, %v701
      %v1406 = vsel %vm1403, %v1373, %v703
      %v1407 = vsel %vm1403, %v1374, %v705
      %v1408 = vsel %vm1403, %v1375, %v707
      %v1409 = vsel %vm1403, %v1376, %v709
      %v1410 = vsel %vm1403, %v1377, %v711
      %v1411 = vsel %vm1403, %v1378, %v713
      %v1412 = vsel %vm1403, %v1379, %v715
      %v1413 = vsel %vm1403, %v1380, %v717
      %v1414 = vsel %vm1403, %v1381, %v719
      %v1415 = vsel %vm1403, %v1382, %v721
      %v1416 = vsel %vm1403, %v1383, %v723
      %v1417 = vsel %vm1403, %v1384, %v725
      %v1418 = vsel %vm1403, %v1385, %v727
      %v1419 = vsel %vm1403, %v1386, %v729
      %v1420 = vsel %vm1403, %v1387, %v731
      %v1421 = vsel %vm1403, %v1388, %v733
      %v1422 = vsel %vm1403, %v1389, %v735
      %v1423 = vsel %vm1403, %v1390, %v737
      %v1424 = vsel %vm1403, %v1391, %v739
      %v1425 = vsel %vm1403, %v1392, %v741
      %v1426 = vsel %vm1403, %v1393, %v743
      %v1427 = vsel %vm1403, %v1394, %v745
      %v1428 = vsel %vm1403, %v1395, %v747
      %v1429 = vsel %vm1403, %v1396, %v749
      %v1430 = vsel %vm1403, %v1397, %v751
      %v1431 = vsel %vm1403, %v1398, %v753
      %v1432 = vsel %vm1403, %v1399, %v755
      %v1433 = vsel %vm1403, %v1400, %v757
      %v1434 = vsel %vm1403, %v1401, %v759
      %v1435 = vsel %vm1403, %v1402, %v761
      %vm1436 = vcmask 97280
      %v1437 = vsel %vm1436, %v1404, %v795
      %v1438 = vsel %vm1436, %v1405, %v797
      %v1439 = vsel %vm1436, %v1406, %v799
      %v1440 = vsel %vm1436, %v1407, %v801
      %v1441 = vsel %vm1436, %v1408, %v803
      %v1442 = vsel %vm1436, %v1409, %v805
      %v1443 = vsel %vm1436, %v1410, %v807
      %v1444 = vsel %vm1436, %v1411, %v809
      %v1445 = vsel %vm1436, %v1412, %v811
      %v1446 = vsel %vm1436, %v1413, %v813
      %v1447 = vsel %vm1436, %v1414, %v815
      %v1448 = vsel %vm1436, %v1415, %v817
      %v1449 = vsel %vm1436, %v1416, %v819
      %v1450 = vsel %vm1436, %v1417, %v821
      %v1451 = vsel %vm1436, %v1418, %v823
      %v1452 = vsel %vm1436, %v1419, %v825
      %v1453 = vsel %vm1436, %v1420, %v827
      %v1454 = vsel %vm1436, %v1421, %v829
      %v1455 = vsel %vm1436, %v1422, %v831
      %v1456 = vsel %vm1436, %v1423, %v833
      %v1457 = vsel %vm1436, %v1424, %v835
      %v1458 = vsel %vm1436, %v1425, %v837
      %v1459 = vsel %vm1436, %v1426, %v839
      %v1460 = vsel %vm1436, %v1427, %v841
      %v1461 = vsel %vm1436, %v1428, %v843
      %v1462 = vsel %vm1436, %v1429, %v845
      %v1463 = vsel %vm1436, %v1430, %v847
      %v1464 = vsel %vm1436, %v1431, %v849
      %v1465 = vsel %vm1436, %v1432, %v851
      %v1466 = vsel %vm1436, %v1433, %v853
      %v1467 = vsel %vm1436, %v1434, %v855
      %v1468 = vsel %vm1436, %v1435, %v857
      %vm1469 = vcmask 130048
      %v1470 = vsel %vm1469, %v1437, %v891
      %v1471 = vsel %vm1469, %v1438, %v893
      %v1472 = vsel %vm1469, %v1439, %v895
      %v1473 = vsel %vm1469, %v1440, %v897
      %v1474 = vsel %vm1469, %v1441, %v899
      %v1475 = vsel %vm1469, %v1442, %v901
      %v1476 = vsel %vm1469, %v1443, %v903
      %v1477 = vsel %vm1469, %v1444, %v905
      %v1478 = vsel %vm1469, %v1445, %v907
      %v1479 = vsel %vm1469, %v1446, %v909
      %v1480 = vsel %vm1469, %v1447, %v911
      %v1481 = vsel %vm1469, %v1448, %v913
      %v1482 = vsel %vm1469, %v1449, %v915
      %v1483 = vsel %vm1469, %v1450, %v917
      %v1484 = vsel %vm1469, %v1451, %v919
      %v1485 = vsel %vm1469, %v1452, %v921
      %v1486 = vsel %vm1469, %v1453, %v923
      %v1487 = vsel %vm1469, %v1454, %v925
      %v1488 = vsel %vm1469, %v1455, %v927
      %v1489 = vsel %vm1469, %v1456, %v929
      %v1490 = vsel %vm1469, %v1457, %v931
      %v1491 = vsel %vm1469, %v1458, %v933
      %v1492 = vsel %vm1469, %v1459, %v935
      %v1493 = vsel %vm1469, %v1460, %v937
      %v1494 = vsel %vm1469, %v1461, %v939
      %v1495 = vsel %vm1469, %v1462, %v941
      %v1496 = vsel %vm1469, %v1463, %v943
      %v1497 = vsel %vm1469, %v1464, %v945
      %v1498 = vsel %vm1469, %v1465, %v947
      %v1499 = vsel %vm1469, %v1466, %v949
      %v1500 = vsel %vm1469, %v1467, %v951
      %v1501 = vsel %vm1469, %v1468, %v953
      %vm1502 = vcmask 162816
      %v1503 = vsel %vm1502, %v1470, %v987
      %v1504 = vsel %vm1502, %v1471, %v989
      %v1505 = vsel %vm1502, %v1472, %v991
      %v1506 = vsel %vm1502, %v1473, %v993
      %v1507 = vsel %vm1502, %v1474, %v995
      %v1508 = vsel %vm1502, %v1475, %v997
      %v1509 = vsel %vm1502, %v1476, %v999
      %v1510 = vsel %vm1502, %v1477, %v1001
      %v1511 = vsel %vm1502, %v1478, %v1003
      %v1512 = vsel %vm1502, %v1479, %v1005
      %v1513 = vsel %vm1502, %v1480, %v1007
      %v1514 = vsel %vm1502, %v1481, %v1009
      %v1515 = vsel %vm1502, %v1482, %v1011
      %v1516 = vsel %vm1502, %v1483, %v1013
      %v1517 = vsel %vm1502, %v1484, %v1015
      %v1518 = vsel %vm1502, %v1485, %v1017
      %v1519 = vsel %vm1502, %v1486, %v1019
      %v1520 = vsel %vm1502, %v1487, %v1021
      %v1521 = vsel %vm1502, %v1488, %v1023
      %v1522 = vsel %vm1502, %v1489, %v1025
      %v1523 = vsel %vm1502, %v1490, %v1027
      %v1524 = vsel %vm1502, %v1491, %v1029
      %v1525 = vsel %vm1502, %v1492, %v1031
      %v1526 = vsel %vm1502, %v1493, %v1033
      %v1527 = vsel %vm1502, %v1494, %v1035
      %v1528 = vsel %vm1502, %v1495, %v1037
      %v1529 = vsel %vm1502, %v1496, %v1039
      %v1530 = vsel %vm1502, %v1497, %v1041
      %v1531 = vsel %vm1502, %v1498, %v1043
      %v1532 = vsel %vm1502, %v1499, %v1045
      %v1533 = vsel %vm1502, %v1500, %v1047
      %v1534 = vsel %vm1502, %v1501, %v1049
      %vm1535 = vcmask 195584
      %v1536 = vsel %vm1535, %v1503, %v1083
      %v1537 = vsel %vm1535, %v1504, %v1085
      %v1538 = vsel %vm1535, %v1505, %v1087
      %v1539 = vsel %vm1535, %v1506, %v1089
      %v1540 = vsel %vm1535, %v1507, %v1091
      %v1541 = vsel %vm1535, %v1508, %v1093
      %v1542 = vsel %vm1535, %v1509, %v1095
      %v1543 = vsel %vm1535, %v1510, %v1097
      %v1544 = vsel %vm1535, %v1511, %v1099
      %v1545 = vsel %vm1535, %v1512, %v1101
      %v1546 = vsel %vm1535, %v1513, %v1103
      %v1547 = vsel %vm1535, %v1514, %v1105
      %v1548 = vsel %vm1535, %v1515, %v1107
      %v1549 = vsel %vm1535, %v1516, %v1109
      %v1550 = vsel %vm1535, %v1517, %v1111
      %v1551 = vsel %vm1535, %v1518, %v1113
      %v1552 = vsel %vm1535, %v1519, %v1115
      %v1553 = vsel %vm1535, %v1520, %v1117
      %v1554 = vsel %vm1535, %v1521, %v1119
      %v1555 = vsel %vm1535, %v1522, %v1121
      %v1556 = vsel %vm1535, %v1523, %v1123
      %v1557 = vsel %vm1535, %v1524, %v1125
      %v1558 = vsel %vm1535, %v1525, %v1127
      %v1559 = vsel %vm1535, %v1526, %v1129
      %v1560 = vsel %vm1535, %v1527, %v1131
      %v1561 = vsel %vm1535, %v1528, %v1133
      %v1562 = vsel %vm1535, %v1529, %v1135
      %v1563 = vsel %vm1535, %v1530, %v1137
      %v1564 = vsel %vm1535, %v1531, %v1139
      %v1565 = vsel %vm1535, %v1532, %v1141
      %v1566 = vsel %vm1535, %v1533, %v1143
      %v1567 = vsel %vm1535, %v1534, %v1145
      %vm1568 = vcmask 228352
      %v1569 = vsel %vm1568, %v1536, %v1179
      %v1570 = vsel %vm1568, %v1537, %v1181
      %v1571 = vsel %vm1568, %v1538, %v1183
      %v1572 = vsel %vm1568, %v1539, %v1185
      %v1573 = vsel %vm1568, %v1540, %v1187
      %v1574 = vsel %vm1568, %v1541, %v1189
      %v1575 = vsel %vm1568, %v1542, %v1191
      %v1576 = vsel %vm1568, %v1543, %v1193
      %v1577 = vsel %vm1568, %v1544, %v1195
      %v1578 = vsel %vm1568, %v1545, %v1197
      %v1579 = vsel %vm1568, %v1546, %v1199
      %v1580 = vsel %vm1568, %v1547, %v1201
      %v1581 = vsel %vm1568, %v1548, %v1203
      %v1582 = vsel %vm1568, %v1549, %v1205
      %v1583 = vsel %vm1568, %v1550, %v1207
      %v1584 = vsel %vm1568, %v1551, %v1209
      %v1585 = vsel %vm1568, %v1552, %v1211
      %v1586 = vsel %vm1568, %v1553, %v1213
      %v1587 = vsel %vm1568, %v1554, %v1215
      %v1588 = vsel %vm1568, %v1555, %v1217
      %v1589 = vsel %vm1568, %v1556, %v1219
      %v1590 = vsel %vm1568, %v1557, %v1221
      %v1591 = vsel %vm1568, %v1558, %v1223
      %v1592 = vsel %vm1568, %v1559, %v1225
      %v1593 = vsel %vm1568, %v1560, %v1227
      %v1594 = vsel %vm1568, %v1561, %v1229
      %v1595 = vsel %vm1568, %v1562, %v1231
      %v1596 = vsel %vm1568, %v1563, %v1233
      %v1597 = vsel %vm1568, %v1564, %v1235
      %v1598 = vsel %vm1568, %v1565, %v1237
      %v1599 = vsel %vm1568, %v1566, %v1239
      %v1600 = vsel %vm1568, %v1567, %v1241
      %vm1601 = vcmask 261120
      %v1602 = vsel %vm1601, %v1569, %v1275
      %v1603 = vsel %vm1601, %v1570, %v1277
      %v1604 = vsel %vm1601, %v1571, %v1279
      %v1605 = vsel %vm1601, %v1572, %v1281
      %v1606 = vsel %vm1601, %v1573, %v1283
      %v1607 = vsel %vm1601, %v1574, %v1285
      %v1608 = vsel %vm1601, %v1575, %v1287
      %v1609 = vsel %vm1601, %v1576, %v1289
      %v1610 = vsel %vm1601, %v1577, %v1291
      %v1611 = vsel %vm1601, %v1578, %v1293
      %v1612 = vsel %vm1601, %v1579, %v1295
      %v1613 = vsel %vm1601, %v1580, %v1297
      %v1614 = vsel %vm1601, %v1581, %v1299
      %v1615 = vsel %vm1601, %v1582, %v1301
      %v1616 = vsel %vm1601, %v1583, %v1303
      %v1617 = vsel %vm1601, %v1584, %v1305
      %v1618 = vsel %vm1601, %v1585, %v1307
      %v1619 = vsel %vm1601, %v1586, %v1309
      %v1620 = vsel %vm1601, %v1587, %v1311
      %v1621 = vsel %vm1601, %v1588, %v1313
      %v1622 = vsel %vm1601, %v1589, %v1315
      %v1623 = vsel %vm1601, %v1590, %v1317
      %v1624 = vsel %vm1601, %v1591, %v1319
      %v1625 = vsel %vm1601, %v1592, %v1321
      %v1626 = vsel %vm1601, %v1593, %v1323
      %v1627 = vsel %vm1601, %v1594, %v1325
      %v1628 = vsel %vm1601, %v1595, %v1327
      %v1629 = vsel %vm1601, %v1596, %v1329
      %v1630 = vsel %vm1601, %v1597, %v1331
      %v1631 = vsel %vm1601, %v1598, %v1333
      %v1632 = vsel %vm1601, %v1599, %v1335
      %v1633 = vsel %vm1601, %v1600, %v1337
      %v1634 = vpack.c.bf16 %v1603, %v1602
      %v1635 = vpack.c.bf16 %v1605, %v1604
      %v1636 = vpack.c.bf16 %v1607, %v1606
      %v1637 = vpack.c.bf16 %v1609, %v1608
      %v1638 = vpack.c.bf16 %v1611, %v1610
      %v1639 = vpack.c.bf16 %v1613, %v1612
      %v1640 = vpack.c.bf16 %v1615, %v1614
      %v1641 = vpack.c.bf16 %v1617, %v1616
      %v1642 = vpack.c.bf16 %v1619, %v1618
      %v1643 = vpack.c.bf16 %v1621, %v1620
      %v1644 = vpack.c.bf16 %v1623, %v1622
      %v1645 = vpack.c.bf16 %v1625, %v1624
      %v1646 = vpack.c.bf16 %v1627, %v1626
      %v1647 = vpack.c.bf16 %v1629, %v1628
      %v1648 = vpack.c.bf16 %v1631, %v1630
      %v1649 = vpack.c.bf16 %v1633, %v1632
      %v1650 = vld [vmem:[%s1] sm:$0xf]
      %v1651 = vld [vmem:[%s1 + $0x4] sm:$0xf]
      %v1652 = vld [vmem:[%s1 + $0x8] sm:$0xf]
      %v1653 = vld [vmem:[%s1 + $0xc] sm:$0xf]
      %v1654 = vld [vmem:[%s1 + $0x10] sm:$0x3]
      %v1655 = vld [vmem:[%s2] sm:$0x1]
      %v1657 = vlaneseq
      %v1658 = vshrl.u32 %v1657, 7
      %v1659 = vsub.s32 0, %v1658
      %v1660 = vrot.slane %v1655, %v1659
      %v1667 = vunpack.c.l.b16 %v1650
      %v1668 = vunpack.c.l.b16 %v1651
      %v1669 = vunpack.c.l.b16 %v1652
      %v1670 = vunpack.c.l.b16 %v1653
      %v1671 = vunpack.c.l.b16 %v1654
      %v1672 = vpack.c.b16 %v1668, %v1667
      %v1673 = vpack.c.b16 %v1670, %v1669
      %v1674 = vpack.c.b16 %v1671, %v1671
      %vm1677 = vcmask 293888
      %v1679 = vsel %vm1677, %v1634, 0
      %v1682 = vsel %vm1677, %v1635, 0
      %v1685 = vsel %vm1677, %v1636, 0
      %v1688 = vsel %vm1677, %v1637, 0
      %v1691 = vsel %vm1677, %v1638, 0
      %v1694 = vsel %vm1677, %v1639, 0
      %v1697 = vsel %vm1677, %v1640, 0
      %v1700 = vsel %vm1677, %v1641, 0
      %v1703 = vsel %vm1677, %v1642, 0
      %v1706 = vsel %vm1677, %v1643, 0
      %v1709 = vsel %vm1677, %v1644, 0
      %v1712 = vsel %vm1677, %v1645, 0
      %v1715 = vsel %vm1677, %v1646, 0
      %v1718 = vsel %vm1677, %v1647, 0
      %v1721 = vsel %vm1677, %v1648, 0
      %v1724 = vsel %vm1677, %v1649, 0
      %vm1726 = vcmask 1041408
      %v1728 = vsel %vm1726, %v1674, 0
      %1730 = vmatprep.subr.bf16.mxu0 0
      %1731 = vmatpush1.bf16.msra.mxu0 0
      %1732 = vmatprep.subr.bf16.mxu0 0
      %1733 = vmatpush1.bf16.msra.mxu0 0
      %1734 = vmatprep.subr.bf16.mxu0 0
      %1735 = vmatpush1.bf16.msra.mxu0 0
      %1736 = vmatprep.subr.bf16.mxu0 0
      %1737 = vmatpush1.bf16.msra.mxu0 0
      %1738 = vmatprep.subr.bf16.mxu0 0
      %1739 = vmatpush1.bf16.msra.mxu0 0
      %1740 = vmatprep.subr.bf16.mxu0 0
      %1741 = vmatpush1.bf16.msra.mxu0 %v1728
      %1742 = vmatprep.subr.bf16.mxu0 0
      %1743 = vmatpush1.bf16.msra.mxu0 %v1673
      %1744 = vmatprep.subr.bf16.mxu0 0
      %1745 = vmatpush1.bf16.msra.mxu0 %v1672
      %1746 = vmatprep.subr.bf16.mxu0 0
      %1747 = vmatpush2.bf16.msra.mxu0 0
      %1748 = vmatprep.subr.bf16.mxu0 0
      %1749 = vmatpush2.bf16.msra.mxu0 0
      %1750 = vmatprep.subr.bf16.mxu0 0
      %1751 = vmatpush2.bf16.msra.mxu0 0
      %1752 = vmatprep.subr.bf16.mxu0 0
      %1753 = vmatpush2.bf16.msra.mxu0 0
      %1754 = vmatprep.subr.bf16.mxu0 0
      %1755 = vmatpush2.bf16.msra.mxu0 0
      %1756 = vmatprep.subr.bf16.mxu0 0
      %1757 = vmatpush2.bf16.msra.mxu0 0
      %1758 = vmatprep.subr.bf16.mxu0 0
      %1759 = vmatpush2.bf16.msra.mxu0 0
      %1760 = vmatprep.subr.bf16.mxu0 0
      %1761 = vmatpush2.bf16.msra.mxu0 0
      %1762 = vmatprep.mubr.bf16.mxu0 0
      %1763 = vmatmul.mubr.bf16.gmra.mxu0 %v1679
      %v1764 = vpop.f32.mrf.mxu0
      %v1765 = vadd.f32 %v1660, %v1764
      %v1766 = vpop.f32.mrf.mxu0
      %v1767 = vpop.f32.mrf.mxu0
      %v1768 = vadd.f32 %v1660, %v1767
      %v1769 = vpop.f32.mrf.mxu0
      %1770 = vmatprep.mubr.bf16.mxu0 0
      %1771 = vmatmul.mubr.bf16.gmra.mxu0 %v1682
      %v1772 = vpop.f32.mrf.mxu0
      %v1773 = vadd.f32 %v1660, %v1772
      %v1774 = vpop.f32.mrf.mxu0
      %v1775 = vpop.f32.mrf.mxu0
      %v1776 = vadd.f32 %v1660, %v1775
      %v1777 = vpop.f32.mrf.mxu0
      %1778 = vmatprep.mubr.bf16.mxu0 0
      %1779 = vmatmul.mubr.bf16.gmra.mxu0 %v1685
      %v1780 = vpop.f32.mrf.mxu0
      %v1781 = vadd.f32 %v1660, %v1780
      %v1782 = vpop.f32.mrf.mxu0
      %v1783 = vpop.f32.mrf.mxu0
      %v1784 = vadd.f32 %v1660, %v1783
      %v1785 = vpop.f32.mrf.mxu0
      %1786 = vmatprep.mubr.bf16.mxu0 0
      %1787 = vmatmul.mubr.bf16.gmra.mxu0 %v1688
      %v1788 = vpop.f32.mrf.mxu0
      %v1789 = vadd.f32 %v1660, %v1788
      %v1790 = vpop.f32.mrf.mxu0
      %v1791 = vpop.f32.mrf.mxu0
      %v1792 = vadd.f32 %v1660, %v1791
      %v1793 = vpop.f32.mrf.mxu0
      %1794 = vmatprep.mubr.bf16.mxu0 0
      %1795 = vmatmul.mubr.bf16.gmra.mxu0 %v1691
      %v1796 = vpop.f32.mrf.mxu0
      %v1797 = vadd.f32 %v1660, %v1796
      %v1798 = vpop.f32.mrf.mxu0
      %v1799 = vpop.f32.mrf.mxu0
      %v1800 = vadd.f32 %v1660, %v1799
      %v1801 = vpop.f32.mrf.mxu0
      %1802 = vmatprep.mubr.bf16.mxu0 0
      %1803 = vmatmul.mubr.bf16.gmra.mxu0 %v1694
      %v1804 = vpop.f32.mrf.mxu0
      %v1805 = vadd.f32 %v1660, %v1804
      %v1806 = vpop.f32.mrf.mxu0
      %v1807 = vpop.f32.mrf.mxu0
      %v1808 = vadd.f32 %v1660, %v1807
      %v1809 = vpop.f32.mrf.mxu0
      %1810 = vmatprep.mubr.bf16.mxu0 0
      %1811 = vmatmul.mubr.bf16.gmra.mxu0 %v1697
      %v1812 = vpop.f32.mrf.mxu0
      %v1813 = vadd.f32 %v1660, %v1812
      %v1814 = vpop.f32.mrf.mxu0
      %v1815 = vpop.f32.mrf.mxu0
      %v1816 = vadd.f32 %v1660, %v1815
      %v1817 = vpop.f32.mrf.mxu0
      %1818 = vmatprep.mubr.bf16.mxu0 0
      %1819 = vmatmul.mubr.bf16.gmra.mxu0 %v1700
      %v1820 = vpop.f32.mrf.mxu0
      %v1821 = vadd.f32 %v1660, %v1820
      %v1822 = vpop.f32.mrf.mxu0
      %v1823 = vpop.f32.mrf.mxu0
      %v1824 = vadd.f32 %v1660, %v1823
      %v1825 = vpop.f32.mrf.mxu0
      %1826 = vmatprep.mubr.bf16.mxu0 0
      %1827 = vmatmul.mubr.bf16.gmra.mxu0 %v1703
      %v1828 = vpop.f32.mrf.mxu0
      %v1829 = vadd.f32 %v1660, %v1828
      %v1830 = vpop.f32.mrf.mxu0
      %v1831 = vpop.f32.mrf.mxu0
      %v1832 = vadd.f32 %v1660, %v1831
      %v1833 = vpop.f32.mrf.mxu0
      %1834 = vmatprep.mubr.bf16.mxu0 0
      %1835 = vmatmul.mubr.bf16.gmra.mxu0 %v1706
      %v1836 = vpop.f32.mrf.mxu0
      %v1837 = vadd.f32 %v1660, %v1836
      %v1838 = vpop.f32.mrf.mxu0
      %v1839 = vpop.f32.mrf.mxu0
      %v1840 = vadd.f32 %v1660, %v1839
      %v1841 = vpop.f32.mrf.mxu0
      %1842 = vmatprep.mubr.bf16.mxu0 0
      %1843 = vmatmul.mubr.bf16.gmra.mxu0 %v1709
      %v1844 = vpop.f32.mrf.mxu0
      %v1845 = vadd.f32 %v1660, %v1844
      %v1846 = vpop.f32.mrf.mxu0
      %v1847 = vpop.f32.mrf.mxu0
      %v1848 = vadd.f32 %v1660, %v1847
      %v1849 = vpop.f32.mrf.mxu0
      %1850 = vmatprep.mubr.bf16.mxu0 0
      %1851 = vmatmul.mubr.bf16.gmra.mxu0 %v1712
      %v1852 = vpop.f32.mrf.mxu0
      %v1853 = vadd.f32 %v1660, %v1852
      %v1854 = vpop.f32.mrf.mxu0
      %v1855 = vpop.f32.mrf.mxu0
      %v1856 = vadd.f32 %v1660, %v1855
      %v1857 = vpop.f32.mrf.mxu0
      %1858 = vmatprep.mubr.bf16.mxu0 0
      %1859 = vmatmul.mubr.bf16.gmra.mxu0 %v1715
      %v1860 = vpop.f32.mrf.mxu0
      %v1861 = vadd.f32 %v1660, %v1860
      %v1862 = vpop.f32.mrf.mxu0
      %v1863 = vpop.f32.mrf.mxu0
      %v1864 = vadd.f32 %v1660, %v1863
      %v1865 = vpop.f32.mrf.mxu0
      %1866 = vmatprep.mubr.bf16.mxu0 0
      %1867 = vmatmul.mubr.bf16.gmra.mxu0 %v1718
      %v1868 = vpop.f32.mrf.mxu0
      %v1869 = vadd.f32 %v1660, %v1868
      %v1870 = vpop.f32.mrf.mxu0
      %v1871 = vpop.f32.mrf.mxu0
      %v1872 = vadd.f32 %v1660, %v1871
      %v1873 = vpop.f32.mrf.mxu0
      %1874 = vmatprep.mubr.bf16.mxu0 0
      %1875 = vmatmul.mubr.bf16.gmra.mxu0 %v1721
      %v1876 = vpop.f32.mrf.mxu0
      %v1877 = vadd.f32 %v1660, %v1876
      %v1878 = vpop.f32.mrf.mxu0
      %v1879 = vpop.f32.mrf.mxu0
      %v1880 = vadd.f32 %v1660, %v1879
      %v1881 = vpop.f32.mrf.mxu0
      %1882 = vmatprep.mubr.bf16.mxu0 0
      %1883 = vmatmul.mubr.bf16.gmra.mxu0 %v1724
      %v1884 = vpop.f32.mrf.mxu0
      %v1885 = vadd.f32 %v1660, %v1884
      %v1886 = vpop.f32.mrf.mxu0
      %v1887 = vpop.f32.mrf.mxu0
      %v1888 = vadd.f32 %v1660, %v1887
      %v1889 = vpop.f32.mrf.mxu0
      %1890 = vdwg.mxu0
      %v1891 = vmax.f32 %v1765, 0.0
      %v1892 = vmax.f32 %v1768, 0.0
      %v1893 = vmax.f32 %v1773, 0.0
      %v1894 = vmax.f32 %v1776, 0.0
      %v1895 = vmax.f32 %v1781, 0.0
      %v1896 = vmax.f32 %v1784, 0.0
      %v1897 = vmax.f32 %v1789, 0.0
      %v1898 = vmax.f32 %v1792, 0.0
      %v1899 = vmax.f32 %v1797, 0.0
      %v1900 = vmax.f32 %v1800, 0.0
      %v1901 = vmax.f32 %v1805, 0.0
      %v1902 = vmax.f32 %v1808, 0.0
      %v1903 = vmax.f32 %v1813, 0.0
      %v1904 = vmax.f32 %v1816, 0.0
      %v1905 = vmax.f32 %v1821, 0.0
      %v1906 = vmax.f32 %v1824, 0.0
      %v1907 = vmax.f32 %v1829, 0.0
      %v1908 = vmax.f32 %v1832, 0.0
      %v1909 = vmax.f32 %v1837, 0.0
      %v1910 = vmax.f32 %v1840, 0.0
      %v1911 = vmax.f32 %v1845, 0.0
      %v1912 = vmax.f32 %v1848, 0.0
      %v1913 = vmax.f32 %v1853, 0.0
      %v1914 = vmax.f32 %v1856, 0.0
      %v1915 = vmax.f32 %v1861, 0.0
      %v1916 = vmax.f32 %v1864, 0.0
      %v1917 = vmax.f32 %v1869, 0.0
      %v1918 = vmax.f32 %v1872, 0.0
      %v1919 = vmax.f32 %v1877, 0.0
      %v1920 = vmax.f32 %v1880, 0.0
      %v1921 = vmax.f32 %v1885, 0.0
      %v1922 = vmax.f32 %v1888, 0.0
      %1923 = vst.msk [vmem:[#allocation2] sm:$0xff] %vm1403, 0.0
      %1924 = vst.msk [vmem:[#allocation2 + $0x8] sm:$0xff] %vm1403, 0.0
      %vm1925 = vcmask 58368
      %1926 = vst.msk [vmem:[#allocation2 + $0x10] sm:$0x3] %vm1925, 0.0
      %s1927 = scalar_lea.vmem [#allocation2], 408
      %1928 = vst.msk [vmem:[%s1927] sm:$0xff] %vm1403, 0.0
      %1929 = vst.msk [vmem:[%s1927 + $0x8] sm:$0xff] %vm1403, 0.0
      %1930 = vst.msk [vmem:[%s1927 + $0x10] sm:$0x3] %vm1925, 0.0
      %s1931 = scalar_lea.vmem [#allocation2], 24
      %vm1932 = vcmask 57344
      %1933 = vst.msk [vmem:[%s1931] sm:$0x1] %vm1932, 0.0
      %1934 = vst.msk [vmem:[%s1931 + $0x18] sm:$0x1] %vm1932, 0.0
      %1935 = vst.msk [vmem:[%s1931 + $0x30] sm:$0x1] %vm1932, 0.0
      %1936 = vst.msk [vmem:[%s1931 + $0x48] sm:$0x1] %vm1932, 0.0
      %1937 = vst.msk [vmem:[%s1931 + $0x60] sm:$0x1] %vm1932, 0.0
      %1938 = vst.msk [vmem:[%s1931 + $0x78] sm:$0x1] %vm1932, 0.0
      %1939 = vst.msk [vmem:[%s1931 + $0x90] sm:$0x1] %vm1932, 0.0
      %1940 = vst.msk [vmem:[%s1931 + $0xa8] sm:$0x1] %vm1932, 0.0
      %1941 = vst.msk [vmem:[%s1931 + $0xc0] sm:$0x1] %vm1932, 0.0
      %1942 = vst.msk [vmem:[%s1931 + $0xd8] sm:$0x1] %vm1932, 0.0
      %1943 = vst.msk [vmem:[%s1931 + $0xf0] sm:$0x1] %vm1932, 0.0
      %1944 = vst.msk [vmem:[%s1931 + $0x108] sm:$0x1] %vm1932, 0.0
      %1945 = vst.msk [vmem:[%s1931 + $0x120] sm:$0x1] %vm1932, 0.0
      %1946 = vst.msk [vmem:[%s1931 + $0x138] sm:$0x1] %vm1932, 0.0
      %1947 = vst.msk [vmem:[%s1931 + $0x150] sm:$0x1] %vm1932, 0.0
      %1948 = vst.msk [vmem:[%s1931 + $0x168] sm:$0x1] %vm1932, 0.0
      %1949 = vst.msk [vmem:[%s1931 + $0x11] sm:$0x1] %vm1932, 0.0
      %1950 = vst.msk [vmem:[%s1931 + $0x29] sm:$0x1] %vm1932, 0.0
      %1951 = vst.msk [vmem:[%s1931 + $0x41] sm:$0x1] %vm1932, 0.0
      %1952 = vst.msk [vmem:[%s1931 + $0x59] sm:$0x1] %vm1932, 0.0
      %1953 = vst.msk [vmem:[%s1931 + $0x71] sm:$0x1] %vm1932, 0.0
      %1954 = vst.msk [vmem:[%s1931 + $0x89] sm:$0x1] %vm1932, 0.0
      %1955 = vst.msk [vmem:[%s1931 + $0xa1] sm:$0x1] %vm1932, 0.0
      %1956 = vst.msk [vmem:[%s1931 + $0xb9] sm:$0x1] %vm1932, 0.0
      %1957 = vst.msk [vmem:[%s1931 + $0xd1] sm:$0x1] %vm1932, 0.0
      %1958 = vst.msk [vmem:[%s1931 + $0xe9] sm:$0x1] %vm1932, 0.0
      %1959 = vst.msk [vmem:[%s1931 + $0x101] sm:$0x1] %vm1932, 0.0
      %1960 = vst.msk [vmem:[%s1931 + $0x119] sm:$0x1] %vm1932, 0.0
      %1961 = vst.msk [vmem:[%s1931 + $0x131] sm:$0x1] %vm1932, 0.0
      %1962 = vst.msk [vmem:[%s1931 + $0x149] sm:$0x1] %vm1932, 0.0
      %1963 = vst.msk [vmem:[%s1931 + $0x161] sm:$0x1] %vm1932, 0.0
      %1964 = vst.msk [vmem:[%s1931 + $0x179] sm:$0x1] %vm1932, 0.0
      %1965 = vst.msk [vmem:[%s1931 + $0x1] sm:$0xff] %vm1403, %v1891
      %1966 = vst.msk [vmem:[%s1931 + $0x9] sm:$0xff] %vm1403, %v1892
      %1967 = vst.msk [vmem:[%s1931 + $0x19] sm:$0xff] %vm1403, %v1893
      %1968 = vst.msk [vmem:[%s1931 + $0x21] sm:$0xff] %vm1403, %v1894
      %1969 = vst.msk [vmem:[%s1931 + $0x31] sm:$0xff] %vm1403, %v1895
      %1970 = vst.msk [vmem:[%s1931 + $0x39] sm:$0xff] %vm1403, %v1896
      %1971 = vst.msk [vmem:[%s1931 + $0x49] sm:$0xff] %vm1403, %v1897
      %1972 = vst.msk [vmem:[%s1931 + $0x51] sm:$0xff] %vm1403, %v1898
      %1973 = vst.msk [vmem:[%s1931 + $0x61] sm:$0xff] %vm1403, %v1899
      %1974 = vst.msk [vmem:[%s1931 + $0x69] sm:$0xff] %vm1403, %v1900
      %1975 = vst.msk [vmem:[%s1931 + $0x79] sm:$0xff] %vm1403, %v1901
      %1976 = vst.msk [vmem:[%s1931 + $0x81] sm:$0xff] %vm1403, %v1902
      %1977 = vst.msk [vmem:[%s1931 + $0x91] sm:$0xff] %vm1403, %v1903
      %1978 = vst.msk [vmem:[%s1931 + $0x99] sm:$0xff] %vm1403, %v1904
      %1979 = vst.msk [vmem:[%s1931 + $0xa9] sm:$0xff] %vm1403, %v1905
      %1980 = vst.msk [vmem:[%s1931 + $0xb1] sm:$0xff] %vm1403, %v1906
      %1981 = vst.msk [vmem:[%s1931 + $0xc1] sm:$0xff] %vm1403, %v1907
      %1982 = vst.msk [vmem:[%s1931 + $0xc9] sm:$0xff] %vm1403, %v1908
      %1983 = vst.msk [vmem:[%s1931 + $0xd9] sm:$0xff] %vm1403, %v1909
      %1984 = vst.msk [vmem:[%s1931 + $0xe1] sm:$0xff] %vm1403, %v1910
      %1985 = vst.msk [vmem:[%s1931 + $0xf1] sm:$0xff] %vm1403, %v1911
      %1986 = vst.msk [vmem:[%s1931 + $0xf9] sm:$0xff] %vm1403, %v1912
      %1987 = vst.msk [vmem:[%s1931 + $0x109] sm:$0xff] %vm1403, %v1913
      %1988 = vst.msk [vmem:[%s1931 + $0x111] sm:$0xff] %vm1403, %v1914
      %1989 = vst.msk [vmem:[%s1931 + $0x121] sm:$0xff] %vm1403, %v1915
      %1990 = vst.msk [vmem:[%s1931 + $0x129] sm:$0xff] %vm1403, %v1916
      %1991 = vst.msk [vmem:[%s1931 + $0x139] sm:$0xff] %vm1403, %v1917
      %1992 = vst.msk [vmem:[%s1931 + $0x141] sm:$0xff] %vm1403, %v1918
      %1993 = vst.msk [vmem:[%s1931 + $0x151] sm:$0xff] %vm1403, %v1919
      %1994 = vst.msk [vmem:[%s1931 + $0x159] sm:$0xff] %vm1403, %v1920
      %1995 = vst.msk [vmem:[%s1931 + $0x169] sm:$0xff] %vm1403, %v1921
      %1996 = vst.msk [vmem:[%s1931 + $0x171] sm:$0xff] %vm1403, %v1922
      %v1997 = vld [vmem:[#allocation2] sm:$0xff]
      %v1998 = vld [vmem:[#allocation2 + $0x8] sm:$0xff]
      %v1999 = vld [vmem:[#allocation2 + $0x10] sm:$0x3]
      %v2000 = vld [vmem:[#allocation2 + $0x18] sm:$0xff]
      %v2001 = vld [vmem:[#allocation2 + $0x20] sm:$0xff]
      %v2002 = vld [vmem:[#allocation2 + $0x28] sm:$0x3]
      %v2003 = vld [vmem:[#allocation2 + $0x30] sm:$0xff]
      %v2004 = vld [vmem:[#allocation2 + $0x38] sm:$0xff]
      %v2005 = vld [vmem:[#allocation2 + $0x40] sm:$0x3]
      %v2006 = vld [vmem:[#allocation2 + $0x48] sm:$0xff]
      %v2007 = vld [vmem:[#allocation2 + $0x50] sm:$0xff]
      %v2008 = vld [vmem:[#allocation2 + $0x58] sm:$0x3]
      %v2009 = vld [vmem:[#allocation2 + $0x60] sm:$0xff]
      %v2010 = vld [vmem:[#allocation2 + $0x68] sm:$0xff]
      %v2011 = vld [vmem:[#allocation2 + $0x70] sm:$0x3]
      %v2012 = vld [vmem:[#allocation2 + $0x78] sm:$0xff]
      %v2013 = vld [vmem:[#allocation2 + $0x80] sm:$0xff]
      %v2014 = vld [vmem:[#allocation2 + $0x88] sm:$0x3]
      %v2015 = vld [vmem:[#allocation2 + $0x90] sm:$0xff]
      %v2016 = vld [vmem:[#allocation2 + $0x98] sm:$0xff]
      %v2017 = vld [vmem:[#allocation2 + $0xa0] sm:$0x3]
      %v2018 = vld [vmem:[#allocation2 + $0xa8] sm:$0xff]
      %v2019 = vld [vmem:[#allocation2 + $0xb0] sm:$0xff]
      %v2020 = vld [vmem:[#allocation2 + $0xb8] sm:$0x3]
      %v2021 = vld [vmem:[#allocation2 + $0xc0] sm:$0xff]
      %v2022 = vld [vmem:[#allocation2 + $0xc8] sm:$0xff]
      %v2023 = vld [vmem:[#allocation2 + $0xd0] sm:$0x3]
      %v2024 = vld [vmem:[#allocation2 + $0xd8] sm:$0xff]
      %v2025 = vld [vmem:[#allocation2 + $0xe0] sm:$0xff]
      %v2026 = vld [vmem:[#allocation2 + $0xe8] sm:$0x3]
      %v2027 = vld [vmem:[#allocation2 + $0xf0] sm:$0xff]
      %v2028 = vld [vmem:[#allocation2 + $0xf8] sm:$0xff]
      %v2029 = vld [vmem:[#allocation2 + $0x100] sm:$0x3]
      %v2030 = vld [vmem:[#allocation2 + $0x108] sm:$0xff]
      %v2031 = vld [vmem:[#allocation2 + $0x110] sm:$0xff]
      %v2032 = vld [vmem:[#allocation2 + $0x118] sm:$0x3]
      %v2033 = vld [vmem:[#allocation2 + $0x120] sm:$0xff]
      %v2034 = vld [vmem:[#allocation2 + $0x128] sm:$0xff]
      %v2035 = vld [vmem:[#allocation2 + $0x130] sm:$0x3]
      %v2036 = vld [vmem:[#allocation2 + $0x138] sm:$0xff]
      %v2037 = vld [vmem:[#allocation2 + $0x140] sm:$0xff]
      %v2038 = vld [vmem:[#allocation2 + $0x148] sm:$0x3]
      %v2039 = vld [vmem:[#allocation2 + $0x150] sm:$0xff]
      %v2040 = vld [vmem:[#allocation2 + $0x158] sm:$0xff]
      %v2041 = vld [vmem:[#allocation2 + $0x160] sm:$0x3]
      %v2042 = vld [vmem:[#allocation2 + $0x168] sm:$0xff]
      %v2043 = vld [vmem:[#allocation2 + $0x170] sm:$0xff]
      %v2044 = vld [vmem:[#allocation2 + $0x178] sm:$0x3]
      %v2045 = vld [vmem:[#allocation2 + $0x180] sm:$0xff]
      %v2046 = vld [vmem:[#allocation2 + $0x188] sm:$0xff]
      %v2047 = vld [vmem:[#allocation2 + $0x190] sm:$0x3]
      %v2048 = vld [vmem:[#allocation2 + $0x198] sm:$0xff]
      %v2049 = vld [vmem:[#allocation2 + $0x1a0] sm:$0xff]
      %v2050 = vld [vmem:[#allocation2 + $0x1a8] sm:$0x3]
      %v2099 = vrot.slane %v1997, 1
      %v2100 = vrot.slane %v1998, 1
      %v2101 = vsel %vm382, %v2099, %v2100
      %v2102 = vrot.slane %v1999, 1
      %v2103 = vsel %vm382, %v2100, %v2102
      %v2104 = vrot.slane %v2000, 1
      %v2105 = vrot.slane %v2001, 1
      %v2106 = vsel %vm382, %v2104, %v2105
      %v2107 = vrot.slane %v2002, 1
      %v2108 = vsel %vm382, %v2105, %v2107
      %v2109 = vrot.slane %v2003, 1
      %v2110 = vrot.slane %v2004, 1
      %v2111 = vsel %vm382, %v2109, %v2110
      %v2112 = vrot.slane %v2005, 1
      %v2113 = vsel %vm382, %v2110, %v2112
      %v2114 = vrot.slane %v2006, 1
      %v2115 = vrot.slane %v2007, 1
      %v2116 = vsel %vm382, %v2114, %v2115
      %v2117 = vrot.slane %v2008, 1
      %v2118 = vsel %vm382, %v2115, %v2117
      %v2119 = vrot.slane %v2009, 1
      %v2120 = vrot.slane %v2010, 1
      %v2121 = vsel %vm382, %v2119, %v2120
      %v2122 = vrot.slane %v2011, 1
      %v2123 = vsel %vm382, %v2120, %v2122
      %v2124 = vrot.slane %v2012, 1
      %v2125 = vrot.slane %v2013, 1
      %v2126 = vsel %vm382, %v2124, %v2125
      %v2127 = vrot.slane %v2014, 1
      %v2128 = vsel %vm382, %v2125, %v2127
      %v2129 = vrot.slane %v2015, 1
      %v2130 = vrot.slane %v2016, 1
      %v2131 = vsel %vm382, %v2129, %v2130
      %v2132 = vrot.slane %v2017, 1
      %v2133 = vsel %vm382, %v2130, %v2132
      %v2134 = vrot.slane %v2018, 1
      %v2135 = vrot.slane %v2019, 1
      %v2136 = vsel %vm382, %v2134, %v2135
      %v2137 = vrot.slane %v2020, 1
      %v2138 = vsel %vm382, %v2135, %v2137
      %v2139 = vrot.slane %v2021, 1
      %v2140 = vrot.slane %v2022, 1
      %v2141 = vsel %vm382, %v2139, %v2140
      %v2142 = vrot.slane %v2023, 1
      %v2143 = vsel %vm382, %v2140, %v2142
      %v2144 = vrot.slane %v2024, 1
      %v2145 = vrot.slane %v2025, 1
      %v2146 = vsel %vm382, %v2144, %v2145
      %v2147 = vrot.slane %v2026, 1
      %v2148 = vsel %vm382, %v2145, %v2147
      %v2149 = vrot.slane %v2027, 1
      %v2150 = vrot.slane %v2028, 1
      %v2151 = vsel %vm382, %v2149, %v2150
      %v2152 = vrot.slane %v2029, 1
      %v2153 = vsel %vm382, %v2150, %v2152
      %v2154 = vrot.slane %v2030, 1
      %v2155 = vrot.slane %v2031, 1
      %v2156 = vsel %vm382, %v2154, %v2155
      %v2157 = vrot.slane %v2032, 1
      %v2158 = vsel %vm382, %v2155, %v2157
      %v2159 = vrot.slane %v2033, 1
      %v2160 = vrot.slane %v2034, 1
      %v2161 = vsel %vm382, %v2159, %v2160
      %v2162 = vrot.slane %v2035, 1
      %v2163 = vsel %vm382, %v2160, %v2162
      %v2164 = vrot.slane %v2036, 1
      %v2165 = vrot.slane %v2037, 1
      %v2166 = vsel %vm382, %v2164, %v2165
      %v2167 = vrot.slane %v2038, 1
      %v2168 = vsel %vm382, %v2165, %v2167
      %v2169 = vrot.slane %v2039, 1
      %v2170 = vrot.slane %v2040, 1
      %v2171 = vsel %vm382, %v2169, %v2170
      %v2172 = vrot.slane %v2041, 1
      %v2173 = vsel %vm382, %v2170, %v2172
      %v2174 = vrot.slane %v2042, 1
      %v2175 = vrot.slane %v2043, 1
      %v2176 = vsel %vm382, %v2174, %v2175
      %v2177 = vrot.slane %v2044, 1
      %v2178 = vsel %vm382, %v2175, %v2177
      %v2179 = vrot.slane %v1997, 2
      %v2180 = vrot.slane %v1998, 2
      %v2181 = vsel %vm463, %v2179, %v2180
      %v2182 = vrot.slane %v1999, 2
      %v2183 = vsel %vm463, %v2180, %v2182
      %v2184 = vrot.slane %v2000, 2
      %v2185 = vrot.slane %v2001, 2
      %v2186 = vsel %vm463, %v2184, %v2185
      %v2187 = vrot.slane %v2002, 2
      %v2188 = vsel %vm463, %v2185, %v2187
      %v2189 = vrot.slane %v2003, 2
      %v2190 = vrot.slane %v2004, 2
      %v2191 = vsel %vm463, %v2189, %v2190
      %v2192 = vrot.slane %v2005, 2
      %v2193 = vsel %vm463, %v2190, %v2192
      %v2194 = vrot.slane %v2006, 2
      %v2195 = vrot.slane %v2007, 2
      %v2196 = vsel %vm463, %v2194, %v2195
      %v2197 = vrot.slane %v2008, 2
      %v2198 = vsel %vm463, %v2195, %v2197
      %v2199 = vrot.slane %v2009, 2
      %v2200 = vrot.slane %v2010, 2
      %v2201 = vsel %vm463, %v2199, %v2200
      %v2202 = vrot.slane %v2011, 2
      %v2203 = vsel %vm463, %v2200, %v2202
      %v2204 = vrot.slane %v2012, 2
      %v2205 = vrot.slane %v2013, 2
      %v2206 = vsel %vm463, %v2204, %v2205
      %v2207 = vrot.slane %v2014, 2
      %v2208 = vsel %vm463, %v2205, %v2207
      %v2209 = vrot.slane %v2015, 2
      %v2210 = vrot.slane %v2016, 2
      %v2211 = vsel %vm463, %v2209, %v2210
      %v2212 = vrot.slane %v2017, 2
      %v2213 = vsel %vm463, %v2210, %v2212
      %v2214 = vrot.slane %v2018, 2
      %v2215 = vrot.slane %v2019, 2
      %v2216 = vsel %vm463, %v2214, %v2215
      %v2217 = vrot.slane %v2020, 2
      %v2218 = vsel %vm463, %v2215, %v2217
      %v2219 = vrot.slane %v2021, 2
      %v2220 = vrot.slane %v2022, 2
      %v2221 = vsel %vm463, %v2219, %v2220
      %v2222 = vrot.slane %v2023, 2
      %v2223 = vsel %vm463, %v2220, %v2222
      %v2224 = vrot.slane %v2024, 2
      %v2225 = vrot.slane %v2025, 2
      %v2226 = vsel %vm463, %v2224, %v2225
      %v2227 = vrot.slane %v2026, 2
      %v2228 = vsel %vm463, %v2225, %v2227
      %v2229 = vrot.slane %v2027, 2
      %v2230 = vrot.slane %v2028, 2
      %v2231 = vsel %vm463, %v2229, %v2230
      %v2232 = vrot.slane %v2029, 2
      %v2233 = vsel %vm463, %v2230, %v2232
      %v2234 = vrot.slane %v2030, 2
      %v2235 = vrot.slane %v2031, 2
      %v2236 = vsel %vm463, %v2234, %v2235
      %v2237 = vrot.slane %v2032, 2
      %v2238 = vsel %vm463, %v2235, %v2237
      %v2239 = vrot.slane %v2033, 2
      %v2240 = vrot.slane %v2034, 2
      %v2241 = vsel %vm463, %v2239, %v2240
      %v2242 = vrot.slane %v2035, 2
      %v2243 = vsel %vm463, %v2240, %v2242
      %v2244 = vrot.slane %v2036, 2
      %v2245 = vrot.slane %v2037, 2
      %v2246 = vsel %vm463, %v2244, %v2245
      %v2247 = vrot.slane %v2038, 2
      %v2248 = vsel %vm463, %v2245, %v2247
      %v2249 = vrot.slane %v2039, 2
      %v2250 = vrot.slane %v2040, 2
      %v2251 = vsel %vm463, %v2249, %v2250
      %v2252 = vrot.slane %v2041, 2
      %v2253 = vsel %vm463, %v2250, %v2252
      %v2254 = vrot.slane %v2042, 2
      %v2255 = vrot.slane %v2043, 2
      %v2256 = vsel %vm463, %v2254, %v2255
      %v2257 = vrot.slane %v2044, 2
      %v2258 = vsel %vm463, %v2255, %v2257
      %v2262 = vrot.slane %v2045, 1
      %v2263 = vrot.slane %v2046, 1
      %v2264 = vsel %vm382, %v2262, %v2263
      %v2265 = vrot.slane %v2047, 1
      %v2266 = vsel %vm382, %v2263, %v2265
      %v2267 = vrot.slane %v2045, 2
      %v2268 = vrot.slane %v2046, 2
      %v2269 = vsel %vm463, %v2267, %v2268
      %v2270 = vrot.slane %v2047, 2
      %v2271 = vsel %vm463, %v2268, %v2270
      %v2275 = vrot.slane %v2048, 1
      %v2276 = vrot.slane %v2049, 1
      %v2277 = vsel %vm382, %v2275, %v2276
      %v2278 = vrot.slane %v2050, 1
      %v2279 = vsel %vm382, %v2276, %v2278
      %v2280 = vrot.slane %v2048, 2
      %v2281 = vrot.slane %v2049, 2
      %v2282 = vsel %vm463, %v2280, %v2281
      %v2283 = vrot.slane %v2050, 2
      %v2284 = vsel %vm463, %v2281, %v2283
      %2285 = vrot.lane.b32.xlu0 %v2101, 8
      %v2286 = vpop.permute.xlu0 %2285
      %2287 = vrot.lane.b32.xlu0 %v2103, 8
      %v2288 = vpop.permute.xlu0 %2287
      %2289 = vrot.lane.b32.xlu0 %v2106, 8
      %v2290 = vpop.permute.xlu0 %2289
      %2291 = vrot.lane.b32.xlu0 %v2108, 8
      %v2292 = vpop.permute.xlu0 %2291
      %2293 = vrot.lane.b32.xlu0 %v2111, 8
      %v2294 = vpop.permute.xlu0 %2293
      %2295 = vrot.lane.b32.xlu0 %v2113, 8
      %v2296 = vpop.permute.xlu0 %2295
      %2297 = vrot.lane.b32.xlu0 %v2116, 8
      %v2298 = vpop.permute.xlu0 %2297
      %2299 = vrot.lane.b32.xlu0 %v2118, 8
      %v2300 = vpop.permute.xlu0 %2299
      %2301 = vrot.lane.b32.xlu0 %v2121, 8
      %v2302 = vpop.permute.xlu0 %2301
      %2303 = vrot.lane.b32.xlu0 %v2123, 8
      %v2304 = vpop.permute.xlu0 %2303
      %2305 = vrot.lane.b32.xlu0 %v2126, 8
      %v2306 = vpop.permute.xlu0 %2305
      %2307 = vrot.lane.b32.xlu0 %v2128, 8
      %v2308 = vpop.permute.xlu0 %2307
      %2309 = vrot.lane.b32.xlu0 %v2131, 8
      %v2310 = vpop.permute.xlu0 %2309
      %2311 = vrot.lane.b32.xlu0 %v2133, 8
      %v2312 = vpop.permute.xlu0 %2311
      %2313 = vrot.lane.b32.xlu0 %v2136, 8
      %v2314 = vpop.permute.xlu0 %2313
      %2315 = vrot.lane.b32.xlu0 %v2138, 8
      %v2316 = vpop.permute.xlu0 %2315
      %2317 = vrot.lane.b32.xlu0 %v2141, 8
      %v2318 = vpop.permute.xlu0 %2317
      %2319 = vrot.lane.b32.xlu0 %v2143, 8
      %v2320 = vpop.permute.xlu0 %2319
      %2321 = vrot.lane.b32.xlu0 %v2146, 8
      %v2322 = vpop.permute.xlu0 %2321
      %2323 = vrot.lane.b32.xlu0 %v2148, 8
      %v2324 = vpop.permute.xlu0 %2323
      %2325 = vrot.lane.b32.xlu0 %v2151, 8
      %v2326 = vpop.permute.xlu0 %2325
      %2327 = vrot.lane.b32.xlu0 %v2153, 8
      %v2328 = vpop.permute.xlu0 %2327
      %2329 = vrot.lane.b32.xlu0 %v2156, 8
      %v2330 = vpop.permute.xlu0 %2329
      %2331 = vrot.lane.b32.xlu0 %v2158, 8
      %v2332 = vpop.permute.xlu0 %2331
      %2333 = vrot.lane.b32.xlu0 %v2161, 8
      %v2334 = vpop.permute.xlu0 %2333
      %2335 = vrot.lane.b32.xlu0 %v2163, 8
      %v2336 = vpop.permute.xlu0 %2335
      %2337 = vrot.lane.b32.xlu0 %v2166, 8
      %v2338 = vpop.permute.xlu0 %2337
      %2339 = vrot.lane.b32.xlu0 %v2168, 8
      %v2340 = vpop.permute.xlu0 %2339
      %2341 = vrot.lane.b32.xlu0 %v2171, 8
      %v2342 = vpop.permute.xlu0 %2341
      %2343 = vrot.lane.b32.xlu0 %v2173, 8
      %v2344 = vpop.permute.xlu0 %2343
      %2345 = vrot.lane.b32.xlu0 %v2176, 8
      %v2346 = vpop.permute.xlu0 %2345
      %2347 = vrot.lane.b32.xlu0 %v2178, 8
      %v2348 = vpop.permute.xlu0 %2347
      %2381 = vrot.lane.b32.xlu0 %v2181, 16
      %v2382 = vpop.permute.xlu0 %2381
      %2383 = vrot.lane.b32.xlu0 %v2183, 16
      %v2384 = vpop.permute.xlu0 %2383
      %2385 = vrot.lane.b32.xlu0 %v2186, 16
      %v2386 = vpop.permute.xlu0 %2385
      %2387 = vrot.lane.b32.xlu0 %v2188, 16
      %v2388 = vpop.permute.xlu0 %2387
      %2389 = vrot.lane.b32.xlu0 %v2191, 16
      %v2390 = vpop.permute.xlu0 %2389
      %2391 = vrot.lane.b32.xlu0 %v2193, 16
      %v2392 = vpop.permute.xlu0 %2391
      %2393 = vrot.lane.b32.xlu0 %v2196, 16
      %v2394 = vpop.permute.xlu0 %2393
      %2395 = vrot.lane.b32.xlu0 %v2198, 16
      %v2396 = vpop.permute.xlu0 %2395
      %2397 = vrot.lane.b32.xlu0 %v2201, 16
      %v2398 = vpop.permute.xlu0 %2397
      %2399 = vrot.lane.b32.xlu0 %v2203, 16
      %v2400 = vpop.permute.xlu0 %2399
      %2401 = vrot.lane.b32.xlu0 %v2206, 16
      %v2402 = vpop.permute.xlu0 %2401
      %2403 = vrot.lane.b32.xlu0 %v2208, 16
      %v2404 = vpop.permute.xlu0 %2403
      %2405 = vrot.lane.b32.xlu0 %v2211, 16
      %v2406 = vpop.permute.xlu0 %2405
      %2407 = vrot.lane.b32.xlu0 %v2213, 16
      %v2408 = vpop.permute.xlu0 %2407
      %2409 = vrot.lane.b32.xlu0 %v2216, 16
      %v2410 = vpop.permute.xlu0 %2409
      %2411 = vrot.lane.b32.xlu0 %v2218, 16
      %v2412 = vpop.permute.xlu0 %2411
      %2413 = vrot.lane.b32.xlu0 %v2221, 16
      %v2414 = vpop.permute.xlu0 %2413
      %2415 = vrot.lane.b32.xlu0 %v2223, 16
      %v2416 = vpop.permute.xlu0 %2415
      %2417 = vrot.lane.b32.xlu0 %v2226, 16
      %v2418 = vpop.permute.xlu0 %2417
      %2419 = vrot.lane.b32.xlu0 %v2228, 16
      %v2420 = vpop.permute.xlu0 %2419
      %2421 = vrot.lane.b32.xlu0 %v2231, 16
      %v2422 = vpop.permute.xlu0 %2421
      %2423 = vrot.lane.b32.xlu0 %v2233, 16
      %v2424 = vpop.permute.xlu0 %2423
      %2425 = vrot.lane.b32.xlu0 %v2236, 16
      %v2426 = vpop.permute.xlu0 %2425
      %2427 = vrot.lane.b32.xlu0 %v2238, 16
      %v2428 = vpop.permute.xlu0 %2427
      %2429 = vrot.lane.b32.xlu0 %v2241, 16
      %v2430 = vpop.permute.xlu0 %2429
      %2431 = vrot.lane.b32.xlu0 %v2243, 16
      %v2432 = vpop.permute.xlu0 %2431
      %2433 = vrot.lane.b32.xlu0 %v2246, 16
      %v2434 = vpop.permute.xlu0 %2433
      %2435 = vrot.lane.b32.xlu0 %v2248, 16
      %v2436 = vpop.permute.xlu0 %2435
      %2437 = vrot.lane.b32.xlu0 %v2251, 16
      %v2438 = vpop.permute.xlu0 %2437
      %2439 = vrot.lane.b32.xlu0 %v2253, 16
      %v2440 = vpop.permute.xlu0 %2439
      %2441 = vrot.lane.b32.xlu0 %v2256, 16
      %v2442 = vpop.permute.xlu0 %2441
      %2443 = vrot.lane.b32.xlu0 %v2258, 16
      %v2444 = vpop.permute.xlu0 %2443
      %2477 = vrot.lane.b32.xlu0 %v2000, 24
      %v2478 = vpop.permute.xlu0 %2477
      %2479 = vrot.lane.b32.xlu0 %v2001, 24
      %v2480 = vpop.permute.xlu0 %2479
      %2481 = vrot.lane.b32.xlu0 %v2003, 24
      %v2482 = vpop.permute.xlu0 %2481
      %2483 = vrot.lane.b32.xlu0 %v2004, 24
      %v2484 = vpop.permute.xlu0 %2483
      %2485 = vrot.lane.b32.xlu0 %v2006, 24
      %v2486 = vpop.permute.xlu0 %2485
      %2487 = vrot.lane.b32.xlu0 %v2007, 24
      %v2488 = vpop.permute.xlu0 %2487
      %2489 = vrot.lane.b32.xlu0 %v2009, 24
      %v2490 = vpop.permute.xlu0 %2489
      %2491 = vrot.lane.b32.xlu0 %v2010, 24
      %v2492 = vpop.permute.xlu0 %2491
      %2493 = vrot.lane.b32.xlu0 %v2012, 24
      %v2494 = vpop.permute.xlu0 %2493
      %2495 = vrot.lane.b32.xlu0 %v2013, 24
      %v2496 = vpop.permute.xlu0 %2495
      %2497 = vrot.lane.b32.xlu0 %v2015, 24
      %v2498 = vpop.permute.xlu0 %2497
      %2499 = vrot.lane.b32.xlu0 %v2016, 24
      %v2500 = vpop.permute.xlu0 %2499
      %2501 = vrot.lane.b32.xlu0 %v2018, 24
      %v2502 = vpop.permute.xlu0 %2501
      %2503 = vrot.lane.b32.xlu0 %v2019, 24
      %v2504 = vpop.permute.xlu0 %2503
      %2505 = vrot.lane.b32.xlu0 %v2021, 24
      %v2506 = vpop.permute.xlu0 %2505
      %2507 = vrot.lane.b32.xlu0 %v2022, 24
      %v2508 = vpop.permute.xlu0 %2507
      %2509 = vrot.lane.b32.xlu0 %v2024, 24
      %v2510 = vpop.permute.xlu0 %2509
      %2511 = vrot.lane.b32.xlu0 %v2025, 24
      %v2512 = vpop.permute.xlu0 %2511
      %2513 = vrot.lane.b32.xlu0 %v2027, 24
      %v2514 = vpop.permute.xlu0 %2513
      %2515 = vrot.lane.b32.xlu0 %v2028, 24
      %v2516 = vpop.permute.xlu0 %2515
      %2517 = vrot.lane.b32.xlu0 %v2030, 24
      %v2518 = vpop.permute.xlu0 %2517
      %2519 = vrot.lane.b32.xlu0 %v2031, 24
      %v2520 = vpop.permute.xlu0 %2519
      %2521 = vrot.lane.b32.xlu0 %v2033, 24
      %v2522 = vpop.permute.xlu0 %2521
      %2523 = vrot.lane.b32.xlu0 %v2034, 24
      %v2524 = vpop.permute.xlu0 %2523
      %2525 = vrot.lane.b32.xlu0 %v2036, 24
      %v2526 = vpop.permute.xlu0 %2525
      %2527 = vrot.lane.b32.xlu0 %v2037, 24
      %v2528 = vpop.permute.xlu0 %2527
      %2529 = vrot.lane.b32.xlu0 %v2039, 24
      %v2530 = vpop.permute.xlu0 %2529
      %2531 = vrot.lane.b32.xlu0 %v2040, 24
      %v2532 = vpop.permute.xlu0 %2531
      %2533 = vrot.lane.b32.xlu0 %v2042, 24
      %v2534 = vpop.permute.xlu0 %2533
      %2535 = vrot.lane.b32.xlu0 %v2043, 24
      %v2536 = vpop.permute.xlu0 %2535
      %2537 = vrot.lane.b32.xlu0 %v2045, 24
      %v2538 = vpop.permute.xlu0 %2537
      %2539 = vrot.lane.b32.xlu0 %v2046, 24
      %v2540 = vpop.permute.xlu0 %2539
      %2573 = vrot.lane.b32.xlu0 %v2106, 32
      %v2574 = vpop.permute.xlu0 %2573
      %2575 = vrot.lane.b32.xlu0 %v2108, 32
      %v2576 = vpop.permute.xlu0 %2575
      %2577 = vrot.lane.b32.xlu0 %v2111, 32
      %v2578 = vpop.permute.xlu0 %2577
      %2579 = vrot.lane.b32.xlu0 %v2113, 32
      %v2580 = vpop.permute.xlu0 %2579
      %2581 = vrot.lane.b32.xlu0 %v2116, 32
      %v2582 = vpop.permute.xlu0 %2581
      %2583 = vrot.lane.b32.xlu0 %v2118, 32
      %v2584 = vpop.permute.xlu0 %2583
      %2585 = vrot.lane.b32.xlu0 %v2121, 32
      %v2586 = vpop.permute.xlu0 %2585
      %2587 = vrot.lane.b32.xlu0 %v2123, 32
      %v2588 = vpop.permute.xlu0 %2587
      %2589 = vrot.lane.b32.xlu0 %v2126, 32
      %v2590 = vpop.permute.xlu0 %2589
      %2591 = vrot.lane.b32.xlu0 %v2128, 32
      %v2592 = vpop.permute.xlu0 %2591
      %2593 = vrot.lane.b32.xlu0 %v2131, 32
      %v2594 = vpop.permute.xlu0 %2593
      %2595 = vrot.lane.b32.xlu0 %v2133, 32
      %v2596 = vpop.permute.xlu0 %2595
      %2597 = vrot.lane.b32.xlu0 %v2136, 32
      %v2598 = vpop.permute.xlu0 %2597
      %2599 = vrot.lane.b32.xlu0 %v2138, 32
      %v2600 = vpop.permute.xlu0 %2599
      %2601 = vrot.lane.b32.xlu0 %v2141, 32
      %v2602 = vpop.permute.xlu0 %2601
      %2603 = vrot.lane.b32.xlu0 %v2143, 32
      %v2604 = vpop.permute.xlu0 %2603
      %2605 = vrot.lane.b32.xlu0 %v2146, 32
      %v2606 = vpop.permute.xlu0 %2605
      %2607 = vrot.lane.b32.xlu0 %v2148, 32
      %v2608 = vpop.permute.xlu0 %2607
      %2609 = vrot.lane.b32.xlu0 %v2151, 32
      %v2610 = vpop.permute.xlu0 %2609
      %2611 = vrot.lane.b32.xlu0 %v2153, 32
      %v2612 = vpop.permute.xlu0 %2611
      %2613 = vrot.lane.b32.xlu0 %v2156, 32
      %v2614 = vpop.permute.xlu0 %2613
      %2615 = vrot.lane.b32.xlu0 %v2158, 32
      %v2616 = vpop.permute.xlu0 %2615
      %2617 = vrot.lane.b32.xlu0 %v2161, 32
      %v2618 = vpop.permute.xlu0 %2617
      %2619 = vrot.lane.b32.xlu0 %v2163, 32
      %v2620 = vpop.permute.xlu0 %2619
      %2621 = vrot.lane.b32.xlu0 %v2166, 32
      %v2622 = vpop.permute.xlu0 %2621
      %2623 = vrot.lane.b32.xlu0 %v2168, 32
      %v2624 = vpop.permute.xlu0 %2623
      %2625 = vrot.lane.b32.xlu0 %v2171, 32
      %v2626 = vpop.permute.xlu0 %2625
      %2627 = vrot.lane.b32.xlu0 %v2173, 32
      %v2628 = vpop.permute.xlu0 %2627
      %2629 = vrot.lane.b32.xlu0 %v2176, 32
      %v2630 = vpop.permute.xlu0 %2629
      %2631 = vrot.lane.b32.xlu0 %v2178, 32
      %v2632 = vpop.permute.xlu0 %2631
      %2633 = vrot.lane.b32.xlu0 %v2264, 32
      %v2634 = vpop.permute.xlu0 %2633
      %2635 = vrot.lane.b32.xlu0 %v2266, 32
      %v2636 = vpop.permute.xlu0 %2635
      %2669 = vrot.lane.b32.xlu0 %v2186, 40
      %v2670 = vpop.permute.xlu0 %2669
      %2671 = vrot.lane.b32.xlu0 %v2188, 40
      %v2672 = vpop.permute.xlu0 %2671
      %2673 = vrot.lane.b32.xlu0 %v2191, 40
      %v2674 = vpop.permute.xlu0 %2673
      %2675 = vrot.lane.b32.xlu0 %v2193, 40
      %v2676 = vpop.permute.xlu0 %2675
      %2677 = vrot.lane.b32.xlu0 %v2196, 40
      %v2678 = vpop.permute.xlu0 %2677
      %2679 = vrot.lane.b32.xlu0 %v2198, 40
      %v2680 = vpop.permute.xlu0 %2679
      %2681 = vrot.lane.b32.xlu0 %v2201, 40
      %v2682 = vpop.permute.xlu0 %2681
      %2683 = vrot.lane.b32.xlu0 %v2203, 40
      %v2684 = vpop.permute.xlu0 %2683
      %2685 = vrot.lane.b32.xlu0 %v2206, 40
      %v2686 = vpop.permute.xlu0 %2685
      %2687 = vrot.lane.b32.xlu0 %v2208, 40
      %v2688 = vpop.permute.xlu0 %2687
      %2689 = vrot.lane.b32.xlu0 %v2211, 40
      %v2690 = vpop.permute.xlu0 %2689
      %2691 = vrot.lane.b32.xlu0 %v2213, 40
      %v2692 = vpop.permute.xlu0 %2691
      %2693 = vrot.lane.b32.xlu0 %v2216, 40
      %v2694 = vpop.permute.xlu0 %2693
      %2695 = vrot.lane.b32.xlu0 %v2218, 40
      %v2696 = vpop.permute.xlu0 %2695
      %2697 = vrot.lane.b32.xlu0 %v2221, 40
      %v2698 = vpop.permute.xlu0 %2697
      %2699 = vrot.lane.b32.xlu0 %v2223, 40
      %v2700 = vpop.permute.xlu0 %2699
      %2701 = vrot.lane.b32.xlu0 %v2226, 40
      %v2702 = vpop.permute.xlu0 %2701
      %2703 = vrot.lane.b32.xlu0 %v2228, 40
      %v2704 = vpop.permute.xlu0 %2703
      %2705 = vrot.lane.b32.xlu0 %v2231, 40
      %v2706 = vpop.permute.xlu0 %2705
      %2707 = vrot.lane.b32.xlu0 %v2233, 40
      %v2708 = vpop.permute.xlu0 %2707
      %2709 = vrot.lane.b32.xlu0 %v2236, 40
      %v2710 = vpop.permute.xlu0 %2709
      %2711 = vrot.lane.b32.xlu0 %v2238, 40
      %v2712 = vpop.permute.xlu0 %2711
      %2713 = vrot.lane.b32.xlu0 %v2241, 40
      %v2714 = vpop.permute.xlu0 %2713
      %2715 = vrot.lane.b32.xlu0 %v2243, 40
      %v2716 = vpop.permute.xlu0 %2715
      %2717 = vrot.lane.b32.xlu0 %v2246, 40
      %v2718 = vpop.permute.xlu0 %2717
      %2719 = vrot.lane.b32.xlu0 %v2248, 40
      %v2720 = vpop.permute.xlu0 %2719
      %2721 = vrot.lane.b32.xlu0 %v2251, 40
      %v2722 = vpop.permute.xlu0 %2721
      %2723 = vrot.lane.b32.xlu0 %v2253, 40
      %v2724 = vpop.permute.xlu0 %2723
      %2725 = vrot.lane.b32.xlu0 %v2256, 40
      %v2726 = vpop.permute.xlu0 %2725
      %2727 = vrot.lane.b32.xlu0 %v2258, 40
      %v2728 = vpop.permute.xlu0 %2727
      %2729 = vrot.lane.b32.xlu0 %v2269, 40
      %v2730 = vpop.permute.xlu0 %2729
      %2731 = vrot.lane.b32.xlu0 %v2271, 40
      %v2732 = vpop.permute.xlu0 %2731
      %2765 = vrot.lane.b32.xlu0 %v2003, 48
      %v2766 = vpop.permute.xlu0 %2765
      %2767 = vrot.lane.b32.xlu0 %v2004, 48
      %v2768 = vpop.permute.xlu0 %2767
      %2769 = vrot.lane.b32.xlu0 %v2006, 48
      %v2770 = vpop.permute.xlu0 %2769
      %2771 = vrot.lane.b32.xlu0 %v2007, 48
      %v2772 = vpop.permute.xlu0 %2771
      %2773 = vrot.lane.b32.xlu0 %v2009, 48
      %v2774 = vpop.permute.xlu0 %2773
      %2775 = vrot.lane.b32.xlu0 %v2010, 48
      %v2776 = vpop.permute.xlu0 %2775
      %2777 = vrot.lane.b32.xlu0 %v2012, 48
      %v2778 = vpop.permute.xlu0 %2777
      %2779 = vrot.lane.b32.xlu0 %v2013, 48
      %v2780 = vpop.permute.xlu0 %2779
      %2781 = vrot.lane.b32.xlu0 %v2015, 48
      %v2782 = vpop.permute.xlu0 %2781
      %2783 = vrot.lane.b32.xlu0 %v2016, 48
      %v2784 = vpop.permute.xlu0 %2783
      %2785 = vrot.lane.b32.xlu0 %v2018, 48
      %v2786 = vpop.permute.xlu0 %2785
      %2787 = vrot.lane.b32.xlu0 %v2019, 48
      %v2788 = vpop.permute.xlu0 %2787
      %2789 = vrot.lane.b32.xlu0 %v2021, 48
      %v2790 = vpop.permute.xlu0 %2789
      %2791 = vrot.lane.b32.xlu0 %v2022, 48
      %v2792 = vpop.permute.xlu0 %2791
      %2793 = vrot.lane.b32.xlu0 %v2024, 48
      %v2794 = vpop.permute.xlu0 %2793
      %2795 = vrot.lane.b32.xlu0 %v2025, 48
      %v2796 = vpop.permute.xlu0 %2795
      %2797 = vrot.lane.b32.xlu0 %v2027, 48
      %v2798 = vpop.permute.xlu0 %2797
      %2799 = vrot.lane.b32.xlu0 %v2028, 48
      %v2800 = vpop.permute.xlu0 %2799
      %2801 = vrot.lane.b32.xlu0 %v2030, 48
      %v2802 = vpop.permute.xlu0 %2801
      %2803 = vrot.lane.b32.xlu0 %v2031, 48
      %v2804 = vpop.permute.xlu0 %2803
      %2805 = vrot.lane.b32.xlu0 %v2033, 48
      %v2806 = vpop.permute.xlu0 %2805
      %2807 = vrot.lane.b32.xlu0 %v2034, 48
      %v2808 = vpop.permute.xlu0 %2807
      %2809 = vrot.lane.b32.xlu0 %v2036, 48
      %v2810 = vpop.permute.xlu0 %2809
      %2811 = vrot.lane.b32.xlu0 %v2037, 48
      %v2812 = vpop.permute.xlu0 %2811
      %2813 = vrot.lane.b32.xlu0 %v2039, 48
      %v2814 = vpop.permute.xlu0 %2813
      %2815 = vrot.lane.b32.xlu0 %v2040, 48
      %v2816 = vpop.permute.xlu0 %2815
      %2817 = vrot.lane.b32.xlu0 %v2042, 48
      %v2818 = vpop.permute.xlu0 %2817
      %2819 = vrot.lane.b32.xlu0 %v2043, 48
      %v2820 = vpop.permute.xlu0 %2819
      %2821 = vrot.lane.b32.xlu0 %v2045, 48
      %v2822 = vpop.permute.xlu0 %2821
      %2823 = vrot.lane.b32.xlu0 %v2046, 48
      %v2824 = vpop.permute.xlu0 %2823
      %2825 = vrot.lane.b32.xlu0 %v2048, 48
      %v2826 = vpop.permute.xlu0 %2825
      %2827 = vrot.lane.b32.xlu0 %v2049, 48
      %v2828 = vpop.permute.xlu0 %2827
      %2861 = vrot.lane.b32.xlu0 %v2111, 56
      %v2862 = vpop.permute.xlu0 %2861
      %2863 = vrot.lane.b32.xlu0 %v2113, 56
      %v2864 = vpop.permute.xlu0 %2863
      %2865 = vrot.lane.b32.xlu0 %v2116, 56
      %v2866 = vpop.permute.xlu0 %2865
      %2867 = vrot.lane.b32.xlu0 %v2118, 56
      %v2868 = vpop.permute.xlu0 %2867
      %2869 = vrot.lane.b32.xlu0 %v2121, 56
      %v2870 = vpop.permute.xlu0 %2869
      %2871 = vrot.lane.b32.xlu0 %v2123, 56
      %v2872 = vpop.permute.xlu0 %2871
      %2873 = vrot.lane.b32.xlu0 %v2126, 56
      %v2874 = vpop.permute.xlu0 %2873
      %2875 = vrot.lane.b32.xlu0 %v2128, 56
      %v2876 = vpop.permute.xlu0 %2875
      %2877 = vrot.lane.b32.xlu0 %v2131, 56
      %v2878 = vpop.permute.xlu0 %2877
      %2879 = vrot.lane.b32.xlu0 %v2133, 56
      %v2880 = vpop.permute.xlu0 %2879
      %2881 = vrot.lane.b32.xlu0 %v2136, 56
      %v2882 = vpop.permute.xlu0 %2881
      %2883 = vrot.lane.b32.xlu0 %v2138, 56
      %v2884 = vpop.permute.xlu0 %2883
      %2885 = vrot.lane.b32.xlu0 %v2141, 56
      %v2886 = vpop.permute.xlu0 %2885
      %2887 = vrot.lane.b32.xlu0 %v2143, 56
      %v2888 = vpop.permute.xlu0 %2887
      %2889 = vrot.lane.b32.xlu0 %v2146, 56
      %v2890 = vpop.permute.xlu0 %2889
      %2891 = vrot.lane.b32.xlu0 %v2148, 56
      %v2892 = vpop.permute.xlu0 %2891
      %2893 = vrot.lane.b32.xlu0 %v2151, 56
      %v2894 = vpop.permute.xlu0 %2893
      %2895 = vrot.lane.b32.xlu0 %v2153, 56
      %v2896 = vpop.permute.xlu0 %2895
      %2897 = vrot.lane.b32.xlu0 %v2156, 56
      %v2898 = vpop.permute.xlu0 %2897
      %2899 = vrot.lane.b32.xlu0 %v2158, 56
      %v2900 = vpop.permute.xlu0 %2899
      %2901 = vrot.lane.b32.xlu0 %v2161, 56
      %v2902 = vpop.permute.xlu0 %2901
      %2903 = vrot.lane.b32.xlu0 %v2163, 56
      %v2904 = vpop.permute.xlu0 %2903
      %2905 = vrot.lane.b32.xlu0 %v2166, 56
      %v2906 = vpop.permute.xlu0 %2905
      %2907 = vrot.lane.b32.xlu0 %v2168, 56
      %v2908 = vpop.permute.xlu0 %2907
      %2909 = vrot.lane.b32.xlu0 %v2171, 56
      %v2910 = vpop.permute.xlu0 %2909
      %2911 = vrot.lane.b32.xlu0 %v2173, 56
      %v2912 = vpop.permute.xlu0 %2911
      %2913 = vrot.lane.b32.xlu0 %v2176, 56
      %v2914 = vpop.permute.xlu0 %2913
      %2915 = vrot.lane.b32.xlu0 %v2178, 56
      %v2916 = vpop.permute.xlu0 %2915
      %2917 = vrot.lane.b32.xlu0 %v2264, 56
      %v2918 = vpop.permute.xlu0 %2917
      %2919 = vrot.lane.b32.xlu0 %v2266, 56
      %v2920 = vpop.permute.xlu0 %2919
      %2921 = vrot.lane.b32.xlu0 %v2277, 56
      %v2922 = vpop.permute.xlu0 %2921
      %2923 = vrot.lane.b32.xlu0 %v2279, 56
      %v2924 = vpop.permute.xlu0 %2923
      %2957 = vrot.lane.b32.xlu0 %v2191, 64
      %v2958 = vpop.permute.xlu0 %2957
      %2959 = vrot.lane.b32.xlu0 %v2193, 64
      %v2960 = vpop.permute.xlu0 %2959
      %2961 = vrot.lane.b32.xlu0 %v2196, 64
      %v2962 = vpop.permute.xlu0 %2961
      %2963 = vrot.lane.b32.xlu0 %v2198, 64
      %v2964 = vpop.permute.xlu0 %2963
      %2965 = vrot.lane.b32.xlu0 %v2201, 64
      %v2966 = vpop.permute.xlu0 %2965
      %2967 = vrot.lane.b32.xlu0 %v2203, 64
      %v2968 = vpop.permute.xlu0 %2967
      %2969 = vrot.lane.b32.xlu0 %v2206, 64
      %v2970 = vpop.permute.xlu0 %2969
      %2971 = vrot.lane.b32.xlu0 %v2208, 64
      %v2972 = vpop.permute.xlu0 %2971
      %2973 = vrot.lane.b32.xlu0 %v2211, 64
      %v2974 = vpop.permute.xlu0 %2973
      %2975 = vrot.lane.b32.xlu0 %v2213, 64
      %v2976 = vpop.permute.xlu0 %2975
      %2977 = vrot.lane.b32.xlu0 %v2216, 64
      %v2978 = vpop.permute.xlu0 %2977
      %2979 = vrot.lane.b32.xlu0 %v2218, 64
      %v2980 = vpop.permute.xlu0 %2979
      %2981 = vrot.lane.b32.xlu0 %v2221, 64
      %v2982 = vpop.permute.xlu0 %2981
      %2983 = vrot.lane.b32.xlu0 %v2223, 64
      %v2984 = vpop.permute.xlu0 %2983
      %2985 = vrot.lane.b32.xlu0 %v2226, 64
      %v2986 = vpop.permute.xlu0 %2985
      %2987 = vrot.lane.b32.xlu0 %v2228, 64
      %v2988 = vpop.permute.xlu0 %2987
      %2989 = vrot.lane.b32.xlu0 %v2231, 64
      %v2990 = vpop.permute.xlu0 %2989
      %2991 = vrot.lane.b32.xlu0 %v2233, 64
      %v2992 = vpop.permute.xlu0 %2991
      %2993 = vrot.lane.b32.xlu0 %v2236, 64
      %v2994 = vpop.permute.xlu0 %2993
      %2995 = vrot.lane.b32.xlu0 %v2238, 64
      %v2996 = vpop.permute.xlu0 %2995
      %2997 = vrot.lane.b32.xlu0 %v2241, 64
      %v2998 = vpop.permute.xlu0 %2997
      %2999 = vrot.lane.b32.xlu0 %v2243, 64
      %v3000 = vpop.permute.xlu0 %2999
      %3001 = vrot.lane.b32.xlu0 %v2246, 64
      %v3002 = vpop.permute.xlu0 %3001
      %3003 = vrot.lane.b32.xlu0 %v2248, 64
      %v3004 = vpop.permute.xlu0 %3003
      %3005 = vrot.lane.b32.xlu0 %v2251, 64
      %v3006 = vpop.permute.xlu0 %3005
      %3007 = vrot.lane.b32.xlu0 %v2253, 64
      %v3008 = vpop.permute.xlu0 %3007
      %3009 = vrot.lane.b32.xlu0 %v2256, 64
      %v3010 = vpop.permute.xlu0 %3009
      %3011 = vrot.lane.b32.xlu0 %v2258, 64
      %v3012 = vpop.permute.xlu0 %3011
      %3013 = vrot.lane.b32.xlu0 %v2269, 64
      %v3014 = vpop.permute.xlu0 %3013
      %3015 = vrot.lane.b32.xlu0 %v2271, 64
      %v3016 = vpop.permute.xlu0 %3015
      %3017 = vrot.lane.b32.xlu0 %v2282, 64
      %v3018 = vpop.permute.xlu0 %3017
      %3019 = vrot.lane.b32.xlu0 %v2284, 64
      %v3020 = vpop.permute.xlu0 %3019
      %v3053 = vsel %vm1403, %v1997, %v2286
      %v3054 = vsel %vm1403, %v1998, %v2288
      %v3055 = vsel %vm1403, %v2000, %v2290
      %v3056 = vsel %vm1403, %v2001, %v2292
      %v3057 = vsel %vm1403, %v2003, %v2294
      %v3058 = vsel %vm1403, %v2004, %v2296
      %v3059 = vsel %vm1403, %v2006, %v2298
      %v3060 = vsel %vm1403, %v2007, %v2300
      %v3061 = vsel %vm1403, %v2009, %v2302
      %v3062 = vsel %vm1403, %v2010, %v2304
      %v3063 = vsel %vm1403, %v2012, %v2306
      %v3064 = vsel %vm1403, %v2013, %v2308
      %v3065 = vsel %vm1403, %v2015, %v2310
      %v3066 = vsel %vm1403, %v2016, %v2312
      %v3067 = vsel %vm1403, %v2018, %v2314
      %v3068 = vsel %vm1403, %v2019, %v2316
      %v3069 = vsel %vm1403, %v2021, %v2318
      %v3070 = vsel %vm1403, %v2022, %v2320
      %v3071 = vsel %vm1403, %v2024, %v2322
      %v3072 = vsel %vm1403, %v2025, %v2324
      %v3073 = vsel %vm1403, %v2027, %v2326
      %v3074 = vsel %vm1403, %v2028, %v2328
      %v3075 = vsel %vm1403, %v2030, %v2330
      %v3076 = vsel %vm1403, %v2031, %v2332
      %v3077 = vsel %vm1403, %v2033, %v2334
      %v3078 = vsel %vm1403, %v2034, %v2336
      %v3079 = vsel %vm1403, %v2036, %v2338
      %v3080 = vsel %vm1403, %v2037, %v2340
      %v3081 = vsel %vm1403, %v2039, %v2342
      %v3082 = vsel %vm1403, %v2040, %v2344
      %v3083 = vsel %vm1403, %v2042, %v2346
      %v3084 = vsel %vm1403, %v2043, %v2348
      %v3085 = vsel %vm1469, %v3053, %v2382
      %v3086 = vsel %vm1469, %v3054, %v2384
      %v3087 = vsel %vm1469, %v3055, %v2386
      %v3088 = vsel %vm1469, %v3056, %v2388
      %v3089 = vsel %vm1469, %v3057, %v2390
      %v3090 = vsel %vm1469, %v3058, %v2392
      %v3091 = vsel %vm1469, %v3059, %v2394
      %v3092 = vsel %vm1469, %v3060, %v2396
      %v3093 = vsel %vm1469, %v3061, %v2398
      %v3094 = vsel %vm1469, %v3062, %v2400
      %v3095 = vsel %vm1469, %v3063, %v2402
      %v3096 = vsel %vm1469, %v3064, %v2404
      %v3097 = vsel %vm1469, %v3065, %v2406
      %v3098 = vsel %vm1469, %v3066, %v2408
      %v3099 = vsel %vm1469, %v3067, %v2410
      %v3100 = vsel %vm1469, %v3068, %v2412
      %v3101 = vsel %vm1469, %v3069, %v2414
      %v3102 = vsel %vm1469, %v3070, %v2416
      %v3103 = vsel %vm1469, %v3071, %v2418
      %v3104 = vsel %vm1469, %v3072, %v2420
      %v3105 = vsel %vm1469, %v3073, %v2422
      %v3106 = vsel %vm1469, %v3074, %v2424
      %v3107 = vsel %vm1469, %v3075, %v2426
      %v3108 = vsel %vm1469, %v3076, %v2428
      %v3109 = vsel %vm1469, %v3077, %v2430
      %v3110 = vsel %vm1469, %v3078, %v2432
      %v3111 = vsel %vm1469, %v3079, %v2434
      %v3112 = vsel %vm1469, %v3080, %v2436
      %v3113 = vsel %vm1469, %v3081, %v2438
      %v3114 = vsel %vm1469, %v3082, %v2440
      %v3115 = vsel %vm1469, %v3083, %v2442
      %v3116 = vsel %vm1469, %v3084, %v2444
      %v3117 = vsel %vm1535, %v3085, %v2478
      %v3118 = vsel %vm1535, %v3086, %v2480
      %v3119 = vsel %vm1535, %v3087, %v2482
      %v3120 = vsel %vm1535, %v3088, %v2484
      %v3121 = vsel %vm1535, %v3089, %v2486
      %v3122 = vsel %vm1535, %v3090, %v2488
      %v3123 = vsel %vm1535, %v3091, %v2490
      %v3124 = vsel %vm1535, %v3092, %v2492
      %v3125 = vsel %vm1535, %v3093, %v2494
      %v3126 = vsel %vm1535, %v3094, %v2496
      %v3127 = vsel %vm1535, %v3095, %v2498
      %v3128 = vsel %vm1535, %v3096, %v2500
      %v3129 = vsel %vm1535, %v3097, %v2502
      %v3130 = vsel %vm1535, %v3098, %v2504
      %v3131 = vsel %vm1535, %v3099, %v2506
      %v3132 = vsel %vm1535, %v3100, %v2508
      %v3133 = vsel %vm1535, %v3101, %v2510
      %v3134 = vsel %vm1535, %v3102, %v2512
      %v3135 = vsel %vm1535, %v3103, %v2514
      %v3136 = vsel %vm1535, %v3104, %v2516
      %v3137 = vsel %vm1535, %v3105, %v2518
      %v3138 = vsel %vm1535, %v3106, %v2520
      %v3139 = vsel %vm1535, %v3107, %v2522
      %v3140 = vsel %vm1535, %v3108, %v2524
      %v3141 = vsel %vm1535, %v3109, %v2526
      %v3142 = vsel %vm1535, %v3110, %v2528
      %v3143 = vsel %vm1535, %v3111, %v2530
      %v3144 = vsel %vm1535, %v3112, %v2532
      %v3145 = vsel %vm1535, %v3113, %v2534
      %v3146 = vsel %vm1535, %v3114, %v2536
      %v3147 = vsel %vm1535, %v3115, %v2538
      %v3148 = vsel %vm1535, %v3116, %v2540
      %v3149 = vsel %vm1601, %v3117, %v2574
      %v3150 = vsel %vm1601, %v3118, %v2576
      %v3151 = vsel %vm1601, %v3119, %v2578
      %v3152 = vsel %vm1601, %v3120, %v2580
      %v3153 = vsel %vm1601, %v3121, %v2582
      %v3154 = vsel %vm1601, %v3122, %v2584
      %v3155 = vsel %vm1601, %v3123, %v2586
      %v3156 = vsel %vm1601, %v3124, %v2588
      %v3157 = vsel %vm1601, %v3125, %v2590
      %v3158 = vsel %vm1601, %v3126, %v2592
      %v3159 = vsel %vm1601, %v3127, %v2594
      %v3160 = vsel %vm1601, %v3128, %v2596
      %v3161 = vsel %vm1601, %v3129, %v2598
      %v3162 = vsel %vm1601, %v3130, %v2600
      %v3163 = vsel %vm1601, %v3131, %v2602
      %v3164 = vsel %vm1601, %v3132, %v2604
      %v3165 = vsel %vm1601, %v3133, %v2606
      %v3166 = vsel %vm1601, %v3134, %v2608
      %v3167 = vsel %vm1601, %v3135, %v2610
      %v3168 = vsel %vm1601, %v3136, %v2612
      %v3169 = vsel %vm1601, %v3137, %v2614
      %v3170 = vsel %vm1601, %v3138, %v2616
      %v3171 = vsel %vm1601, %v3139, %v2618
      %v3172 = vsel %vm1601, %v3140, %v2620
      %v3173 = vsel %vm1601, %v3141, %v2622
      %v3174 = vsel %vm1601, %v3142, %v2624
      %v3175 = vsel %vm1601, %v3143, %v2626
      %v3176 = vsel %vm1601, %v3144, %v2628
      %v3177 = vsel %vm1601, %v3145, %v2630
      %v3178 = vsel %vm1601, %v3146, %v2632
      %v3179 = vsel %vm1601, %v3147, %v2634
      %v3180 = vsel %vm1601, %v3148, %v2636
      %vm3181 = vcmask 326656
      %v3182 = vsel %vm3181, %v3149, %v2670
      %v3183 = vsel %vm3181, %v3150, %v2672
      %v3184 = vsel %vm3181, %v3151, %v2674
      %v3185 = vsel %vm3181, %v3152, %v2676
      %v3186 = vsel %vm3181, %v3153, %v2678
      %v3187 = vsel %vm3181, %v3154, %v2680
      %v3188 = vsel %vm3181, %v3155, %v2682
      %v3189 = vsel %vm3181, %v3156, %v2684
      %v3190 = vsel %vm3181, %v3157, %v2686
      %v3191 = vsel %vm3181, %v3158, %v2688
      %v3192 = vsel %vm3181, %v3159, %v2690
      %v3193 = vsel %vm3181, %v3160, %v2692
      %v3194 = vsel %vm3181, %v3161, %v2694
      %v3195 = vsel %vm3181, %v3162, %v2696
      %v3196 = vsel %vm3181, %v3163, %v2698
      %v3197 = vsel %vm3181, %v3164, %v2700
      %v3198 = vsel %vm3181, %v3165, %v2702
      %v3199 = vsel %vm3181, %v3166, %v2704
      %v3200 = vsel %vm3181, %v3167, %v2706
      %v3201 = vsel %vm3181, %v3168, %v2708
      %v3202 = vsel %vm3181, %v3169, %v2710
      %v3203 = vsel %vm3181, %v3170, %v2712
      %v3204 = vsel %vm3181, %v3171, %v2714
      %v3205 = vsel %vm3181, %v3172, %v2716
      %v3206 = vsel %vm3181, %v3173, %v2718
      %v3207 = vsel %vm3181, %v3174, %v2720
      %v3208 = vsel %vm3181, %v3175, %v2722
      %v3209 = vsel %vm3181, %v3176, %v2724
      %v3210 = vsel %vm3181, %v3177, %v2726
      %v3211 = vsel %vm3181, %v3178, %v2728
      %v3212 = vsel %vm3181, %v3179, %v2730
      %v3213 = vsel %vm3181, %v3180, %v2732
      %vm3214 = vcmask 392192
      %v3215 = vsel %vm3214, %v3182, %v2766
      %v3216 = vsel %vm3214, %v3183, %v2768
      %v3217 = vsel %vm3214, %v3184, %v2770
      %v3218 = vsel %vm3214, %v3185, %v2772
      %v3219 = vsel %vm3214, %v3186, %v2774
      %v3220 = vsel %vm3214, %v3187, %v2776
      %v3221 = vsel %vm3214, %v3188, %v2778
      %v3222 = vsel %vm3214, %v3189, %v2780
      %v3223 = vsel %vm3214, %v3190, %v2782
      %v3224 = vsel %vm3214, %v3191, %v2784
      %v3225 = vsel %vm3214, %v3192, %v2786
      %v3226 = vsel %vm3214, %v3193, %v2788
      %v3227 = vsel %vm3214, %v3194, %v2790
      %v3228 = vsel %vm3214, %v3195, %v2792
      %v3229 = vsel %vm3214, %v3196, %v2794
      %v3230 = vsel %vm3214, %v3197, %v2796
      %v3231 = vsel %vm3214, %v3198, %v2798
      %v3232 = vsel %vm3214, %v3199, %v2800
      %v3233 = vsel %vm3214, %v3200, %v2802
      %v3234 = vsel %vm3214, %v3201, %v2804
      %v3235 = vsel %vm3214, %v3202, %v2806
      %v3236 = vsel %vm3214, %v3203, %v2808
      %v3237 = vsel %vm3214, %v3204, %v2810
      %v3238 = vsel %vm3214, %v3205, %v2812
      %v3239 = vsel %vm3214, %v3206, %v2814
      %v3240 = vsel %vm3214, %v3207, %v2816
      %v3241 = vsel %vm3214, %v3208, %v2818
      %v3242 = vsel %vm3214, %v3209, %v2820
      %v3243 = vsel %vm3214, %v3210, %v2822
      %v3244 = vsel %vm3214, %v3211, %v2824
      %v3245 = vsel %vm3214, %v3212, %v2826
      %v3246 = vsel %vm3214, %v3213, %v2828
      %vm3247 = vcmask 457728
      %v3248 = vsel %vm3247, %v3215, %v2862
      %v3249 = vsel %vm3247, %v3216, %v2864
      %v3250 = vsel %vm3247, %v3217, %v2866
      %v3251 = vsel %vm3247, %v3218, %v2868
      %v3252 = vsel %vm3247, %v3219, %v2870
      %v3253 = vsel %vm3247, %v3220, %v2872
      %v3254 = vsel %vm3247, %v3221, %v2874
      %v3255 = vsel %vm3247, %v3222, %v2876
      %v3256 = vsel %vm3247, %v3223, %v2878
      %v3257 = vsel %vm3247, %v3224, %v2880
      %v3258 = vsel %vm3247, %v3225, %v2882
      %v3259 = vsel %vm3247, %v3226, %v2884
      %v3260 = vsel %vm3247, %v3227, %v2886
      %v3261 = vsel %vm3247, %v3228, %v2888
      %v3262 = vsel %vm3247, %v3229, %v2890
      %v3263 = vsel %vm3247, %v3230, %v2892
      %v3264 = vsel %vm3247, %v3231, %v2894
      %v3265 = vsel %vm3247, %v3232, %v2896
      %v3266 = vsel %vm3247, %v3233, %v2898
      %v3267 = vsel %vm3247, %v3234, %v2900
      %v3268 = vsel %vm3247, %v3235, %v2902
      %v3269 = vsel %vm3247, %v3236, %v2904
      %v3270 = vsel %vm3247, %v3237, %v2906
      %v3271 = vsel %vm3247, %v3238, %v2908
      %v3272 = vsel %vm3247, %v3239, %v2910
      %v3273 = vsel %vm3247, %v3240, %v2912
      %v3274 = vsel %vm3247, %v3241, %v2914
      %v3275 = vsel %vm3247, %v3242, %v2916
      %v3276 = vsel %vm3247, %v3243, %v2918
      %v3277 = vsel %vm3247, %v3244, %v2920
      %v3278 = vsel %vm3247, %v3245, %v2922
      %v3279 = vsel %vm3247, %v3246, %v2924
      %vm3280 = vcmask 523264
      %v3281 = vsel %vm3280, %v3248, %v2958
      %v3282 = vsel %vm3280, %v3249, %v2960
      %v3283 = vsel %vm3280, %v3250, %v2962
      %v3284 = vsel %vm3280, %v3251, %v2964
      %v3285 = vsel %vm3280, %v3252, %v2966
      %v3286 = vsel %vm3280, %v3253, %v2968
      %v3287 = vsel %vm3280, %v3254, %v2970
      %v3288 = vsel %vm3280, %v3255, %v2972
      %v3289 = vsel %vm3280, %v3256, %v2974
      %v3290 = vsel %vm3280, %v3257, %v2976
      %v3291 = vsel %vm3280, %v3258, %v2978
      %v3292 = vsel %vm3280, %v3259, %v2980
      %v3293 = vsel %vm3280, %v3260, %v2982
      %v3294 = vsel %vm3280, %v3261, %v2984
      %v3295 = vsel %vm3280, %v3262, %v2986
      %v3296 = vsel %vm3280, %v3263, %v2988
      %v3297 = vsel %vm3280, %v3264, %v2990
      %v3298 = vsel %vm3280, %v3265, %v2992
      %v3299 = vsel %vm3280, %v3266, %v2994
      %v3300 = vsel %vm3280, %v3267, %v2996
      %v3301 = vsel %vm3280, %v3268, %v2998
      %v3302 = vsel %vm3280, %v3269, %v3000
      %v3303 = vsel %vm3280, %v3270, %v3002
      %v3304 = vsel %vm3280, %v3271, %v3004
      %v3305 = vsel %vm3280, %v3272, %v3006
      %v3306 = vsel %vm3280, %v3273, %v3008
      %v3307 = vsel %vm3280, %v3274, %v3010
      %v3308 = vsel %vm3280, %v3275, %v3012
      %v3309 = vsel %vm3280, %v3276, %v3014
      %v3310 = vsel %vm3280, %v3277, %v3016
      %v3311 = vsel %vm3280, %v3278, %v3018
      %v3312 = vsel %vm3280, %v3279, %v3020
      %v3313 = vpack.c.bf16 %v3282, %v3281
      %v3314 = vpack.c.bf16 %v3284, %v3283
      %v3315 = vpack.c.bf16 %v3286, %v3285
      %v3316 = vpack.c.bf16 %v3288, %v3287
      %v3317 = vpack.c.bf16 %v3290, %v3289
      %v3318 = vpack.c.bf16 %v3292, %v3291
      %v3319 = vpack.c.bf16 %v3294, %v3293
      %v3320 = vpack.c.bf16 %v3296, %v3295
      %v3321 = vpack.c.bf16 %v3298, %v3297
      %v3322 = vpack.c.bf16 %v3300, %v3299
      %v3323 = vpack.c.bf16 %v3302, %v3301
      %v3324 = vpack.c.bf16 %v3304, %v3303
      %v3325 = vpack.c.bf16 %v3306, %v3305
      %v3326 = vpack.c.bf16 %v3308, %v3307
      %v3327 = vpack.c.bf16 %v3310, %v3309
      %v3328 = vpack.c.bf16 %v3312, %v3311
      %v3329 = vld [vmem:[%s3] sm:$0xf]
      %v3330 = vld [vmem:[%s3 + $0x4] sm:$0xf]
      %v3331 = vld [vmem:[%s3 + $0x8] sm:$0xf]
      %v3332 = vld [vmem:[%s3 + $0xc] sm:$0xf]
      %v3333 = vld [vmem:[%s3 + $0x10] sm:$0xf]
      %v3334 = vld [vmem:[%s3 + $0x14] sm:$0xf]
      %v3335 = vld [vmem:[%s3 + $0x18] sm:$0xf]
      %v3336 = vld [vmem:[%s3 + $0x1c] sm:$0xf]
      %v3337 = vld [vmem:[%s3 + $0x20] sm:$0xf]
      %v3338 = vld [vmem:[%s4] sm:$0x1]
      %v3340 = vlaneseq
      %v3341 = vshrl.u32 %v3340, 7
      %v3342 = vsub.s32 0, %v3341
      %v3343 = vrot.slane %v3338, %v3342
      %v3354 = vunpack.c.l.b16 %v3329
      %v3355 = vunpack.c.l.b16 %v3330
      %v3356 = vunpack.c.l.b16 %v3331
      %v3357 = vunpack.c.l.b16 %v3332
      %v3358 = vunpack.c.l.b16 %v3333
      %v3359 = vunpack.c.l.b16 %v3334
      %v3360 = vunpack.c.l.b16 %v3335
      %v3361 = vunpack.c.l.b16 %v3336
      %v3362 = vunpack.c.l.b16 %v3337
      %v3363 = vpack.c.b16 %v3355, %v3354
      %v3364 = vpack.c.b16 %v3357, %v3356
      %v3365 = vpack.c.b16 %v3359, %v3358
      %v3366 = vpack.c.b16 %v3361, %v3360
      %v3367 = vpack.c.b16 %v3362, %v3362
      %vm3372 = vcmask 588800
      %v3374 = vsel %vm3372, %v3313, 0
      %v3377 = vsel %vm3372, %v3314, 0
      %v3380 = vsel %vm3372, %v3315, 0
      %v3383 = vsel %vm3372, %v3316, 0
      %v3386 = vsel %vm3372, %v3317, 0
      %v3389 = vsel %vm3372, %v3318, 0
      %v3392 = vsel %vm3372, %v3319, 0
      %v3395 = vsel %vm3372, %v3320, 0
      %v3398 = vsel %vm3372, %v3321, 0
      %v3401 = vsel %vm3372, %v3322, 0
      %v3404 = vsel %vm3372, %v3323, 0
      %v3407 = vsel %vm3372, %v3324, 0
      %v3410 = vsel %vm3372, %v3325, 0
      %v3413 = vsel %vm3372, %v3326, 0
      %v3416 = vsel %vm3372, %v3327, 0
      %v3419 = vsel %vm3372, %v3328, 0
      %vm3421 = vcmask 1043456
      %v3423 = vsel %vm3421, %v3367, 0
      %3425 = vmatprep.subr.bf16.mxu0 0
      %3426 = vmatpush1.bf16.msra.mxu0 0
      %3427 = vmatprep.subr.bf16.mxu0 0
      %3428 = vmatpush1.bf16.msra.mxu0 0
      %3429 = vmatprep.subr.bf16.mxu0 0
      %3430 = vmatpush1.bf16.msra.mxu0 0
      %3431 = vmatprep.subr.bf16.mxu0 0
      %3432 = vmatpush1.bf16.msra.mxu0 %v3423
      %3433 = vmatprep.subr.bf16.mxu0 0
      %3434 = vmatpush1.bf16.msra.mxu0 %v3366
      %3435 = vmatprep.subr.bf16.mxu0 0
      %3436 = vmatpush1.bf16.msra.mxu0 %v3365
      %3437 = vmatprep.subr.bf16.mxu0 0
      %3438 = vmatpush1.bf16.msra.mxu0 %v3364
      %3439 = vmatprep.subr.bf16.mxu0 0
      %3440 = vmatpush1.bf16.msra.mxu0 %v3363
      %3441 = vmatprep.subr.bf16.mxu0 0
      %3442 = vmatpush2.bf16.msra.mxu0 0
      %3443 = vmatprep.subr.bf16.mxu0 0
      %3444 = vmatpush2.bf16.msra.mxu0 0
      %3445 = vmatprep.subr.bf16.mxu0 0
      %3446 = vmatpush2.bf16.msra.mxu0 0
      %3447 = vmatprep.subr.bf16.mxu0 0
      %3448 = vmatpush2.bf16.msra.mxu0 0
      %3449 = vmatprep.subr.bf16.mxu0 0
      %3450 = vmatpush2.bf16.msra.mxu0 0
      %3451 = vmatprep.subr.bf16.mxu0 0
      %3452 = vmatpush2.bf16.msra.mxu0 0
      %3453 = vmatprep.subr.bf16.mxu0 0
      %3454 = vmatpush2.bf16.msra.mxu0 0
      %3455 = vmatprep.subr.bf16.mxu0 0
      %3456 = vmatpush2.bf16.msra.mxu0 0
      %3457 = vmatprep.mubr.bf16.mxu0 0
      %3458 = vmatmul.mubr.bf16.gmra.mxu0 %v3374
      %v3459 = vpop.f32.mrf.mxu0
      %v3460 = vadd.f32 %v3343, %v3459
      %v3461 = vpop.f32.mrf.mxu0
      %v3462 = vpop.f32.mrf.mxu0
      %v3463 = vadd.f32 %v3343, %v3462
      %v3464 = vpop.f32.mrf.mxu0
      %3465 = vmatprep.mubr.bf16.mxu0 0
      %3466 = vmatmul.mubr.bf16.gmra.mxu0 %v3377
      %v3467 = vpop.f32.mrf.mxu0
      %v3468 = vadd.f32 %v3343, %v3467
      %v3469 = vpop.f32.mrf.mxu0
      %v3470 = vpop.f32.mrf.mxu0
      %v3471 = vadd.f32 %v3343, %v3470
      %v3472 = vpop.f32.mrf.mxu0
      %3473 = vmatprep.mubr.bf16.mxu0 0
      %3474 = vmatmul.mubr.bf16.gmra.mxu0 %v3380
      %v3475 = vpop.f32.mrf.mxu0
      %v3476 = vadd.f32 %v3343, %v3475
      %v3477 = vpop.f32.mrf.mxu0
      %v3478 = vpop.f32.mrf.mxu0
      %v3479 = vadd.f32 %v3343, %v3478
      %v3480 = vpop.f32.mrf.mxu0
      %3481 = vmatprep.mubr.bf16.mxu0 0
      %3482 = vmatmul.mubr.bf16.gmra.mxu0 %v3383
      %v3483 = vpop.f32.mrf.mxu0
      %v3484 = vadd.f32 %v3343, %v3483
      %v3485 = vpop.f32.mrf.mxu0
      %v3486 = vpop.f32.mrf.mxu0
      %v3487 = vadd.f32 %v3343, %v3486
      %v3488 = vpop.f32.mrf.mxu0
      %3489 = vmatprep.mubr.bf16.mxu0 0
      %3490 = vmatmul.mubr.bf16.gmra.mxu0 %v3386
      %v3491 = vpop.f32.mrf.mxu0
      %v3492 = vadd.f32 %v3343, %v3491
      %v3493 = vpop.f32.mrf.mxu0
      %v3494 = vpop.f32.mrf.mxu0
      %v3495 = vadd.f32 %v3343, %v3494
      %v3496 = vpop.f32.mrf.mxu0
      %3497 = vmatprep.mubr.bf16.mxu0 0
      %3498 = vmatmul.mubr.bf16.gmra.mxu0 %v3389
      %v3499 = vpop.f32.mrf.mxu0
      %v3500 = vadd.f32 %v3343, %v3499
      %v3501 = vpop.f32.mrf.mxu0
      %v3502 = vpop.f32.mrf.mxu0
      %v3503 = vadd.f32 %v3343, %v3502
      %v3504 = vpop.f32.mrf.mxu0
      %3505 = vmatprep.mubr.bf16.mxu0 0
      %3506 = vmatmul.mubr.bf16.gmra.mxu0 %v3392
      %v3507 = vpop.f32.mrf.mxu0
      %v3508 = vadd.f32 %v3343, %v3507
      %v3509 = vpop.f32.mrf.mxu0
      %v3510 = vpop.f32.mrf.mxu0
      %v3511 = vadd.f32 %v3343, %v3510
      %v3512 = vpop.f32.mrf.mxu0
      %3513 = vmatprep.mubr.bf16.mxu0 0
      %3514 = vmatmul.mubr.bf16.gmra.mxu0 %v3395
      %v3515 = vpop.f32.mrf.mxu0
      %v3516 = vadd.f32 %v3343, %v3515
      %v3517 = vpop.f32.mrf.mxu0
      %v3518 = vpop.f32.mrf.mxu0
      %v3519 = vadd.f32 %v3343, %v3518
      %v3520 = vpop.f32.mrf.mxu0
      %3521 = vmatprep.mubr.bf16.mxu0 0
      %3522 = vmatmul.mubr.bf16.gmra.mxu0 %v3398
      %v3523 = vpop.f32.mrf.mxu0
      %v3524 = vadd.f32 %v3343, %v3523
      %v3525 = vpop.f32.mrf.mxu0
      %v3526 = vpop.f32.mrf.mxu0
      %v3527 = vadd.f32 %v3343, %v3526
      %v3528 = vpop.f32.mrf.mxu0
      %3529 = vmatprep.mubr.bf16.mxu0 0
      %3530 = vmatmul.mubr.bf16.gmra.mxu0 %v3401
      %v3531 = vpop.f32.mrf.mxu0
      %v3532 = vadd.f32 %v3343, %v3531
      %v3533 = vpop.f32.mrf.mxu0
      %v3534 = vpop.f32.mrf.mxu0
      %v3535 = vadd.f32 %v3343, %v3534
      %v3536 = vpop.f32.mrf.mxu0
      %3537 = vmatprep.mubr.bf16.mxu0 0
      %3538 = vmatmul.mubr.bf16.gmra.mxu0 %v3404
      %v3539 = vpop.f32.mrf.mxu0
      %v3540 = vadd.f32 %v3343, %v3539
      %v3541 = vpop.f32.mrf.mxu0
      %v3542 = vpop.f32.mrf.mxu0
      %v3543 = vadd.f32 %v3343, %v3542
      %v3544 = vpop.f32.mrf.mxu0
      %3545 = vmatprep.mubr.bf16.mxu0 0
      %3546 = vmatmul.mubr.bf16.gmra.mxu0 %v3407
      %v3547 = vpop.f32.mrf.mxu0
      %v3548 = vadd.f32 %v3343, %v3547
      %v3549 = vpop.f32.mrf.mxu0
      %v3550 = vpop.f32.mrf.mxu0
      %v3551 = vadd.f32 %v3343, %v3550
      %v3552 = vpop.f32.mrf.mxu0
      %3553 = vmatprep.mubr.bf16.mxu0 0
      %3554 = vmatmul.mubr.bf16.gmra.mxu0 %v3410
      %v3555 = vpop.f32.mrf.mxu0
      %v3556 = vadd.f32 %v3343, %v3555
      %v3557 = vpop.f32.mrf.mxu0
      %v3558 = vpop.f32.mrf.mxu0
      %v3559 = vadd.f32 %v3343, %v3558
      %v3560 = vpop.f32.mrf.mxu0
      %3561 = vmatprep.mubr.bf16.mxu0 0
      %3562 = vmatmul.mubr.bf16.gmra.mxu0 %v3413
      %v3563 = vpop.f32.mrf.mxu0
      %v3564 = vadd.f32 %v3343, %v3563
      %v3565 = vpop.f32.mrf.mxu0
      %v3566 = vpop.f32.mrf.mxu0
      %v3567 = vadd.f32 %v3343, %v3566
      %v3568 = vpop.f32.mrf.mxu0
      %3569 = vmatprep.mubr.bf16.mxu0 0
      %3570 = vmatmul.mubr.bf16.gmra.mxu0 %v3416
      %v3571 = vpop.f32.mrf.mxu0
      %v3572 = vadd.f32 %v3343, %v3571
      %v3573 = vpop.f32.mrf.mxu0
      %v3574 = vpop.f32.mrf.mxu0
      %v3575 = vadd.f32 %v3343, %v3574
      %v3576 = vpop.f32.mrf.mxu0
      %3577 = vmatprep.mubr.bf16.mxu0 0
      %3578 = vmatmul.mubr.bf16.gmra.mxu0 %v3419
      %v3579 = vpop.f32.mrf.mxu0
      %v3580 = vadd.f32 %v3343, %v3579
      %v3581 = vpop.f32.mrf.mxu0
      %v3582 = vpop.f32.mrf.mxu0
      %v3583 = vadd.f32 %v3343, %v3582
      %v3584 = vpop.f32.mrf.mxu0
      %3585 = vdwg.mxu0
      %v3586 = vpack.c.bf16 %v392, %v390
      %v3587 = vpack.c.bf16 %v397, %v395
      %v3588 = vpack.c.bf16 %v402, %v400
      %v3589 = vpack.c.bf16 %v407, %v405
      %v3590 = vpack.c.bf16 %v412, %v410
      %v3591 = vpack.c.bf16 %v417, %v415
      %v3592 = vpack.c.bf16 %v422, %v420
      %v3593 = vpack.c.bf16 %v427, %v425
      %v3594 = vpack.c.bf16 %v432, %v430
      %v3595 = vpack.c.bf16 %v437, %v435
      %v3596 = vpack.c.bf16 %v442, %v440
      %v3597 = vpack.c.bf16 %v447, %v445
      %v3598 = vpack.c.bf16 %v452, %v450
      %v3599 = vpack.c.bf16 %v457, %v455
      %v3600 = vpack.c.bf16 %v462, %v460
      %v3601 = vpack.c.bf16 %v551, %v549
      %v3602 = vld [vmem:[%s5] sm:$0x3]
      %v3603 = vld [vmem:[%s6] sm:$0x1]
      %v3605 = vlaneseq
      %v3606 = vshrl.u32 %v3605, 7
      %v3607 = vsub.s32 0, %v3606
      %v3608 = vrot.slane %v3603, %v3607
      %v3611 = vsel %vm1370, %v3586, 0
      %v3614 = vsel %vm1370, %v3587, 0
      %v3617 = vsel %vm1370, %v3588, 0
      %v3620 = vsel %vm1370, %v3589, 0
      %v3623 = vsel %vm1370, %v3590, 0
      %v3626 = vsel %vm1370, %v3591, 0
      %v3629 = vsel %vm1370, %v3592, 0
      %v3632 = vsel %vm1370, %v3593, 0
      %v3635 = vsel %vm1370, %v3594, 0
      %v3638 = vsel %vm1370, %v3595, 0
      %v3641 = vsel %vm1370, %v3596, 0
      %v3644 = vsel %vm1370, %v3597, 0
      %v3647 = vsel %vm1370, %v3598, 0
      %v3650 = vsel %vm1370, %v3599, 0
      %v3653 = vsel %vm1370, %v3600, 0
      %v3656 = vsel %vm1370, %v3601, 0
      %v3659 = vsel %vm1726, %v3602, 0
      %3661 = vmatprep.subr.bf16.mxu0 0
      %3662 = vmatpush1.bf16.msra.mxu0 0
      %3663 = vmatprep.subr.bf16.mxu0 0
      %3664 = vmatpush1.bf16.msra.mxu0 0
      %3665 = vmatprep.subr.bf16.mxu0 0
      %3666 = vmatpush1.bf16.msra.mxu0 0
      %3667 = vmatprep.subr.bf16.mxu0 0
      %3668 = vmatpush1.bf16.msra.mxu0 0
      %3669 = vmatprep.subr.bf16.mxu0 0
      %3670 = vmatpush1.bf16.msra.mxu0 0
      %3671 = vmatprep.subr.bf16.mxu0 0
      %3672 = vmatpush1.bf16.msra.mxu0 0
      %3673 = vmatprep.subr.bf16.mxu0 0
      %3674 = vmatpush1.bf16.msra.mxu0 0
      %3675 = vmatprep.subr.bf16.mxu0 0
      %3676 = vmatpush1.bf16.msra.mxu0 %v3659
      %3677 = vmatprep.subr.bf16.mxu0 0
      %3678 = vmatpush2.bf16.msra.mxu0 0
      %3679 = vmatprep.subr.bf16.mxu0 0
      %3680 = vmatpush2.bf16.msra.mxu0 0
      %3681 = vmatprep.subr.bf16.mxu0 0
      %3682 = vmatpush2.bf16.msra.mxu0 0
      %3683 = vmatprep.subr.bf16.mxu0 0
      %3684 = vmatpush2.bf16.msra.mxu0 0
      %3685 = vmatprep.subr.bf16.mxu0 0
      %3686 = vmatpush2.bf16.msra.mxu0 0
      %3687 = vmatprep.subr.bf16.mxu0 0
      %3688 = vmatpush2.bf16.msra.mxu0 0
      %3689 = vmatprep.subr.bf16.mxu0 0
      %3690 = vmatpush2.bf16.msra.mxu0 0
      %3691 = vmatprep.subr.bf16.mxu0 0
      %3692 = vmatpush2.bf16.msra.mxu0 0
      %3693 = vmatprep.mubr.bf16.mxu0 0
      %3694 = vmatmul.mubr.bf16.gmra.mxu0 %v3611
      %v3695 = vpop.f32.mrf.mxu0
      %v3696 = vadd.f32 %v3608, %v3695
      %v3697 = vpop.f32.mrf.mxu0
      %v3698 = vpop.f32.mrf.mxu0
      %v3699 = vadd.f32 %v3608, %v3698
      %v3700 = vpop.f32.mrf.mxu0
      %3701 = vmatprep.mubr.bf16.mxu0 0
      %3702 = vmatmul.mubr.bf16.gmra.mxu0 %v3614
      %v3703 = vpop.f32.mrf.mxu0
      %v3704 = vadd.f32 %v3608, %v3703
      %v3705 = vpop.f32.mrf.mxu0
      %v3706 = vpop.f32.mrf.mxu0
      %v3707 = vadd.f32 %v3608, %v3706
      %v3708 = vpop.f32.mrf.mxu0
      %3709 = vmatprep.mubr.bf16.mxu0 0
      %3710 = vmatmul.mubr.bf16.gmra.mxu0 %v3617
      %v3711 = vpop.f32.mrf.mxu0
      %v3712 = vadd.f32 %v3608, %v3711
      %v3713 = vpop.f32.mrf.mxu0
      %v3714 = vpop.f32.mrf.mxu0
      %v3715 = vadd.f32 %v3608, %v3714
      %v3716 = vpop.f32.mrf.mxu0
      %3717 = vmatprep.mubr.bf16.mxu0 0
      %3718 = vmatmul.mubr.bf16.gmra.mxu0 %v3620
      %v3719 = vpop.f32.mrf.mxu0
      %v3720 = vadd.f32 %v3608, %v3719
      %v3721 = vpop.f32.mrf.mxu0
      %v3722 = vpop.f32.mrf.mxu0
      %v3723 = vadd.f32 %v3608, %v3722
      %v3724 = vpop.f32.mrf.mxu0
      %3725 = vmatprep.mubr.bf16.mxu0 0
      %3726 = vmatmul.mubr.bf16.gmra.mxu0 %v3623
      %v3727 = vpop.f32.mrf.mxu0
      %v3728 = vadd.f32 %v3608, %v3727
      %v3729 = vpop.f32.mrf.mxu0
      %v3730 = vpop.f32.mrf.mxu0
      %v3731 = vadd.f32 %v3608, %v3730
      %v3732 = vpop.f32.mrf.mxu0
      %3733 = vmatprep.mubr.bf16.mxu0 0
      %3734 = vmatmul.mubr.bf16.gmra.mxu0 %v3626
      %v3735 = vpop.f32.mrf.mxu0
      %v3736 = vadd.f32 %v3608, %v3735
      %v3737 = vpop.f32.mrf.mxu0
      %v3738 = vpop.f32.mrf.mxu0
      %v3739 = vadd.f32 %v3608, %v3738
      %v3740 = vpop.f32.mrf.mxu0
      %3741 = vmatprep.mubr.bf16.mxu0 0
      %3742 = vmatmul.mubr.bf16.gmra.mxu0 %v3629
      %v3743 = vpop.f32.mrf.mxu0
      %v3744 = vadd.f32 %v3608, %v3743
      %v3745 = vpop.f32.mrf.mxu0
      %v3746 = vpop.f32.mrf.mxu0
      %v3747 = vadd.f32 %v3608, %v3746
      %v3748 = vpop.f32.mrf.mxu0
      %3749 = vmatprep.mubr.bf16.mxu0 0
      %3750 = vmatmul.mubr.bf16.gmra.mxu0 %v3632
      %v3751 = vpop.f32.mrf.mxu0
      %v3752 = vadd.f32 %v3608, %v3751
      %v3753 = vpop.f32.mrf.mxu0
      %v3754 = vpop.f32.mrf.mxu0
      %v3755 = vadd.f32 %v3608, %v3754
      %v3756 = vpop.f32.mrf.mxu0
      %3757 = vmatprep.mubr.bf16.mxu0 0
      %3758 = vmatmul.mubr.bf16.gmra.mxu0 %v3635
      %v3759 = vpop.f32.mrf.mxu0
      %v3760 = vadd.f32 %v3608, %v3759
      %v3761 = vpop.f32.mrf.mxu0
      %v3762 = vpop.f32.mrf.mxu0
      %v3763 = vadd.f32 %v3608, %v3762
      %v3764 = vpop.f32.mrf.mxu0
      %3765 = vmatprep.mubr.bf16.mxu0 0
      %3766 = vmatmul.mubr.bf16.gmra.mxu0 %v3638
      %v3767 = vpop.f32.mrf.mxu0
      %v3768 = vadd.f32 %v3608, %v3767
      %v3769 = vpop.f32.mrf.mxu0
      %v3770 = vpop.f32.mrf.mxu0
      %v3771 = vadd.f32 %v3608, %v3770
      %v3772 = vpop.f32.mrf.mxu0
      %3773 = vmatprep.mubr.bf16.mxu0 0
      %3774 = vmatmul.mubr.bf16.gmra.mxu0 %v3641
      %v3775 = vpop.f32.mrf.mxu0
      %v3776 = vadd.f32 %v3608, %v3775
      %v3777 = vpop.f32.mrf.mxu0
      %v3778 = vpop.f32.mrf.mxu0
      %v3779 = vadd.f32 %v3608, %v3778
      %v3780 = vpop.f32.mrf.mxu0
      %3781 = vmatprep.mubr.bf16.mxu0 0
      %3782 = vmatmul.mubr.bf16.gmra.mxu0 %v3644
      %v3783 = vpop.f32.mrf.mxu0
      %v3784 = vadd.f32 %v3608, %v3783
      %v3785 = vpop.f32.mrf.mxu0
      %v3786 = vpop.f32.mrf.mxu0
      %v3787 = vadd.f32 %v3608, %v3786
      %v3788 = vpop.f32.mrf.mxu0
      %3789 = vmatprep.mubr.bf16.mxu0 0
      %3790 = vmatmul.mubr.bf16.gmra.mxu0 %v3647
      %v3791 = vpop.f32.mrf.mxu0
      %v3792 = vadd.f32 %v3608, %v3791
      %v3793 = vpop.f32.mrf.mxu0
      %v3794 = vpop.f32.mrf.mxu0
      %v3795 = vadd.f32 %v3608, %v3794
      %v3796 = vpop.f32.mrf.mxu0
      %3797 = vmatprep.mubr.bf16.mxu0 0
      %3798 = vmatmul.mubr.bf16.gmra.mxu0 %v3650
      %v3799 = vpop.f32.mrf.mxu0
      %v3800 = vadd.f32 %v3608, %v3799
      %v3801 = vpop.f32.mrf.mxu0
      %v3802 = vpop.f32.mrf.mxu0
      %v3803 = vadd.f32 %v3608, %v3802
      %v3804 = vpop.f32.mrf.mxu0
      %3805 = vmatprep.mubr.bf16.mxu0 0
      %3806 = vmatmul.mubr.bf16.gmra.mxu0 %v3653
      %v3807 = vpop.f32.mrf.mxu0
      %v3808 = vadd.f32 %v3608, %v3807
      %v3809 = vpop.f32.mrf.mxu0
      %v3810 = vpop.f32.mrf.mxu0
      %v3811 = vadd.f32 %v3608, %v3810
      %v3812 = vpop.f32.mrf.mxu0
      %3813 = vmatprep.mubr.bf16.mxu0 0
      %3814 = vmatmul.mubr.bf16.gmra.mxu0 %v3656
      %v3815 = vpop.f32.mrf.mxu0
      %v3816 = vadd.f32 %v3608, %v3815
      %v3817 = vpop.f32.mrf.mxu0
      %v3818 = vpop.f32.mrf.mxu0
      %v3819 = vadd.f32 %v3608, %v3818
      %v3820 = vpop.f32.mrf.mxu0
      %3821 = vdwg.mxu0
      %v3822 = vadd.f32 %v3460, %v3696
      %v3823 = vadd.f32 %v3463, %v3699
      %v3824 = vadd.f32 %v3468, %v3704
      %v3825 = vadd.f32 %v3471, %v3707
      %v3826 = vadd.f32 %v3476, %v3712
      %v3827 = vadd.f32 %v3479, %v3715
      %v3828 = vadd.f32 %v3484, %v3720
      %v3829 = vadd.f32 %v3487, %v3723
      %v3830 = vadd.f32 %v3492, %v3728
      %v3831 = vadd.f32 %v3495, %v3731
      %v3832 = vadd.f32 %v3500, %v3736
      %v3833 = vadd.f32 %v3503, %v3739
      %v3834 = vadd.f32 %v3508, %v3744
      %v3835 = vadd.f32 %v3511, %v3747
      %v3836 = vadd.f32 %v3516, %v3752
      %v3837 = vadd.f32 %v3519, %v3755
      %v3838 = vadd.f32 %v3524, %v3760
      %v3839 = vadd.f32 %v3527, %v3763
      %v3840 = vadd.f32 %v3532, %v3768
      %v3841 = vadd.f32 %v3535, %v3771
      %v3842 = vadd.f32 %v3540, %v3776
      %v3843 = vadd.f32 %v3543, %v3779
      %v3844 = vadd.f32 %v3548, %v3784
      %v3845 = vadd.f32 %v3551, %v3787
      %v3846 = vadd.f32 %v3556, %v3792
      %v3847 = vadd.f32 %v3559, %v3795
      %v3848 = vadd.f32 %v3564, %v3800
      %v3849 = vadd.f32 %v3567, %v3803
      %v3850 = vadd.f32 %v3572, %v3808
      %v3851 = vadd.f32 %v3575, %v3811
      %v3852 = vadd.f32 %v3580, %v3816
      %v3853 = vadd.f32 %v3583, %v3819
      %v3854 = vmax.f32 %v3822, 0.0
      %v3855 = vmax.f32 %v3823, 0.0
      %v3856 = vmax.f32 %v3824, 0.0
      %v3857 = vmax.f32 %v3825, 0.0
      %v3858 = vmax.f32 %v3826, 0.0
      %v3859 = vmax.f32 %v3827, 0.0
      %v3860 = vmax.f32 %v3828, 0.0
      %v3861 = vmax.f32 %v3829, 0.0
      %v3862 = vmax.f32 %v3830, 0.0
      %v3863 = vmax.f32 %v3831, 0.0
      %v3864 = vmax.f32 %v3832, 0.0
      %v3865 = vmax.f32 %v3833, 0.0
      %v3866 = vmax.f32 %v3834, 0.0
      %v3867 = vmax.f32 %v3835, 0.0
      %v3868 = vmax.f32 %v3836, 0.0
      %v3869 = vmax.f32 %v3837, 0.0
      %v3870 = vmax.f32 %v3838, 0.0
      %v3871 = vmax.f32 %v3839, 0.0
      %v3872 = vmax.f32 %v3840, 0.0
      %v3873 = vmax.f32 %v3841, 0.0
      %v3874 = vmax.f32 %v3842, 0.0
      %v3875 = vmax.f32 %v3843, 0.0
      %v3876 = vmax.f32 %v3844, 0.0
      %v3877 = vmax.f32 %v3845, 0.0
      %v3878 = vmax.f32 %v3846, 0.0
      %v3879 = vmax.f32 %v3847, 0.0
      %v3880 = vmax.f32 %v3848, 0.0
      %v3881 = vmax.f32 %v3849, 0.0
      %v3882 = vmax.f32 %v3850, 0.0
      %v3883 = vmax.f32 %v3851, 0.0
      %v3884 = vmax.f32 %v3852, 0.0
      %v3885 = vmax.f32 %v3853, 0.0
      %3886 = vst.msk [vmem:[%s278] sm:$0xff] %vm1403, %v3854
      %3887 = vst.msk [vmem:[%s278 + $0x8] sm:$0xff] %vm1403, %v3855
      %3888 = vst.msk [vmem:[%s278 + $0x10] sm:$0xff] %vm1403, %v3856
      %3889 = vst.msk [vmem:[%s278 + $0x18] sm:$0xff] %vm1403, %v3857
      %3890 = vst.msk [vmem:[%s278 + $0x20] sm:$0xff] %vm1403, %v3858
      %3891 = vst.msk [vmem:[%s278 + $0x28] sm:$0xff] %vm1403, %v3859
      %3892 = vst.msk [vmem:[%s278 + $0x30] sm:$0xff] %vm1403, %v3860
      %3893 = vst.msk [vmem:[%s278 + $0x38] sm:$0xff] %vm1403, %v3861
      %3894 = vst.msk [vmem:[%s278 + $0x40] sm:$0xff] %vm1403, %v3862
      %3895 = vst.msk [vmem:[%s278 + $0x48] sm:$0xff] %vm1403, %v3863
      %3896 = vst.msk [vmem:[%s278 + $0x50] sm:$0xff] %vm1403, %v3864
      %3897 = vst.msk [vmem:[%s278 + $0x58] sm:$0xff] %vm1403, %v3865
      %3898 = vst.msk [vmem:[%s278 + $0x60] sm:$0xff] %vm1403, %v3866
      %3899 = vst.msk [vmem:[%s278 + $0x68] sm:$0xff] %vm1403, %v3867
      %3900 = vst.msk [vmem:[%s278 + $0x70] sm:$0xff] %vm1403, %v3868
      %3901 = vst.msk [vmem:[%s278 + $0x78] sm:$0xff] %vm1403, %v3869
      %3902 = vst.msk [vmem:[%s278 + $0x80] sm:$0xff] %vm1403, %v3870
      %3903 = vst.msk [vmem:[%s278 + $0x88] sm:$0xff] %vm1403, %v3871
      %3904 = vst.msk [vmem:[%s278 + $0x90] sm:$0xff] %vm1403, %v3872
      %3905 = vst.msk [vmem:[%s278 + $0x98] sm:$0xff] %vm1403, %v3873
      %3906 = vst.msk [vmem:[%s278 + $0xa0] sm:$0xff] %vm1403, %v3874
      %3907 = vst.msk [vmem:[%s278 + $0xa8] sm:$0xff] %vm1403, %v3875
      %3908 = vst.msk [vmem:[%s278 + $0xb0] sm:$0xff] %vm1403, %v3876
      %3909 = vst.msk [vmem:[%s278 + $0xb8] sm:$0xff] %vm1403, %v3877
      %3910 = vst.msk [vmem:[%s278 + $0xc0] sm:$0xff] %vm1403, %v3878
      %3911 = vst.msk [vmem:[%s278 + $0xc8] sm:$0xff] %vm1403, %v3879
      %3912 = vst.msk [vmem:[%s278 + $0xd0] sm:$0xff] %vm1403, %v3880
      %3913 = vst.msk [vmem:[%s278 + $0xd8] sm:$0xff] %vm1403, %v3881
      %3914 = vst.msk [vmem:[%s278 + $0xe0] sm:$0xff] %vm1403, %v3882
      %3915 = vst.msk [vmem:[%s278 + $0xe8] sm:$0xff] %vm1403, %v3883
      %3916 = vst.msk [vmem:[%s278 + $0xf0] sm:$0xff] %vm1403, %v3884
      %3917 = vst.msk [vmem:[%s278 + $0xf8] sm:$0xff] %vm1403, %v3885
      %p3918 = scmp.lt.s32.totalorder %s18, 1
      %s3919 = scalar_select %p3918, %s18, 1
      %s3920 = smul.addr %s3919, 32
      %s3921 = smul.addr %s3920, 8
      %s3922 = scalar_lea.vmem %s7, %s3921
      // Predicated region
      $region49: #{tpu_custom_call.1} parent=47 // pred_check
        %p3923 = pneg %p188
      $region50: #{tpu_custom_call.1} parent=47 // pred_check_branch
        %3925 = sbr.rel (%p3923) target = $region52
      $region51: #{tpu_custom_call.1} parent=47 // pred_region
        _
      $region52: #{tpu_custom_call.1} parent=47 // pred_fallthru
        _
    $region48: #{tpu_custom_call.1} parent=5 // pred_fallthru
      _
    %p3926 = scmp.le.s32.totalorder 2, %s13
    // Predicated region
    $region53: #{tpu_custom_call.1} parent=5 // pred_check
      %p3927 = pneg %p3926
    $region54: #{tpu_custom_call.1} parent=5 // pred_check_branch
      %3929 = sbr.rel (%p3927) target = $region56
    $region55: #{tpu_custom_call.1} parent=5 // pred_region
      %s3930 = ssub.s32 %s13, 2
      // Predicated region
      $region57: #{tpu_custom_call.1} parent=55 // pred_check
        %p3931 = pneg %p194
      $region58: #{tpu_custom_call.1} parent=55 // pred_check_branch
        %3933 = sbr.rel (%p3931) target = $region60
      $region59: #{tpu_custom_call.1} parent=55 // pred_region
        %p3934 = scmp.lt.s32.totalorder %s19, 1
        %s3935 = scalar_select %p3934, %s19, 1
        %s3936 = smul.addr %s3935, 32
        %s3937 = smul.addr %s3936, 8
        %s3938 = scalar_lea.vmem %s7, %s3937
      $region60: #{tpu_custom_call.1} parent=55 // pred_fallthru
        _
    $region56: #{tpu_custom_call.1} parent=5 // pred_fallthru
      _
  $region6: #{tpu_custom_call.1} parent=0 // loop_footer
    %s17 = sadd.s32 1, %s13
  $region7: #{tpu_custom_call.1} parent=0 // loop_footer_branch
    %12 = sbr.rel target = $region3
  $region8: #{tpu_custom_call.1} parent=0 // loop_exit
    _

</llo_original>
